<compile_context>
chip_gen: v5e
topology: v5e:2x2
jax: 0.10.0
libtpu: 0.0.40
codegen_flags: <defaults>
</compile_context>

<pallas_src>
import functools
import math

import jax
import jax.numpy as jnp
from jax.experimental import pallas as pl
from jax.experimental.pallas import tpu as pltpu


# --------------------------------------------------------------------------
# In-kernel helpers (operate on loaded arrays, not Refs)
# --------------------------------------------------------------------------

def _layernorm(z, g, b):
    """nn.LayerNorm over last dim (eps=1e-5, biased variance), f32 stats."""
    mean = jnp.mean(z, axis=-1, keepdims=True)
    var = jnp.mean(jnp.square(z - mean), axis=-1, keepdims=True)
    return (z - mean) * jax.lax.rsqrt(var + 1e-5) * g + b


def _attention(q_in, kv_in, wq_bd, wk_bd, wv_bd, woT, bo, mask,
               heads, head_dim, embed_size):
    """Multi-head attention exactly matching the reference SelfAttention.

    q_in: (Lq, E) f32, kv_in: (Lk, E) f32 (reference always passes value == key).
    wq_bd/wk_bd/wv_bd: (E, E) bf16 block-diagonal per-head projections.
    woT: (E, E) bf16 fc_out weight (in, out); bo: (1, E) f32 fc_out bias.
    mask: (Lq, Lk) bool, True = attend.
    """
    inv_scale = 1.0 / math.sqrt(float(embed_size))
    q16 = q_in.astype(jnp.bfloat16)
    kv16 = kv_in.astype(jnp.bfloat16)
    # Batched projections: one (L,E)@(E,E) matmul per Q/K/V instead of 3*H tiny ones.
    q = jnp.dot(q16, wq_bd, preferred_element_type=jnp.float32)    # (Lq, E)
    k = jnp.dot(kv16, wk_bd, preferred_element_type=jnp.float32)   # (Lk, E)
    v = jnp.dot(kv16, wv_bd, preferred_element_type=jnp.float32)   # (Lk, E)

    lq = q_in.shape[0]
    out = jnp.broadcast_to(bo, (lq, embed_size)).astype(jnp.float32)
    # Per-head score/softmax/context; H batch dims map to separate MXU ops anyway,
    # so a static unroll over heads is equivalent MXU work to a batched einsum.
    for h in range(heads):
        lo = h * head_dim
        hi = lo + head_dim
        qh = q[:, lo:hi].astype(jnp.bfloat16)
        kh = k[:, lo:hi].astype(jnp.bfloat16)
        vh = v[:, lo:hi].astype(jnp.bfloat16)
        e = jax.lax.dot_general(qh, kh, (((1,), (1,)), ((), ())),
                                preferred_element_type=jnp.float32)     # (Lq, Lk)
        e = jnp.where(mask, e, jnp.float32(-1e12)) * inv_scale
        m = jnp.max(e, axis=-1, keepdims=True)
        p = jnp.exp(e - m)
        att = (p / jnp.sum(p, axis=-1, keepdims=True)).astype(jnp.bfloat16)
        ctx = jnp.dot(att, vh, preferred_element_type=jnp.float32)      # (Lq, D)
        # concat-over-heads @ WoT  ==  sum_h ctx_h @ WoT[h*D:(h+1)*D, :]
        out = out + jnp.dot(ctx.astype(jnp.bfloat16), woT[lo:hi, :],
                            preferred_element_type=jnp.float32)
    return out


def _ffn(x, w1T, b1, w2T, b2):
    """Linear -> ReLU -> Linear (bf16 matmuls, f32 accumulate)."""
    h = jnp.dot(x.astype(jnp.bfloat16), w1T, preferred_element_type=jnp.float32) + b1
    h = jnp.maximum(h, 0.0)
    return jnp.dot(h.astype(jnp.bfloat16), w2T, preferred_element_type=jnp.float32) + b2


# --------------------------------------------------------------------------
# Fused Pallas kernels
# --------------------------------------------------------------------------

def _transformer_block_kernel(valid_ref, q_ref, kv_ref,
                              wq_ref, wk_ref, wv_ref, wo_ref, bo_ref,
                              g1_ref, be1_ref, w1_ref, c1_ref, w2_ref, c2_ref,
                              g2_ref, be2_ref, o_ref, *, heads, head_dim, embed_size):
    """Fused TransformerBlock: attention -> add+LN -> FFN -> add+LN (one batch elem)."""
    q_in = q_ref[0]                                  # (Lq, E)
    kv_in = kv_ref[0]                                # (Lk, E)
    lq, lk = q_in.shape[0], kv_in.shape[0]
    # key-padding mask only (broadcast over query axis), built once.
    mask = jnp.broadcast_to(valid_ref[0] != 0, (lq, lk))
    attn = _attention(q_in, kv_in, wq_ref[...], wk_ref[...], wv_ref[...],
                      wo_ref[...], bo_ref[...], mask, heads, head_dim, embed_size)
    h1 = _layernorm(attn + q_in, g1_ref[...], be1_ref[...])
    ff = _ffn(h1, w1_ref[...], c1_ref[...], w2_ref[...], c2_ref[...])
    o_ref[0] = _layernorm(ff + h1, g2_ref[...], be2_ref[...])


def _decoder_self_attn_kernel(valid_ref, x_ref,
                              wq_ref, wk_ref, wv_ref, wo_ref, bo_ref,
                              g_ref, be_ref, o_ref, *, heads, head_dim, embed_size):
    """Fused decoder prologue: causal+pad masked self-attention -> add+LN."""
    x = x_ref[0]                                     # (L, E)
    l = x.shape[0]
    pad_ok = jnp.broadcast_to(valid_ref[0] != 0, (l, l))
    row = jax.lax.broadcasted_iota(jnp.int32, (l, l), 0)
    col = jax.lax.broadcasted_iota(jnp.int32, (l, l), 1)
    mask = pad_ok & (col <= row)                     # tgt pad mask & causal tril
    attn = _attention(x, x, wq_ref[...], wk_ref[...], wv_ref[...],
                      wo_ref[...], bo_ref[...], mask, heads, head_dim, embed_size)
    o_ref[0] = _layernorm(attn + x, g_ref[...], be_ref[...])


def _vocab_linear_kernel(x_ref, wT_ref, b_ref, o_ref):
    """Row-tiled final projection; vocab dim pre-padded to a multiple of 128."""
    o_ref[...] = jnp.dot(x_ref[...].astype(jnp.bfloat16), wT_ref[...],
                         preferred_element_type=jnp.float32) + b_ref[...]


# --------------------------------------------------------------------------
# Pallas wrappers
# --------------------------------------------------------------------------

_W2D = lambda b: (0, 0)   # shared index_map for broadcast (replicated) weights


def transformer_block(p, query, kv, kvalid, heads):
    """query: (N, Lq, E), kv: (N, Lk, E), kvalid: (N, 1, Lk) int32 key validity."""
    N, Lq, E = query.shape
    Lk = kv.shape[1]
    Hf = p["w1T"].shape[1]
    a = p["attn"]
    kernel = functools.partial(_transformer_block_kernel, heads=heads,
                               head_dim=E // heads, embed_size=E)
    return pl.pallas_call(
        kernel,
        out_shape=jax.ShapeDtypeStruct((N, Lq, E), jnp.float32),
        grid=(N,),
        in_specs=[
            pl.BlockSpec((1, 1, Lk), lambda b: (b, 0, 0)),   # key-valid mask
            pl.BlockSpec((1, Lq, E), lambda b: (b, 0, 0)),   # query
            pl.BlockSpec((1, Lk, E), lambda b: (b, 0, 0)),   # key/value
            pl.BlockSpec((E, E), _W2D),                      # Wq block-diag (bf16)
            pl.BlockSpec((E, E), _W2D),                      # Wk block-diag (bf16)
            pl.BlockSpec((E, E), _W2D),                      # Wv block-diag (bf16)
            pl.BlockSpec((E, E), _W2D),                      # WoT (bf16)
            pl.BlockSpec((1, E), _W2D),                      # bo
            pl.BlockSpec((1, E), _W2D),                      # ln1 gamma
            pl.BlockSpec((1, E), _W2D),                      # ln1 beta
            pl.BlockSpec((E, Hf), _W2D),                     # W1T (bf16)
            pl.BlockSpec((1, Hf), _W2D),                     # b1
            pl.BlockSpec((Hf, E), _W2D),                     # W2T (bf16)
            pl.BlockSpec((1, E), _W2D),                      # b2
            pl.BlockSpec((1, E), _W2D),                      # ln2 gamma
            pl.BlockSpec((1, E), _W2D),                      # ln2 beta
        ],
        out_specs=pl.BlockSpec((1, Lq, E), lambda b: (b, 0, 0)),
        compiler_params=pltpu.CompilerParams(dimension_semantics=("parallel",)),
    )(kvalid, query, kv,
      a["wq_bd"], a["wk_bd"], a["wv_bd"], a["woT"], a["bo"],
      p["ln1_g"], p["ln1_b"], p["w1T"], p["b1"], p["w2T"], p["b2"],
      p["ln2_g"], p["ln2_b"])


def decoder_self_attention(p, x, tvalid, heads):
    """x: (N, L, E), tvalid: (N, 1, L) int32 target-token validity."""
    N, L, E = x.shape
    a = p["attn"]
    kernel = functools.partial(_decoder_self_attn_kernel, heads=heads,
                               head_dim=E // heads, embed_size=E)
    return pl.pallas_call(
        kernel,
        out_shape=jax.ShapeDtypeStruct((N, L, E), jnp.float32),
        grid=(N,),
        in_specs=[
            pl.BlockSpec((1, 1, L), lambda b: (b, 0, 0)),
            pl.BlockSpec((1, L, E), lambda b: (b, 0, 0)),
            pl.BlockSpec((E, E), _W2D),
            pl.BlockSpec((E, E), _W2D),
            pl.BlockSpec((E, E), _W2D),
            pl.BlockSpec((E, E), _W2D),
            pl.BlockSpec((1, E), _W2D),
            pl.BlockSpec((1, E), _W2D),
            pl.BlockSpec((1, E), _W2D),
        ],
        out_specs=pl.BlockSpec((1, L, E), lambda b: (b, 0, 0)),
        compiler_params=pltpu.CompilerParams(dimension_semantics=("parallel",)),
    )(tvalid, x, a["wq_bd"], a["wk_bd"], a["wv_bd"], a["woT"], a["bo"],
      p["ln_g"], p["ln_b"])


def vocab_projection(x2d, fcT, fc_b, vocab, row_tile=8):
    """Row-tiled, lane-padded vocab projection. fcT is (E, Vp) with Vp % 128 == 0."""
    M, E = x2d.shape
    Vp = fcT.shape[1]
    Mp = _round_up(M, row_tile)
    if Mp != M:
        x2d = jnp.pad(x2d, ((0, Mp - M), (0, 0)))
    out = pl.pallas_call(
        _vocab_linear_kernel,
        out_shape=jax.ShapeDtypeStruct((Mp, Vp), jnp.float32),
        grid=(Mp // row_tile,),
        in_specs=[
            pl.BlockSpec((row_tile, E), lambda i: (i, 0)),
            pl.BlockSpec((E, Vp), lambda i: (0, 0)),
            pl.BlockSpec((1, Vp), lambda i: (0, 0)),
        ],
        out_specs=pl.BlockSpec((row_tile, Vp), lambda i: (i, 0)),
        compiler_params=pltpu.CompilerParams(dimension_semantics=("parallel",)),
    )(x2d, fcT, fc_b)
    return out[:M, :vocab]


# --------------------------------------------------------------------------
# Parameter initialization (deterministic synthetic weights, kernel-ready layout:
# pre-transposed, per-head projections expanded to block-diagonal, bf16 matmul weights)
# --------------------------------------------------------------------------

def _round_up(x, m):
    return ((x + m - 1) // m) * m


def _rand(key, shape, scale=0.05):
    return scale * jax.random.normal(key, shape, jnp.float32)


def init_attention_params(key, E, H):
    D = E // H
    k = jax.random.split(key, 5)

    def block_diag_T(w):  # w: (D, D) PyTorch-style (out, in) -> block-diag (E, E) (in, out)
        return jnp.kron(jnp.eye(H, dtype=jnp.float32), w.T).astype(jnp.bfloat16)

    return {
        "wv_bd": block_diag_T(_rand(k[0], (D, D))),
        "wk_bd": block_diag_T(_rand(k[1], (D, D))),
        "wq_bd": block_diag_T(_rand(k[2], (D, D))),
        "woT": _rand(k[3], (E, E)).T.astype(jnp.bfloat16),
        "bo": _rand(k[4], (E,)).reshape(1, E),
    }


def init_transformer_block(key, E, H, FE):
    k = jax.random.split(key, 5)
    Hf = FE * E
    return {
        "attn": init_attention_params(k[0], E, H),
        "ln1_g": jnp.ones((1, E), jnp.float32), "ln1_b": jnp.zeros((1, E), jnp.float32),
        "ln2_g": jnp.ones((1, E), jnp.float32), "ln2_b": jnp.zeros((1, E), jnp.float32),
        "w1T": _rand(k[1], (Hf, E)).T.astype(jnp.bfloat16),
        "b1": _rand(k[2], (Hf,)).reshape(1, Hf),
        "w2T": _rand(k[3], (E, Hf)).T.astype(jnp.bfloat16),
        "b2": _rand(k[4], (E,)).reshape(1, E),
    }


def init_decoder_block(key, E, H, FE):
    k = jax.random.split(key, 2)
    return {
        "attn": init_attention_params(k[0], E, H),
        "ln_g": jnp.ones((1, E), jnp.float32), "ln_b": jnp.zeros((1, E), jnp.float32),
        "block": init_transformer_block(k[1], E, H, FE),
    }


def init_encoder(key, V, E, n_layers, H, FE, max_len):
    k = jax.random.split(key, 2 + n_layers)
    return {
        "word_emb": _rand(k[0], (V, E)),
        "pos_emb": _rand(k[1], (max_len, E)),
        "layers": [init_transformer_block(k[2 + i], E, H, FE) for i in range(n_layers)],
    }


def init_decoder(key, V, E, n_layers, H, FE, max_len):
    k = jax.random.split(key, 4 + n_layers)
    Vp = _round_up(V, 128)                     # lane-dense (multiple-of-128) logits
    fc_w = _rand(k[2], (V, E))                 # nn.Linear(E, V) weight (out, in)
    fc_b = _rand(k[3], (V,))
    fcT = jnp.zeros((E, Vp), jnp.float32).at[:, :V].set(fc_w.T)
    fcb = jnp.zeros((1, Vp), jnp.float32).at[:, :V].set(fc_b)
    return {
        "word_emb": _rand(k[0], (V, E)),
        "pos_emb": _rand(k[1], (max_len, E)),
        "layers": [init_decoder_block(k[4 + i], E, H, FE) for i in range(n_layers)],
        "fcT": fcT.astype(jnp.bfloat16),
        "fc_b": fcb,
    }


# --------------------------------------------------------------------------
# Forward composition (embedding gathers stay in XLA; hot paths are fused kernels)
# --------------------------------------------------------------------------

def encoder_fwd(p, x_ids, src_valid, heads):
    # TODO(synk): embedding-table gather left to XLA; a Pallas DMA-gather is not
    # worthwhile at these sizes.
    L = x_ids.shape[1]
    out = p["word_emb"][x_ids] + p["pos_emb"][:L][None, :, :]
    for lp in p["layers"]:
        out = transformer_block(lp, out, out, src_valid, heads)
    return out


def decoder_fwd(p, x_ids, enc_out, src_valid, tgt_valid, heads, tgt_vocab):
    N, L = x_ids.shape
    x = p["word_emb"][x_ids] + p["pos_emb"][:L][None, :, :]
    for lp in p["layers"]:
        q = decoder_self_attention(lp, x, tgt_valid, heads)
        x = transformer_block(lp["block"], q, enc_out, src_valid, heads)
    E = x.shape[-1]
    logits = vocab_projection(x.reshape(N * L, E), p["fcT"], p["fc_b"], tgt_vocab)
    return logits.reshape(N, L, tgt_vocab)


def transformer_fwd(params, src, target, *, src_pad_idx, tgt_pad_idx, heads, tgt_vocab):
    # Per-token validity vectors replace the materialized (N,1,Lq,Lk) masks; the
    # pad/causal masks are rebuilt in-kernel (src mask depends only on key index,
    # tgt mask = key validity & lower-triangular causal — same as the reference).
    src_valid = (src != src_pad_idx).astype(jnp.int32)[:, None, :]     # (N, 1, Ls)
    tgt_valid = (target != tgt_pad_idx).astype(jnp.int32)[:, None, :]  # (N, 1, Lt)
    enc = encoder_fwd(params["encoder"], src, src_valid, heads)
    return decoder_fwd(params["decoder"], target, enc, src_valid, tgt_valid,
                       heads, tgt_vocab)


# --------------------------------------------------------------------------
# Main
# --------------------------------------------------------------------------

if __name__ == "__main__":
    EMBED, HEADS, FWD_EXP, NUM_LAYERS, MAX_LEN = 32, 4, 4, 2, 16
    SRC_VOCAB, TGT_VOCAB = 50, 60
    SRC_PAD, TGT_PAD = 0, 0
    N, L_SRC, L_TGT = 2, 8, 8

    key = jax.random.PRNGKey(0)
    k_enc, k_dec, k_src, k_tgt = jax.random.split(key, 4)

    params = {
        "encoder": init_encoder(k_enc, SRC_VOCAB, EMBED, NUM_LAYERS, HEADS, FWD_EXP, MAX_LEN),
        "decoder": init_decoder(k_dec, TGT_VOCAB, EMBED, NUM_LAYERS, HEADS, FWD_EXP, MAX_LEN),
    }

    src = jax.random.randint(k_src, (N, L_SRC), 1, SRC_VOCAB, dtype=jnp.int32)
    tgt = jax.random.randint(k_tgt, (N, L_TGT), 1, TGT_VOCAB, dtype=jnp.int32)
    # a few pad tokens to exercise the masking path
    src = src.at[0, -2:].set(SRC_PAD)
    tgt = tgt.at[1, -1].set(TGT_PAD)

    fwd = jax.jit(functools.partial(
        transformer_fwd, src_pad_idx=SRC_PAD, tgt_pad_idx=TGT_PAD,
        heads=HEADS, tgt_vocab=TGT_VOCAB))

    out = jax.block_until_ready(fwd(params, src, tgt))
    assert out.shape == (N, L_TGT, TGT_VOCAB)
    assert bool(jnp.all(jnp.isfinite(out)))
    print("KERNEL_OK")
</pallas_src>

<mosaic_0001>
module attributes {stable_mosaic.version = 11 : i64} {
  func.func @_decoder_self_attn_kernel(%arg0: i32, %arg1: memref<1x1x8xi32, #tpu.memory_space<vmem>>, %arg2: memref<1x8x32xf32, #tpu.memory_space<vmem>>, %arg3: memref<32x32xbf16, #tpu.memory_space<vmem>>, %arg4: memref<32x32xbf16, #tpu.memory_space<vmem>>, %arg5: memref<32x32xbf16, #tpu.memory_space<vmem>>, %arg6: memref<32x32xbf16, #tpu.memory_space<vmem>>, %arg7: memref<1x32xf32, #tpu.memory_space<vmem>>, %arg8: memref<1x32xf32, #tpu.memory_space<vmem>>, %arg9: memref<1x32xf32, #tpu.memory_space<vmem>>, %arg10: memref<1x8x32xf32, #tpu.memory_space<vmem>>) attributes {dimension_semantics = [#tpu.dimension_semantics<parallel>], iteration_bounds = array<i64: 2>, scalar_prefetch = 0 : i64, scratch_operands = 0 : i64, tpu.core_type = #tpu.core_type<tc>, window_params = [{transform_indices = @transform_0, window_bounds = array<i64: 1, 1, 8>}, {transform_indices = @transform_1, window_bounds = array<i64: 1, 8, 32>}, {pipeline_mode = #tpu.pipeline_mode<synchronous>, transform_indices = @transform_2, window_bounds = array<i64: 32, 32>}, {pipeline_mode = #tpu.pipeline_mode<synchronous>, transform_indices = @transform_3, window_bounds = array<i64: 32, 32>}, {pipeline_mode = #tpu.pipeline_mode<synchronous>, transform_indices = @transform_4, window_bounds = array<i64: 32, 32>}, {pipeline_mode = #tpu.pipeline_mode<synchronous>, transform_indices = @transform_5, window_bounds = array<i64: 32, 32>}, {pipeline_mode = #tpu.pipeline_mode<synchronous>, transform_indices = @transform_6, window_bounds = array<i64: 1, 32>}, {pipeline_mode = #tpu.pipeline_mode<synchronous>, transform_indices = @transform_7, window_bounds = array<i64: 1, 32>}, {pipeline_mode = #tpu.pipeline_mode<synchronous>, transform_indices = @transform_8, window_bounds = array<i64: 1, 32>}, {transform_indices = @transform_9, window_bounds = array<i64: 1, 8, 32>}]} {
    %c0 = arith.constant 0 : index
    %c0_0 = arith.constant 0 : index
    %c0_1 = arith.constant 0 : index
    %0 = vector.load %arg2[%c0, %c0_0, %c0_1] : memref<1x8x32xf32, #tpu.memory_space<vmem>>, vector<1x8x32xf32>
    %1 = vector.shape_cast %0 : vector<1x8x32xf32> to vector<8x32xf32>
    %c0_2 = arith.constant 0 : index
    %c0_3 = arith.constant 0 : index
    %c0_4 = arith.constant 0 : index
    %2 = vector.load %arg1[%c0_2, %c0_3, %c0_4] : memref<1x1x8xi32, #tpu.memory_space<vmem>>, vector<1x1x8xi32>
    %3 = vector.shape_cast %2 : vector<1x1x8xi32> to vector<1x8xi32>
    %c0_i32 = arith.constant 0 : i32
    %4 = vector.broadcast %c0_i32 : i32 to vector<1x8xi32>
    %5 = arith.cmpi ne, %3, %4 : vector<1x8xi32>
    %6 = vector.shape_cast %5 : vector<1x8xi1> to vector<1x8xi1>
    %7 = vector.broadcast %6 : vector<1x8xi1> to vector<8x8xi1>
    %8 = tpu.iota {dimensions = array<i32: 0>} : vector<8x8xi32>
    %9 = tpu.iota {dimensions = array<i32: 1>} : vector<8x8xi32>
    %10 = arith.cmpi sle, %9, %8 : vector<8x8xi32>
    %11 = arith.andi %7, %10 : vector<8x8xi1>
    %c0_5 = arith.constant 0 : index
    %c0_6 = arith.constant 0 : index
    %12 = vector.load %arg3[%c0_5, %c0_6] : memref<32x32xbf16, #tpu.memory_space<vmem>>, vector<32x32xbf16>
    %c0_7 = arith.constant 0 : index
    %c0_8 = arith.constant 0 : index
    %13 = vector.load %arg4[%c0_7, %c0_8] : memref<32x32xbf16, #tpu.memory_space<vmem>>, vector<32x32xbf16>
    %c0_9 = arith.constant 0 : index
    %c0_10 = arith.constant 0 : index
    %14 = vector.load %arg5[%c0_9, %c0_10] : memref<32x32xbf16, #tpu.memory_space<vmem>>, vector<32x32xbf16>
    %c0_11 = arith.constant 0 : index
    %c0_12 = arith.constant 0 : index
    %15 = vector.load %arg6[%c0_11, %c0_12] : memref<32x32xbf16, #tpu.memory_space<vmem>>, vector<32x32xbf16>
    %c0_13 = arith.constant 0 : index
    %c0_14 = arith.constant 0 : index
    %16 = vector.load %arg7[%c0_13, %c0_14] : memref<1x32xf32, #tpu.memory_space<vmem>>, vector<1x32xf32>
    %17 = arith.truncf %1 : vector<8x32xf32> to vector<8x32xbf16>
    %18 = arith.truncf %1 : vector<8x32xf32> to vector<8x32xbf16>
    %cst = arith.constant dense<0.000000e+00> : vector<8x32xf32>
    %19 = tpu.matmul %17, %12, %cst {dimension_numbers = #tpu.dot_dimension_numbers<[1], [0], [0], [1], [0, 0, 1, 1], [], []>} : vector<8x32xbf16>, vector<32x32xbf16>, vector<8x32xf32> -> vector<8x32xf32>
    %cst_15 = arith.constant dense<0.000000e+00> : vector<8x32xf32>
    %20 = tpu.matmul %18, %13, %cst_15 {dimension_numbers = #tpu.dot_dimension_numbers<[1], [0], [0], [1], [0, 0, 1, 1], [], []>} : vector<8x32xbf16>, vector<32x32xbf16>, vector<8x32xf32> -> vector<8x32xf32>
    %cst_16 = arith.constant dense<0.000000e+00> : vector<8x32xf32>
    %21 = tpu.matmul %18, %14, %cst_16 {dimension_numbers = #tpu.dot_dimension_numbers<[1], [0], [0], [1], [0, 0, 1, 1], [], []>} : vector<8x32xbf16>, vector<32x32xbf16>, vector<8x32xf32> -> vector<8x32xf32>
    %22 = vector.shape_cast %16 : vector<1x32xf32> to vector<1x32xf32>
    %23 = vector.broadcast %22 : vector<1x32xf32> to vector<8x32xf32>
    %24 = vector.extract_strided_slice %19 {offsets = [0, 0], sizes = [8, 8], strides = [1, 1]} : vector<8x32xf32> to vector<8x8xf32>
    %25 = arith.truncf %24 : vector<8x8xf32> to vector<8x8xbf16>
    %26 = vector.extract_strided_slice %20 {offsets = [0, 0], sizes = [8, 8], strides = [1, 1]} : vector<8x32xf32> to vector<8x8xf32>
    %27 = arith.truncf %26 : vector<8x8xf32> to vector<8x8xbf16>
    %28 = vector.extract_strided_slice %21 {offsets = [0, 0], sizes = [8, 8], strides = [1, 1]} : vector<8x32xf32> to vector<8x8xf32>
    %29 = arith.truncf %28 : vector<8x8xf32> to vector<8x8xbf16>
    %cst_17 = arith.constant dense<0.000000e+00> : vector<8x8xf32>
    %30 = tpu.matmul %25, %27, %cst_17 {dimension_numbers = #tpu.dot_dimension_numbers<[1], [1], [0], [0], [0, 0, 1, 0], [], []>} : vector<8x8xbf16>, vector<8x8xbf16>, vector<8x8xf32> -> vector<8x8xf32>
    %cst_18 = arith.constant -9.99999995E+11 : f32
    %31 = vector.broadcast %cst_18 : f32 to vector<8x8xf32>
    %32 = arith.select %11, %30, %31 : vector<8x8xi1>, vector<8x8xf32>
    %cst_19 = arith.constant 0.176776692 : f32
    %33 = vector.broadcast %cst_19 : f32 to vector<8x8xf32>
    %34 = arith.mulf %32, %33 : vector<8x8xf32>
    %cst_20 = arith.constant dense<0xFF800000> : vector<8xf32>
    %35 = vector.multi_reduction <maximumf>, %34, %cst_20 [1] : vector<8x8xf32> to vector<8xf32>
    %36 = vector.shape_cast %35 : vector<8xf32> to vector<8x1xf32>
    %37 = vector.broadcast %36 : vector<8x1xf32> to vector<8x8xf32>
    %38 = arith.subf %34, %37 : vector<8x8xf32>
    %39 = math.exp %38 : vector<8x8xf32>
    %cst_21 = arith.constant dense<0.000000e+00> : vector<8xf32>
    %40 = vector.multi_reduction <add>, %39, %cst_21 [1] : vector<8x8xf32> to vector<8xf32>
    %41 = vector.shape_cast %40 : vector<8xf32> to vector<8x1xf32>
    %42 = vector.broadcast %41 : vector<8x1xf32> to vector<8x8xf32>
    %43 = arith.divf %39, %42 : vector<8x8xf32>
    %44 = arith.truncf %43 : vector<8x8xf32> to vector<8x8xbf16>
    %cst_22 = arith.constant dense<0.000000e+00> : vector<8x8xf32>
    %45 = tpu.matmul %44, %29, %cst_22 {dimension_numbers = #tpu.dot_dimension_numbers<[1], [0], [0], [1], [0, 0, 1, 1], [], []>} : vector<8x8xbf16>, vector<8x8xbf16>, vector<8x8xf32> -> vector<8x8xf32>
    %46 = arith.truncf %45 : vector<8x8xf32> to vector<8x8xbf16>
    %47 = vector.extract_strided_slice %15 {offsets = [0, 0], sizes = [8, 32], strides = [1, 1]} : vector<32x32xbf16> to vector<8x32xbf16>
    %cst_23 = arith.constant dense<0.000000e+00> : vector<8x32xf32>
    %48 = tpu.matmul %46, %47, %cst_23 {dimension_numbers = #tpu.dot_dimension_numbers<[1], [0], [0], [1], [0, 0, 1, 1], [], []>} : vector<8x8xbf16>, vector<8x32xbf16>, vector<8x32xf32> -> vector<8x32xf32>
    %49 = arith.addf %23, %48 : vector<8x32xf32>
    %50 = vector.extract_strided_slice %19 {offsets = [0, 8], sizes = [8, 8], strides = [1, 1]} : vector<8x32xf32> to vector<8x8xf32>
    %51 = arith.truncf %50 : vector<8x8xf32> to vector<8x8xbf16>
    %52 = vector.extract_strided_slice %20 {offsets = [0, 8], sizes = [8, 8], strides = [1, 1]} : vector<8x32xf32> to vector<8x8xf32>
    %53 = arith.truncf %52 : vector<8x8xf32> to vector<8x8xbf16>
    %54 = vector.extract_strided_slice %21 {offsets = [0, 8], sizes = [8, 8], strides = [1, 1]} : vector<8x32xf32> to vector<8x8xf32>
    %55 = arith.truncf %54 : vector<8x8xf32> to vector<8x8xbf16>
    %cst_24 = arith.constant dense<0.000000e+00> : vector<8x8xf32>
    %56 = tpu.matmul %51, %53, %cst_24 {dimension_numbers = #tpu.dot_dimension_numbers<[1], [1], [0], [0], [0, 0, 1, 0], [], []>} : vector<8x8xbf16>, vector<8x8xbf16>, vector<8x8xf32> -> vector<8x8xf32>
    %cst_25 = arith.constant -9.99999995E+11 : f32
    %57 = vector.broadcast %cst_25 : f32 to vector<8x8xf32>
    %58 = arith.select %11, %56, %57 : vector<8x8xi1>, vector<8x8xf32>
    %cst_26 = arith.constant 0.176776692 : f32
    %59 = vector.broadcast %cst_26 : f32 to vector<8x8xf32>
    %60 = arith.mulf %58, %59 : vector<8x8xf32>
    %cst_27 = arith.constant dense<0xFF800000> : vector<8xf32>
    %61 = vector.multi_reduction <maximumf>, %60, %cst_27 [1] : vector<8x8xf32> to vector<8xf32>
    %62 = vector.shape_cast %61 : vector<8xf32> to vector<8x1xf32>
    %63 = vector.broadcast %62 : vector<8x1xf32> to vector<8x8xf32>
    %64 = arith.subf %60, %63 : vector<8x8xf32>
    %65 = math.exp %64 : vector<8x8xf32>
    %cst_28 = arith.constant dense<0.000000e+00> : vector<8xf32>
    %66 = vector.multi_reduction <add>, %65, %cst_28 [1] : vector<8x8xf32> to vector<8xf32>
    %67 = vector.shape_cast %66 : vector<8xf32> to vector<8x1xf32>
    %68 = vector.broadcast %67 : vector<8x1xf32> to vector<8x8xf32>
    %69 = arith.divf %65, %68 : vector<8x8xf32>
    %70 = arith.truncf %69 : vector<8x8xf32> to vector<8x8xbf16>
    %cst_29 = arith.constant dense<0.000000e+00> : vector<8x8xf32>
    %71 = tpu.matmul %70, %55, %cst_29 {dimension_numbers = #tpu.dot_dimension_numbers<[1], [0], [0], [1], [0, 0, 1, 1], [], []>} : vector<8x8xbf16>, vector<8x8xbf16>, vector<8x8xf32> -> vector<8x8xf32>
    %72 = arith.truncf %71 : vector<8x8xf32> to vector<8x8xbf16>
    %73 = vector.extract_strided_slice %15 {offsets = [8, 0], sizes = [8, 32], strides = [1, 1]} : vector<32x32xbf16> to vector<8x32xbf16>
    %cst_30 = arith.constant dense<0.000000e+00> : vector<8x32xf32>
    %74 = tpu.matmul %72, %73, %cst_30 {dimension_numbers = #tpu.dot_dimension_numbers<[1], [0], [0], [1], [0, 0, 1, 1], [], []>} : vector<8x8xbf16>, vector<8x32xbf16>, vector<8x32xf32> -> vector<8x32xf32>
    %75 = arith.addf %49, %74 : vector<8x32xf32>
    %76 = vector.extract_strided_slice %19 {offsets = [0, 16], sizes = [8, 8], strides = [1, 1]} : vector<8x32xf32> to vector<8x8xf32>
    %77 = arith.truncf %76 : vector<8x8xf32> to vector<8x8xbf16>
    %78 = vector.extract_strided_slice %20 {offsets = [0, 16], sizes = [8, 8], strides = [1, 1]} : vector<8x32xf32> to vector<8x8xf32>
    %79 = arith.truncf %78 : vector<8x8xf32> to vector<8x8xbf16>
    %80 = vector.extract_strided_slice %21 {offsets = [0, 16], sizes = [8, 8], strides = [1, 1]} : vector<8x32xf32> to vector<8x8xf32>
    %81 = arith.truncf %80 : vector<8x8xf32> to vector<8x8xbf16>
    %cst_31 = arith.constant dense<0.000000e+00> : vector<8x8xf32>
    %82 = tpu.matmul %77, %79, %cst_31 {dimension_numbers = #tpu.dot_dimension_numbers<[1], [1], [0], [0], [0, 0, 1, 0], [], []>} : vector<8x8xbf16>, vector<8x8xbf16>, vector<8x8xf32> -> vector<8x8xf32>
    %cst_32 = arith.constant -9.99999995E+11 : f32
    %83 = vector.broadcast %cst_32 : f32 to vector<8x8xf32>
    %84 = arith.select %11, %82, %83 : vector<8x8xi1>, vector<8x8xf32>
    %cst_33 = arith.constant 0.176776692 : f32
    %85 = vector.broadcast %cst_33 : f32 to vector<8x8xf32>
    %86 = arith.mulf %84, %85 : vector<8x8xf32>
    %cst_34 = arith.constant dense<0xFF800000> : vector<8xf32>
    %87 = vector.multi_reduction <maximumf>, %86, %cst_34 [1] : vector<8x8xf32> to vector<8xf32>
    %88 = vector.shape_cast %87 : vector<8xf32> to vector<8x1xf32>
    %89 = vector.broadcast %88 : vector<8x1xf32> to vector<8x8xf32>
    %90 = arith.subf %86, %89 : vector<8x8xf32>
    %91 = math.exp %90 : vector<8x8xf32>
    %cst_35 = arith.constant dense<0.000000e+00> : vector<8xf32>
    %92 = vector.multi_reduction <add>, %91, %cst_35 [1] : vector<8x8xf32> to vector<8xf32>
    %93 = vector.shape_cast %92 : vector<8xf32> to vector<8x1xf32>
    %94 = vector.broadcast %93 : vector<8x1xf32> to vector<8x8xf32>
    %95 = arith.divf %91, %94 : vector<8x8xf32>
    %96 = arith.truncf %95 : vector<8x8xf32> to vector<8x8xbf16>
    %cst_36 = arith.constant dense<0.000000e+00> : vector<8x8xf32>
    %97 = tpu.matmul %96, %81, %cst_36 {dimension_numbers = #tpu.dot_dimension_numbers<[1], [0], [0], [1], [0, 0, 1, 1], [], []>} : vector<8x8xbf16>, vector<8x8xbf16>, vector<8x8xf32> -> vector<8x8xf32>
    %98 = arith.truncf %97 : vector<8x8xf32> to vector<8x8xbf16>
    %99 = vector.extract_strided_slice %15 {offsets = [16, 0], sizes = [8, 32], strides = [1, 1]} : vector<32x32xbf16> to vector<8x32xbf16>
    %cst_37 = arith.constant dense<0.000000e+00> : vector<8x32xf32>
    %100 = tpu.matmul %98, %99, %cst_37 {dimension_numbers = #tpu.dot_dimension_numbers<[1], [0], [0], [1], [0, 0, 1, 1], [], []>} : vector<8x8xbf16>, vector<8x32xbf16>, vector<8x32xf32> -> vector<8x32xf32>
    %101 = arith.addf %75, %100 : vector<8x32xf32>
    %102 = vector.extract_strided_slice %19 {offsets = [0, 24], sizes = [8, 8], strides = [1, 1]} : vector<8x32xf32> to vector<8x8xf32>
    %103 = arith.truncf %102 : vector<8x8xf32> to vector<8x8xbf16>
    %104 = vector.extract_strided_slice %20 {offsets = [0, 24], sizes = [8, 8], strides = [1, 1]} : vector<8x32xf32> to vector<8x8xf32>
    %105 = arith.truncf %104 : vector<8x8xf32> to vector<8x8xbf16>
    %106 = vector.extract_strided_slice %21 {offsets = [0, 24], sizes = [8, 8], strides = [1, 1]} : vector<8x32xf32> to vector<8x8xf32>
    %107 = arith.truncf %106 : vector<8x8xf32> to vector<8x8xbf16>
    %cst_38 = arith.constant dense<0.000000e+00> : vector<8x8xf32>
    %108 = tpu.matmul %103, %105, %cst_38 {dimension_numbers = #tpu.dot_dimension_numbers<[1], [1], [0], [0], [0, 0, 1, 0], [], []>} : vector<8x8xbf16>, vector<8x8xbf16>, vector<8x8xf32> -> vector<8x8xf32>
    %cst_39 = arith.constant -9.99999995E+11 : f32
    %109 = vector.broadcast %cst_39 : f32 to vector<8x8xf32>
    %110 = arith.select %11, %108, %109 : vector<8x8xi1>, vector<8x8xf32>
    %cst_40 = arith.constant 0.176776692 : f32
    %111 = vector.broadcast %cst_40 : f32 to vector<8x8xf32>
    %112 = arith.mulf %110, %111 : vector<8x8xf32>
    %cst_41 = arith.constant dense<0xFF800000> : vector<8xf32>
    %113 = vector.multi_reduction <maximumf>, %112, %cst_41 [1] : vector<8x8xf32> to vector<8xf32>
    %114 = vector.shape_cast %113 : vector<8xf32> to vector<8x1xf32>
    %115 = vector.broadcast %114 : vector<8x1xf32> to vector<8x8xf32>
    %116 = arith.subf %112, %115 : vector<8x8xf32>
    %117 = math.exp %116 : vector<8x8xf32>
    %cst_42 = arith.constant dense<0.000000e+00> : vector<8xf32>
    %118 = vector.multi_reduction <add>, %117, %cst_42 [1] : vector<8x8xf32> to vector<8xf32>
    %119 = vector.shape_cast %118 : vector<8xf32> to vector<8x1xf32>
    %120 = vector.broadcast %119 : vector<8x1xf32> to vector<8x8xf32>
    %121 = arith.divf %117, %120 : vector<8x8xf32>
    %122 = arith.truncf %121 : vector<8x8xf32> to vector<8x8xbf16>
    %cst_43 = arith.constant dense<0.000000e+00> : vector<8x8xf32>
    %123 = tpu.matmul %122, %107, %cst_43 {dimension_numbers = #tpu.dot_dimension_numbers<[1], [0], [0], [1], [0, 0, 1, 1], [], []>} : vector<8x8xbf16>, vector<8x8xbf16>, vector<8x8xf32> -> vector<8x8xf32>
    %124 = arith.truncf %123 : vector<8x8xf32> to vector<8x8xbf16>
    %125 = vector.extract_strided_slice %15 {offsets = [24, 0], sizes = [8, 32], strides = [1, 1]} : vector<32x32xbf16> to vector<8x32xbf16>
    %cst_44 = arith.constant dense<0.000000e+00> : vector<8x32xf32>
    %126 = tpu.matmul %124, %125, %cst_44 {dimension_numbers = #tpu.dot_dimension_numbers<[1], [0], [0], [1], [0, 0, 1, 1], [], []>} : vector<8x8xbf16>, vector<8x32xbf16>, vector<8x32xf32> -> vector<8x32xf32>
    %127 = arith.addf %101, %126 : vector<8x32xf32>
    %128 = arith.addf %127, %1 : vector<8x32xf32>
    %c0_45 = arith.constant 0 : index
    %c0_46 = arith.constant 0 : index
    %129 = vector.load %arg8[%c0_45, %c0_46] : memref<1x32xf32, #tpu.memory_space<vmem>>, vector<1x32xf32>
    %c0_47 = arith.constant 0 : index
    %c0_48 = arith.constant 0 : index
    %130 = vector.load %arg9[%c0_47, %c0_48] : memref<1x32xf32, #tpu.memory_space<vmem>>, vector<1x32xf32>
    %cst_49 = arith.constant dense<0.000000e+00> : vector<8xf32>
    %131 = vector.multi_reduction <add>, %128, %cst_49 [1] : vector<8x32xf32> to vector<8xf32>
    %132 = vector.shape_cast %131 : vector<8xf32> to vector<8x1xf32>
    %cst_50 = arith.constant 3.200000e+01 : f32
    %133 = vector.broadcast %cst_50 : f32 to vector<8x1xf32>
    %134 = arith.divf %132, %133 : vector<8x1xf32>
    %135 = vector.broadcast %134 : vector<8x1xf32> to vector<8x32xf32>
    %136 = arith.subf %128, %135 : vector<8x32xf32>
    %137 = arith.mulf %136, %136 : vector<8x32xf32>
    %cst_51 = arith.constant dense<0.000000e+00> : vector<8xf32>
    %138 = vector.multi_reduction <add>, %137, %cst_51 [1] : vector<8x32xf32> to vector<8xf32>
    %139 = vector.shape_cast %138 : vector<8xf32> to vector<8x1xf32>
    %cst_52 = arith.constant 3.200000e+01 : f32
    %140 = vector.broadcast %cst_52 : f32 to vector<8x1xf32>
    %141 = arith.divf %139, %140 : vector<8x1xf32>
    %142 = vector.broadcast %134 : vector<8x1xf32> to vector<8x32xf32>
    %143 = arith.subf %128, %142 : vector<8x32xf32>
    %cst_53 = arith.constant 9.99999974E-6 : f32
    %144 = vector.broadcast %cst_53 : f32 to vector<8x1xf32>
    %145 = arith.addf %141, %144 : vector<8x1xf32>
    %146 = math.rsqrt %145 : vector<8x1xf32>
    %147 = vector.broadcast %146 : vector<8x1xf32> to vector<8x32xf32>
    %148 = arith.mulf %143, %147 : vector<8x32xf32>
    %149 = vector.broadcast %129 : vector<1x32xf32> to vector<8x32xf32>
    %150 = arith.mulf %148, %149 : vector<8x32xf32>
    %151 = vector.broadcast %130 : vector<1x32xf32> to vector<8x32xf32>
    %152 = arith.addf %150, %151 : vector<8x32xf32>
    %c0_54 = arith.constant 0 : index
    %c0_55 = arith.constant 0 : index
    %c0_56 = arith.constant 0 : index
    %153 = vector.load %arg10[%c0_54, %c0_55, %c0_56] : memref<1x8x32xf32, #tpu.memory_space<vmem>>, vector<1x8x32xf32>
    %154 = vector.shape_cast %153 : vector<1x8x32xf32> to vector<8x32xf32>
    %155 = vector.shape_cast %152 : vector<8x32xf32> to vector<1x8x32xf32>
    tpu.vector_store %arg10[%c0_54, %c0_55, %c0_56], %155 {strides = array<i32>} : memref<1x8x32xf32, #tpu.memory_space<vmem>>, vector<1x8x32xf32>,
    return
  }
  func.func @transform_0(%arg0: i32) -> (i32, i32, i32) {
    %c0_i32 = arith.constant 0 : i32
    %c0_i32_0 = arith.constant 0 : i32
    %c0_i32_1 = arith.constant 0 : i32
    return %arg0, %c0_i32, %c0_i32_0 : i32, i32, i32
  }
  func.func @transform_1(%arg0: i32) -> (i32, i32, i32) {
    %c0_i32 = arith.constant 0 : i32
    %c0_i32_0 = arith.constant 0 : i32
    %c0_i32_1 = arith.constant 0 : i32
    return %arg0, %c0_i32, %c0_i32_0 : i32, i32, i32
  }
  func.func @transform_2(%arg0: i32) -> (i32, i32) {
    %c0_i32 = arith.constant 0 : i32
    %c0_i32_0 = arith.constant 0 : i32
    %c0_i32_1 = arith.constant 0 : i32
    return %c0_i32, %c0_i32_0 : i32, i32
  }
  func.func @transform_3(%arg0: i32) -> (i32, i32) {
    %c0_i32 = arith.constant 0 : i32
    %c0_i32_0 = arith.constant 0 : i32
    %c0_i32_1 = arith.constant 0 : i32
    return %c0_i32, %c0_i32_0 : i32, i32
  }
  func.func @transform_4(%arg0: i32) -> (i32, i32) {
    %c0_i32 = arith.constant 0 : i32
    %c0_i32_0 = arith.constant 0 : i32
    %c0_i32_1 = arith.constant 0 : i32
    return %c0_i32, %c0_i32_0 : i32, i32
  }
  func.func @transform_5(%arg0: i32) -> (i32, i32) {
    %c0_i32 = arith.constant 0 : i32
    %c0_i32_0 = arith.constant 0 : i32
    %c0_i32_1 = arith.constant 0 : i32
    return %c0_i32, %c0_i32_0 : i32, i32
  }
  func.func @transform_6(%arg0: i32) -> (i32, i32) {
    %c0_i32 = arith.constant 0 : i32
    %c0_i32_0 = arith.constant 0 : i32
    %c0_i32_1 = arith.constant 0 : i32
    return %c0_i32, %c0_i32_0 : i32, i32
  }
  func.func @transform_7(%arg0: i32) -> (i32, i32) {
    %c0_i32 = arith.constant 0 : i32
    %c0_i32_0 = arith.constant 0 : i32
    %c0_i32_1 = arith.constant 0 : i32
    return %c0_i32, %c0_i32_0 : i32, i32
  }
  func.func @transform_8(%arg0: i32) -> (i32, i32) {
    %c0_i32 = arith.constant 0 : i32
    %c0_i32_0 = arith.constant 0 : i32
    %c0_i32_1 = arith.constant 0 : i32
    return %c0_i32, %c0_i32_0 : i32, i32
  }
  func.func @transform_9(%arg0: i32) -> (i32, i32, i32) {
    %c0_i32 = arith.constant 0 : i32
    %c0_i32_0 = arith.constant 0 : i32
    %c0_i32_1 = arith.constant 0 : i32
    return %arg0, %c0_i32, %c0_i32_0 : i32, i32, i32
  }
}

module attributes {stable_mosaic.version = 11 : i64} {
  func.func @_transformer_block_kernel(%arg0: i32, %arg1: memref<1x1x8xi32, #tpu.memory_space<vmem>>, %arg2: memref<1x8x32xf32, #tpu.memory_space<vmem>>, %arg3: memref<1x8x32xf32, #tpu.memory_space<vmem>>, %arg4: memref<32x32xbf16, #tpu.memory_space<vmem>>, %arg5: memref<32x32xbf16, #tpu.memory_space<vmem>>, %arg6: memref<32x32xbf16, #tpu.memory_space<vmem>>, %arg7: memref<32x32xbf16, #tpu.memory_space<vmem>>, %arg8: memref<1x32xf32, #tpu.memory_space<vmem>>, %arg9: memref<1x32xf32, #tpu.memory_space<vmem>>, %arg10: memref<1x32xf32, #tpu.memory_space<vmem>>, %arg11: memref<32x128xbf16, #tpu.memory_space<vmem>>, %arg12: memref<1x128xf32, #tpu.memory_space<vmem>>, %arg13: memref<128x32xbf16, #tpu.memory_space<vmem>>, %arg14: memref<1x32xf32, #tpu.memory_space<vmem>>, %arg15: memref<1x32xf32, #tpu.memory_space<vmem>>, %arg16: memref<1x32xf32, #tpu.memory_space<vmem>>, %arg17: memref<1x8x32xf32, #tpu.memory_space<vmem>>) attributes {dimension_semantics = [#tpu.dimension_semantics<parallel>], iteration_bounds = array<i64: 2>, scalar_prefetch = 0 : i64, scratch_operands = 0 : i64, tpu.core_type = #tpu.core_type<tc>, window_params = [{transform_indices = @transform_0, window_bounds = array<i64: 1, 1, 8>}, {transform_indices = @transform_1, window_bounds = array<i64: 1, 8, 32>}, {transform_indices = @transform_2, window_bounds = array<i64: 1, 8, 32>}, {pipeline_mode = #tpu.pipeline_mode<synchronous>, transform_indices = @transform_3, window_bounds = array<i64: 32, 32>}, {pipeline_mode = #tpu.pipeline_mode<synchronous>, transform_indices = @transform_4, window_bounds = array<i64: 32, 32>}, {pipeline_mode = #tpu.pipeline_mode<synchronous>, transform_indices = @transform_5, window_bounds = array<i64: 32, 32>}, {pipeline_mode = #tpu.pipeline_mode<synchronous>, transform_indices = @transform_6, window_bounds = array<i64: 32, 32>}, {pipeline_mode = #tpu.pipeline_mode<synchronous>, transform_indices = @transform_7, window_bounds = array<i64: 1, 32>}, {pipeline_mode = #tpu.pipeline_mode<synchronous>, transform_indices = @transform_8, window_bounds = array<i64: 1, 32>}, {pipeline_mode = #tpu.pipeline_mode<synchronous>, transform_indices = @transform_9, window_bounds = array<i64: 1, 32>}, {pipeline_mode = #tpu.pipeline_mode<synchronous>, transform_indices = @transform_10, window_bounds = array<i64: 32, 128>}, {pipeline_mode = #tpu.pipeline_mode<synchronous>, transform_indices = @transform_11, window_bounds = array<i64: 1, 128>}, {pipeline_mode = #tpu.pipeline_mode<synchronous>, transform_indices = @transform_12, window_bounds = array<i64: 128, 32>}, {pipeline_mode = #tpu.pipeline_mode<synchronous>, transform_indices = @transform_13, window_bounds = array<i64: 1, 32>}, {pipeline_mode = #tpu.pipeline_mode<synchronous>, transform_indices = @transform_14, window_bounds = array<i64: 1, 32>}, {pipeline_mode = #tpu.pipeline_mode<synchronous>, transform_indices = @transform_15, window_bounds = array<i64: 1, 32>}, {transform_indices = @transform_16, window_bounds = array<i64: 1, 8, 32>}]} {
    %c0 = arith.constant 0 : index
    %c0_0 = arith.constant 0 : index
    %c0_1 = arith.constant 0 : index
    %0 = vector.load %arg2[%c0, %c0_0, %c0_1] : memref<1x8x32xf32, #tpu.memory_space<vmem>>, vector<1x8x32xf32>
    %1 = vector.shape_cast %0 : vector<1x8x32xf32> to vector<8x32xf32>
    %c0_2 = arith.constant 0 : index
    %c0_3 = arith.constant 0 : index
    %c0_4 = arith.constant 0 : index
    %2 = vector.load %arg3[%c0_2, %c0_3, %c0_4] : memref<1x8x32xf32, #tpu.memory_space<vmem>>, vector<1x8x32xf32>
    %3 = vector.shape_cast %2 : vector<1x8x32xf32> to vector<8x32xf32>
    %c0_5 = arith.constant 0 : index
    %c0_6 = arith.constant 0 : index
    %c0_7 = arith.constant 0 : index
    %4 = vector.load %arg1[%c0_5, %c0_6, %c0_7] : memref<1x1x8xi32, #tpu.memory_space<vmem>>, vector<1x1x8xi32>
    %5 = vector.shape_cast %4 : vector<1x1x8xi32> to vector<1x8xi32>
    %c0_i32 = arith.constant 0 : i32
    %6 = vector.broadcast %c0_i32 : i32 to vector<1x8xi32>
    %7 = arith.cmpi ne, %5, %6 : vector<1x8xi32>
    %8 = vector.shape_cast %7 : vector<1x8xi1> to vector<1x8xi1>
    %9 = vector.broadcast %8 : vector<1x8xi1> to vector<8x8xi1>
    %c0_8 = arith.constant 0 : index
    %c0_9 = arith.constant 0 : index
    %10 = vector.load %arg4[%c0_8, %c0_9] : memref<32x32xbf16, #tpu.memory_space<vmem>>, vector<32x32xbf16>
    %c0_10 = arith.constant 0 : index
    %c0_11 = arith.constant 0 : index
    %11 = vector.load %arg5[%c0_10, %c0_11] : memref<32x32xbf16, #tpu.memory_space<vmem>>, vector<32x32xbf16>
    %c0_12 = arith.constant 0 : index
    %c0_13 = arith.constant 0 : index
    %12 = vector.load %arg6[%c0_12, %c0_13] : memref<32x32xbf16, #tpu.memory_space<vmem>>, vector<32x32xbf16>
    %c0_14 = arith.constant 0 : index
    %c0_15 = arith.constant 0 : index
    %13 = vector.load %arg7[%c0_14, %c0_15] : memref<32x32xbf16, #tpu.memory_space<vmem>>, vector<32x32xbf16>
    %c0_16 = arith.constant 0 : index
    %c0_17 = arith.constant 0 : index
    %14 = vector.load %arg8[%c0_16, %c0_17] : memref<1x32xf32, #tpu.memory_space<vmem>>, vector<1x32xf32>
    %15 = arith.truncf %1 : vector<8x32xf32> to vector<8x32xbf16>
    %16 = arith.truncf %3 : vector<8x32xf32> to vector<8x32xbf16>
    %cst = arith.constant dense<0.000000e+00> : vector<8x32xf32>
    %17 = tpu.matmul %15, %10, %cst {dimension_numbers = #tpu.dot_dimension_numbers<[1], [0], [0], [1], [0, 0, 1, 1], [], []>} : vector<8x32xbf16>, vector<32x32xbf16>, vector<8x32xf32> -> vector<8x32xf32>
    %cst_18 = arith.constant dense<0.000000e+00> : vector<8x32xf32>
    %18 = tpu.matmul %16, %11, %cst_18 {dimension_numbers = #tpu.dot_dimension_numbers<[1], [0], [0], [1], [0, 0, 1, 1], [], []>} : vector<8x32xbf16>, vector<32x32xbf16>, vector<8x32xf32> -> vector<8x32xf32>
    %cst_19 = arith.constant dense<0.000000e+00> : vector<8x32xf32>
    %19 = tpu.matmul %16, %12, %cst_19 {dimension_numbers = #tpu.dot_dimension_numbers<[1], [0], [0], [1], [0, 0, 1, 1], [], []>} : vector<8x32xbf16>, vector<32x32xbf16>, vector<8x32xf32> -> vector<8x32xf32>
    %20 = vector.shape_cast %14 : vector<1x32xf32> to vector<1x32xf32>
    %21 = vector.broadcast %20 : vector<1x32xf32> to vector<8x32xf32>
    %22 = vector.extract_strided_slice %17 {offsets = [0, 0], sizes = [8, 8], strides = [1, 1]} : vector<8x32xf32> to vector<8x8xf32>
    %23 = arith.truncf %22 : vector<8x8xf32> to vector<8x8xbf16>
    %24 = vector.extract_strided_slice %18 {offsets = [0, 0], sizes = [8, 8], strides = [1, 1]} : vector<8x32xf32> to vector<8x8xf32>
    %25 = arith.truncf %24 : vector<8x8xf32> to vector<8x8xbf16>
    %26 = vector.extract_strided_slice %19 {offsets = [0, 0], sizes = [8, 8], strides = [1, 1]} : vector<8x32xf32> to vector<8x8xf32>
    %27 = arith.truncf %26 : vector<8x8xf32> to vector<8x8xbf16>
    %cst_20 = arith.constant dense<0.000000e+00> : vector<8x8xf32>
    %28 = tpu.matmul %23, %25, %cst_20 {dimension_numbers = #tpu.dot_dimension_numbers<[1], [1], [0], [0], [0, 0, 1, 0], [], []>} : vector<8x8xbf16>, vector<8x8xbf16>, vector<8x8xf32> -> vector<8x8xf32>
    %cst_21 = arith.constant -9.99999995E+11 : f32
    %29 = vector.broadcast %cst_21 : f32 to vector<8x8xf32>
    %30 = arith.select %9, %28, %29 : vector<8x8xi1>, vector<8x8xf32>
    %cst_22 = arith.constant 0.176776692 : f32
    %31 = vector.broadcast %cst_22 : f32 to vector<8x8xf32>
    %32 = arith.mulf %30, %31 : vector<8x8xf32>
    %cst_23 = arith.constant dense<0xFF800000> : vector<8xf32>
    %33 = vector.multi_reduction <maximumf>, %32, %cst_23 [1] : vector<8x8xf32> to vector<8xf32>
    %34 = vector.shape_cast %33 : vector<8xf32> to vector<8x1xf32>
    %35 = vector.broadcast %34 : vector<8x1xf32> to vector<8x8xf32>
    %36 = arith.subf %32, %35 : vector<8x8xf32>
    %37 = math.exp %36 : vector<8x8xf32>
    %cst_24 = arith.constant dense<0.000000e+00> : vector<8xf32>
    %38 = vector.multi_reduction <add>, %37, %cst_24 [1] : vector<8x8xf32> to vector<8xf32>
    %39 = vector.shape_cast %38 : vector<8xf32> to vector<8x1xf32>
    %40 = vector.broadcast %39 : vector<8x1xf32> to vector<8x8xf32>
    %41 = arith.divf %37, %40 : vector<8x8xf32>
    %42 = arith.truncf %41 : vector<8x8xf32> to vector<8x8xbf16>
    %cst_25 = arith.constant dense<0.000000e+00> : vector<8x8xf32>
    %43 = tpu.matmul %42, %27, %cst_25 {dimension_numbers = #tpu.dot_dimension_numbers<[1], [0], [0], [1], [0, 0, 1, 1], [], []>} : vector<8x8xbf16>, vector<8x8xbf16>, vector<8x8xf32> -> vector<8x8xf32>
    %44 = arith.truncf %43 : vector<8x8xf32> to vector<8x8xbf16>
    %45 = vector.extract_strided_slice %13 {offsets = [0, 0], sizes = [8, 32], strides = [1, 1]} : vector<32x32xbf16> to vector<8x32xbf16>
    %cst_26 = arith.constant dense<0.000000e+00> : vector<8x32xf32>
    %46 = tpu.matmul %44, %45, %cst_26 {dimension_numbers = #tpu.dot_dimension_numbers<[1], [0], [0], [1], [0, 0, 1, 1], [], []>} : vector<8x8xbf16>, vector<8x32xbf16>, vector<8x32xf32> -> vector<8x32xf32>
    %47 = arith.addf %21, %46 : vector<8x32xf32>
    %48 = vector.extract_strided_slice %17 {offsets = [0, 8], sizes = [8, 8], strides = [1, 1]} : vector<8x32xf32> to vector<8x8xf32>
    %49 = arith.truncf %48 : vector<8x8xf32> to vector<8x8xbf16>
    %50 = vector.extract_strided_slice %18 {offsets = [0, 8], sizes = [8, 8], strides = [1, 1]} : vector<8x32xf32> to vector<8x8xf32>
    %51 = arith.truncf %50 : vector<8x8xf32> to vector<8x8xbf16>
    %52 = vector.extract_strided_slice %19 {offsets = [0, 8], sizes = [8, 8], strides = [1, 1]} : vector<8x32xf32> to vector<8x8xf32>
    %53 = arith.truncf %52 : vector<8x8xf32> to vector<8x8xbf16>
    %cst_27 = arith.constant dense<0.000000e+00> : vector<8x8xf32>
    %54 = tpu.matmul %49, %51, %cst_27 {dimension_numbers = #tpu.dot_dimension_numbers<[1], [1], [0], [0], [0, 0, 1, 0], [], []>} : vector<8x8xbf16>, vector<8x8xbf16>, vector<8x8xf32> -> vector<8x8xf32>
    %cst_28 = arith.constant -9.99999995E+11 : f32
    %55 = vector.broadcast %cst_28 : f32 to vector<8x8xf32>
    %56 = arith.select %9, %54, %55 : vector<8x8xi1>, vector<8x8xf32>
    %cst_29 = arith.constant 0.176776692 : f32
    %57 = vector.broadcast %cst_29 : f32 to vector<8x8xf32>
    %58 = arith.mulf %56, %57 : vector<8x8xf32>
    %cst_30 = arith.constant dense<0xFF800000> : vector<8xf32>
    %59 = vector.multi_reduction <maximumf>, %58, %cst_30 [1] : vector<8x8xf32> to vector<8xf32>
    %60 = vector.shape_cast %59 : vector<8xf32> to vector<8x1xf32>
    %61 = vector.broadcast %60 : vector<8x1xf32> to vector<8x8xf32>
    %62 = arith.subf %58, %61 : vector<8x8xf32>
    %63 = math.exp %62 : vector<8x8xf32>
    %cst_31 = arith.constant dense<0.000000e+00> : vector<8xf32>
    %64 = vector.multi_reduction <add>, %63, %cst_31 [1] : vector<8x8xf32> to vector<8xf32>
    %65 = vector.shape_cast %64 : vector<8xf32> to vector<8x1xf32>
    %66 = vector.broadcast %65 : vector<8x1xf32> to vector<8x8xf32>
    %67 = arith.divf %63, %66 : vector<8x8xf32>
    %68 = arith.truncf %67 : vector<8x8xf32> to vector<8x8xbf16>
    %cst_32 = arith.constant dense<0.000000e+00> : vector<8x8xf32>
    %69 = tpu.matmul %68, %53, %cst_32 {dimension_numbers = #tpu.dot_dimension_numbers<[1], [0], [0], [1], [0, 0, 1, 1], [], []>} : vector<8x8xbf16>, vector<8x8xbf16>, vector<8x8xf32> -> vector<8x8xf32>
    %70 = arith.truncf %69 : vector<8x8xf32> to vector<8x8xbf16>
    %71 = vector.extract_strided_slice %13 {offsets = [8, 0], sizes = [8, 32], strides = [1, 1]} : vector<32x32xbf16> to vector<8x32xbf16>
    %cst_33 = arith.constant dense<0.000000e+00> : vector<8x32xf32>
    %72 = tpu.matmul %70, %71, %cst_33 {dimension_numbers = #tpu.dot_dimension_numbers<[1], [0], [0], [1], [0, 0, 1, 1], [], []>} : vector<8x8xbf16>, vector<8x32xbf16>, vector<8x32xf32> -> vector<8x32xf32>
    %73 = arith.addf %47, %72 : vector<8x32xf32>
    %74 = vector.extract_strided_slice %17 {offsets = [0, 16], sizes = [8, 8], strides = [1, 1]} : vector<8x32xf32> to vector<8x8xf32>
    %75 = arith.truncf %74 : vector<8x8xf32> to vector<8x8xbf16>
    %76 = vector.extract_strided_slice %18 {offsets = [0, 16], sizes = [8, 8], strides = [1, 1]} : vector<8x32xf32> to vector<8x8xf32>
    %77 = arith.truncf %76 : vector<8x8xf32> to vector<8x8xbf16>
    %78 = vector.extract_strided_slice %19 {offsets = [0, 16], sizes = [8, 8], strides = [1, 1]} : vector<8x32xf32> to vector<8x8xf32>
    %79 = arith.truncf %78 : vector<8x8xf32> to vector<8x8xbf16>
    %cst_34 = arith.constant dense<0.000000e+00> : vector<8x8xf32>
    %80 = tpu.matmul %75, %77, %cst_34 {dimension_numbers = #tpu.dot_dimension_numbers<[1], [1], [0], [0], [0, 0, 1, 0], [], []>} : vector<8x8xbf16>, vector<8x8xbf16>, vector<8x8xf32> -> vector<8x8xf32>
    %cst_35 = arith.constant -9.99999995E+11 : f32
    %81 = vector.broadcast %cst_35 : f32 to vector<8x8xf32>
    %82 = arith.select %9, %80, %81 : vector<8x8xi1>, vector<8x8xf32>
    %cst_36 = arith.constant 0.176776692 : f32
    %83 = vector.broadcast %cst_36 : f32 to vector<8x8xf32>
    %84 = arith.mulf %82, %83 : vector<8x8xf32>
    %cst_37 = arith.constant dense<0xFF800000> : vector<8xf32>
    %85 = vector.multi_reduction <maximumf>, %84, %cst_37 [1] : vector<8x8xf32> to vector<8xf32>
    %86 = vector.shape_cast %85 : vector<8xf32> to vector<8x1xf32>
    %87 = vector.broadcast %86 : vector<8x1xf32> to vector<8x8xf32>
    %88 = arith.subf %84, %87 : vector<8x8xf32>
    %89 = math.exp %88 : vector<8x8xf32>
    %cst_38 = arith.constant dense<0.000000e+00> : vector<8xf32>
    %90 = vector.multi_reduction <add>, %89, %cst_38 [1] : vector<8x8xf32> to vector<8xf32>
    %91 = vector.shape_cast %90 : vector<8xf32> to vector<8x1xf32>
    %92 = vector.broadcast %91 : vector<8x1xf32> to vector<8x8xf32>
    %93 = arith.divf %89, %92 : vector<8x8xf32>
    %94 = arith.truncf %93 : vector<8x8xf32> to vector<8x8xbf16>
    %cst_39 = arith.constant dense<0.000000e+00> : vector<8x8xf32>
    %95 = tpu.matmul %94, %79, %cst_39 {dimension_numbers = #tpu.dot_dimension_numbers<[1], [0], [0], [1], [0, 0, 1, 1], [], []>} : vector<8x8xbf16>, vector<8x8xbf16>, vector<8x8xf32> -> vector<8x8xf32>
    %96 = arith.truncf %95 : vector<8x8xf32> to vector<8x8xbf16>
    %97 = vector.extract_strided_slice %13 {offsets = [16, 0], sizes = [8, 32], strides = [1, 1]} : vector<32x32xbf16> to vector<8x32xbf16>
    %cst_40 = arith.constant dense<0.000000e+00> : vector<8x32xf32>
    %98 = tpu.matmul %96, %97, %cst_40 {dimension_numbers = #tpu.dot_dimension_numbers<[1], [0], [0], [1], [0, 0, 1, 1], [], []>} : vector<8x8xbf16>, vector<8x32xbf16>, vector<8x32xf32> -> vector<8x32xf32>
    %99 = arith.addf %73, %98 : vector<8x32xf32>
    %100 = vector.extract_strided_slice %17 {offsets = [0, 24], sizes = [8, 8], strides = [1, 1]} : vector<8x32xf32> to vector<8x8xf32>
    %101 = arith.truncf %100 : vector<8x8xf32> to vector<8x8xbf16>
    %102 = vector.extract_strided_slice %18 {offsets = [0, 24], sizes = [8, 8], strides = [1, 1]} : vector<8x32xf32> to vector<8x8xf32>
    %103 = arith.truncf %102 : vector<8x8xf32> to vector<8x8xbf16>
    %104 = vector.extract_strided_slice %19 {offsets = [0, 24], sizes = [8, 8], strides = [1, 1]} : vector<8x32xf32> to vector<8x8xf32>
    %105 = arith.truncf %104 : vector<8x8xf32> to vector<8x8xbf16>
    %cst_41 = arith.constant dense<0.000000e+00> : vector<8x8xf32>
    %106 = tpu.matmul %101, %103, %cst_41 {dimension_numbers = #tpu.dot_dimension_numbers<[1], [1], [0], [0], [0, 0, 1, 0], [], []>} : vector<8x8xbf16>, vector<8x8xbf16>, vector<8x8xf32> -> vector<8x8xf32>
    %cst_42 = arith.constant -9.99999995E+11 : f32
    %107 = vector.broadcast %cst_42 : f32 to vector<8x8xf32>
    %108 = arith.select %9, %106, %107 : vector<8x8xi1>, vector<8x8xf32>
    %cst_43 = arith.constant 0.176776692 : f32
    %109 = vector.broadcast %cst_43 : f32 to vector<8x8xf32>
    %110 = arith.mulf %108, %109 : vector<8x8xf32>
    %cst_44 = arith.constant dense<0xFF800000> : vector<8xf32>
    %111 = vector.multi_reduction <maximumf>, %110, %cst_44 [1] : vector<8x8xf32> to vector<8xf32>
    %112 = vector.shape_cast %111 : vector<8xf32> to vector<8x1xf32>
    %113 = vector.broadcast %112 : vector<8x1xf32> to vector<8x8xf32>
    %114 = arith.subf %110, %113 : vector<8x8xf32>
    %115 = math.exp %114 : vector<8x8xf32>
    %cst_45 = arith.constant dense<0.000000e+00> : vector<8xf32>
    %116 = vector.multi_reduction <add>, %115, %cst_45 [1] : vector<8x8xf32> to vector<8xf32>
    %117 = vector.shape_cast %116 : vector<8xf32> to vector<8x1xf32>
    %118 = vector.broadcast %117 : vector<8x1xf32> to vector<8x8xf32>
    %119 = arith.divf %115, %118 : vector<8x8xf32>
    %120 = arith.truncf %119 : vector<8x8xf32> to vector<8x8xbf16>
    %cst_46 = arith.constant dense<0.000000e+00> : vector<8x8xf32>
    %121 = tpu.matmul %120, %105, %cst_46 {dimension_numbers = #tpu.dot_dimension_numbers<[1], [0], [0], [1], [0, 0, 1, 1], [], []>} : vector<8x8xbf16>, vector<8x8xbf16>, vector<8x8xf32> -> vector<8x8xf32>
    %122 = arith.truncf %121 : vector<8x8xf32> to vector<8x8xbf16>
    %123 = vector.extract_strided_slice %13 {offsets = [24, 0], sizes = [8, 32], strides = [1, 1]} : vector<32x32xbf16> to vector<8x32xbf16>
    %cst_47 = arith.constant dense<0.000000e+00> : vector<8x32xf32>
    %124 = tpu.matmul %122, %123, %cst_47 {dimension_numbers = #tpu.dot_dimension_numbers<[1], [0], [0], [1], [0, 0, 1, 1], [], []>} : vector<8x8xbf16>, vector<8x32xbf16>, vector<8x32xf32> -> vector<8x32xf32>
    %125 = arith.addf %99, %124 : vector<8x32xf32>
    %126 = arith.addf %125, %1 : vector<8x32xf32>
    %c0_48 = arith.constant 0 : index
    %c0_49 = arith.constant 0 : index
    %127 = vector.load %arg9[%c0_48, %c0_49] : memref<1x32xf32, #tpu.memory_space<vmem>>, vector<1x32xf32>
    %c0_50 = arith.constant 0 : index
    %c0_51 = arith.constant 0 : index
    %128 = vector.load %arg10[%c0_50, %c0_51] : memref<1x32xf32, #tpu.memory_space<vmem>>, vector<1x32xf32>
    %cst_52 = arith.constant dense<0.000000e+00> : vector<8xf32>
    %129 = vector.multi_reduction <add>, %126, %cst_52 [1] : vector<8x32xf32> to vector<8xf32>
    %130 = vector.shape_cast %129 : vector<8xf32> to vector<8x1xf32>
    %cst_53 = arith.constant 3.200000e+01 : f32
    %131 = vector.broadcast %cst_53 : f32 to vector<8x1xf32>
    %132 = arith.divf %130, %131 : vector<8x1xf32>
    %133 = vector.broadcast %132 : vector<8x1xf32> to vector<8x32xf32>
    %134 = arith.subf %126, %133 : vector<8x32xf32>
    %135 = arith.mulf %134, %134 : vector<8x32xf32>
    %cst_54 = arith.constant dense<0.000000e+00> : vector<8xf32>
    %136 = vector.multi_reduction <add>, %135, %cst_54 [1] : vector<8x32xf32> to vector<8xf32>
    %137 = vector.shape_cast %136 : vector<8xf32> to vector<8x1xf32>
    %cst_55 = arith.constant 3.200000e+01 : f32
    %138 = vector.broadcast %cst_55 : f32 to vector<8x1xf32>
    %139 = arith.divf %137, %138 : vector<8x1xf32>
    %140 = vector.broadcast %132 : vector<8x1xf32> to vector<8x32xf32>
    %141 = arith.subf %126, %140 : vector<8x32xf32>
    %cst_56 = arith.constant 9.99999974E-6 : f32
    %142 = vector.broadcast %cst_56 : f32 to vector<8x1xf32>
    %143 = arith.addf %139, %142 : vector<8x1xf32>
    %144 = math.rsqrt %143 : vector<8x1xf32>
    %145 = vector.broadcast %144 : vector<8x1xf32> to vector<8x32xf32>
    %146 = arith.mulf %141, %145 : vector<8x32xf32>
    %147 = vector.broadcast %127 : vector<1x32xf32> to vector<8x32xf32>
    %148 = arith.mulf %146, %147 : vector<8x32xf32>
    %149 = vector.broadcast %128 : vector<1x32xf32> to vector<8x32xf32>
    %150 = arith.addf %148, %149 : vector<8x32xf32>
    %c0_57 = arith.constant 0 : index
    %c0_58 = arith.constant 0 : index
    %151 = vector.load %arg11[%c0_57, %c0_58] : memref<32x128xbf16, #tpu.memory_space<vmem>>, vector<32x128xbf16>
    %c0_59 = arith.constant 0 : index
    %c0_60 = arith.constant 0 : index
    %152 = vector.load %arg12[%c0_59, %c0_60] : memref<1x128xf32, #tpu.memory_space<vmem>>, vector<1x128xf32>
    %c0_61 = arith.constant 0 : index
    %c0_62 = arith.constant 0 : index
    %153 = vector.load %arg13[%c0_61, %c0_62] : memref<128x32xbf16, #tpu.memory_space<vmem>>, vector<128x32xbf16>
    %c0_63 = arith.constant 0 : index
    %c0_64 = arith.constant 0 : index
    %154 = vector.load %arg14[%c0_63, %c0_64] : memref<1x32xf32, #tpu.memory_space<vmem>>, vector<1x32xf32>
    %155 = arith.truncf %150 : vector<8x32xf32> to vector<8x32xbf16>
    %cst_65 = arith.constant dense<0.000000e+00> : vector<8x128xf32>
    %156 = tpu.matmul %155, %151, %cst_65 {dimension_numbers = #tpu.dot_dimension_numbers<[1], [0], [0], [1], [0, 0, 1, 1], [], []>} : vector<8x32xbf16>, vector<32x128xbf16>, vector<8x128xf32> -> vector<8x128xf32>
    %157 = vector.broadcast %152 : vector<1x128xf32> to vector<8x128xf32>
    %158 = arith.addf %156, %157 : vector<8x128xf32>
    %cst_66 = arith.constant 0.000000e+00 : f32
    %159 = vector.broadcast %cst_66 : f32 to vector<8x128xf32>
    %160 = arith.maximumf %158, %159 : vector<8x128xf32>
    %161 = arith.truncf %160 : vector<8x128xf32> to vector<8x128xbf16>
    %cst_67 = arith.constant dense<0.000000e+00> : vector<8x32xf32>
    %162 = tpu.matmul %161, %153, %cst_67 {dimension_numbers = #tpu.dot_dimension_numbers<[1], [0], [0], [1], [0, 0, 1, 1], [], []>} : vector<8x128xbf16>, vector<128x32xbf16>, vector<8x32xf32> -> vector<8x32xf32>
    %163 = vector.broadcast %154 : vector<1x32xf32> to vector<8x32xf32>
    %164 = arith.addf %162, %163 : vector<8x32xf32>
    %165 = arith.addf %164, %150 : vector<8x32xf32>
    %c0_68 = arith.constant 0 : index
    %c0_69 = arith.constant 0 : index
    %166 = vector.load %arg15[%c0_68, %c0_69] : memref<1x32xf32, #tpu.memory_space<vmem>>, vector<1x32xf32>
    %c0_70 = arith.constant 0 : index
    %c0_71 = arith.constant 0 : index
    %167 = vector.load %arg16[%c0_70, %c0_71] : memref<1x32xf32, #tpu.memory_space<vmem>>, vector<1x32xf32>
    %cst_72 = arith.constant dense<0.000000e+00> : vector<8xf32>
    %168 = vector.multi_reduction <add>, %165, %cst_72 [1] : vector<8x32xf32> to vector<8xf32>
    %169 = vector.shape_cast %168 : vector<8xf32> to vector<8x1xf32>
    %cst_73 = arith.constant 3.200000e+01 : f32
    %170 = vector.broadcast %cst_73 : f32 to vector<8x1xf32>
    %171 = arith.divf %169, %170 : vector<8x1xf32>
    %172 = vector.broadcast %171 : vector<8x1xf32> to vector<8x32xf32>
    %173 = arith.subf %165, %172 : vector<8x32xf32>
    %174 = arith.mulf %173, %173 : vector<8x32xf32>
    %cst_74 = arith.constant dense<0.000000e+00> : vector<8xf32>
    %175 = vector.multi_reduction <add>, %174, %cst_74 [1] : vector<8x32xf32> to vector<8xf32>
    %176 = vector.shape_cast %175 : vector<8xf32> to vector<8x1xf32>
    %cst_75 = arith.constant 3.200000e+01 : f32
    %177 = vector.broadcast %cst_75 : f32 to vector<8x1xf32>
    %178 = arith.divf %176, %177 : vector<8x1xf32>
    %179 = vector.broadcast %171 : vector<8x1xf32> to vector<8x32xf32>
    %180 = arith.subf %165, %179 : vector<8x32xf32>
    %cst_76 = arith.constant 9.99999974E-6 : f32
    %181 = vector.broadcast %cst_76 : f32 to vector<8x1xf32>
    %182 = arith.addf %178, %181 : vector<8x1xf32>
    %183 = math.rsqrt %182 : vector<8x1xf32>
    %184 = vector.broadcast %183 : vector<8x1xf32> to vector<8x32xf32>
    %185 = arith.mulf %180, %184 : vector<8x32xf32>
    %186 = vector.broadcast %166 : vector<1x32xf32> to vector<8x32xf32>
    %187 = arith.mulf %185, %186 : vector<8x32xf32>
    %188 = vector.broadcast %167 : vector<1x32xf32> to vector<8x32xf32>
    %189 = arith.addf %187, %188 : vector<8x32xf32>
    %c0_77 = arith.constant 0 : index
    %c0_78 = arith.constant 0 : index
    %c0_79 = arith.constant 0 : index
    %190 = vector.load %arg17[%c0_77, %c0_78, %c0_79] : memref<1x8x32xf32, #tpu.memory_space<vmem>>, vector<1x8x32xf32>
    %191 = vector.shape_cast %190 : vector<1x8x32xf32> to vector<8x32xf32>
    %192 = vector.shape_cast %189 : vector<8x32xf32> to vector<1x8x32xf32>
    tpu.vector_store %arg17[%c0_77, %c0_78, %c0_79], %192 {strides = array<i32>} : memref<1x8x32xf32, #tpu.memory_space<vmem>>, vector<1x8x32xf32>,
    return
  }
  func.func @transform_0(%arg0: i32) -> (i32, i32, i32) {
    %c0_i32 = arith.constant 0 : i32
    %c0_i32_0 = arith.constant 0 : i32
    %c0_i32_1 = arith.constant 0 : i32
    return %arg0, %c0_i32, %c0_i32_0 : i32, i32, i32
  }
  func.func @transform_1(%arg0: i32) -> (i32, i32, i32) {
    %c0_i32 = arith.constant 0 : i32
    %c0_i32_0 = arith.constant 0 : i32
    %c0_i32_1 = arith.constant 0 : i32
    return %arg0, %c0_i32, %c0_i32_0 : i32, i32, i32
  }
  func.func @transform_2(%arg0: i32) -> (i32, i32, i32) {
    %c0_i32 = arith.constant 0 : i32
    %c0_i32_0 = arith.constant 0 : i32
    %c0_i32_1 = arith.constant 0 : i32
    return %arg0, %c0_i32, %c0_i32_0 : i32, i32, i32
  }
  func.func @transform_3(%arg0: i32) -> (i32, i32) {
    %c0_i32 = arith.constant 0 : i32
    %c0_i32_0 = arith.constant 0 : i32
    %c0_i32_1 = arith.constant 0 : i32
    return %c0_i32, %c0_i32_0 : i32, i32
  }
  func.func @transform_4(%arg0: i32) -> (i32, i32) {
    %c0_i32 = arith.constant 0 : i32
    %c0_i32_0 = arith.constant 0 : i32
    %c0_i32_1 = arith.constant 0 : i32
    return %c0_i32, %c0_i32_0 : i32, i32
  }
  func.func @transform_5(%arg0: i32) -> (i32, i32) {
    %c0_i32 = arith.constant 0 : i32
    %c0_i32_0 = arith.constant 0 : i32
    %c0_i32_1 = arith.constant 0 : i32
    return %c0_i32, %c0_i32_0 : i32, i32
  }
  func.func @transform_6(%arg0: i32) -> (i32, i32) {
    %c0_i32 = arith.constant 0 : i32
    %c0_i32_0 = arith.constant 0 : i32
    %c0_i32_1 = arith.constant 0 : i32
    return %c0_i32, %c0_i32_0 : i32, i32
  }
  func.func @transform_7(%arg0: i32) -> (i32, i32) {
    %c0_i32 = arith.constant 0 : i32
    %c0_i32_0 = arith.constant 0 : i32
    %c0_i32_1 = arith.constant 0 : i32
    return %c0_i32, %c0_i32_0 : i32, i32
  }
  func.func @transform_8(%arg0: i32) -> (i32, i32) {
    %c0_i32 = arith.constant 0 : i32
    %c0_i32_0 = arith.constant 0 : i32
    %c0_i32_1 = arith.constant 0 : i32
    return %c0_i32, %c0_i32_0 : i32, i32
  }
  func.func @transform_9(%arg0: i32) -> (i32, i32) {
    %c0_i32 = arith.constant 0 : i32
    %c0_i32_0 = arith.constant 0 : i32
    %c0_i32_1 = arith.constant 0 : i32
    return %c0_i32, %c0_i32_0 : i32, i32
  }
  func.func @transform_10(%arg0: i32) -> (i32, i32) {
    %c0_i32 = arith.constant 0 : i32
    %c0_i32_0 = arith.constant 0 : i32
    %c0_i32_1 = arith.constant 0 : i32
    return %c0_i32, %c0_i32_0 : i32, i32
  }
  func.func @transform_11(%arg0: i32) -> (i32, i32) {
    %c0_i32 = arith.constant 0 : i32
    %c0_i32_0 = arith.constant 0 : i32
    %c0_i32_1 = arith.constant 0 : i32
    return %c0_i32, %c0_i32_0 : i32, i32
  }
  func.func @transform_12(%arg0: i32) -> (i32, i32) {
    %c0_i32 = arith.constant 0 : i32
    %c0_i32_0 = arith.constant 0 : i32
    %c0_i32_1 = arith.constant 0 : i32
    return %c0_i32, %c0_i32_0 : i32, i32
  }
  func.func @transform_13(%arg0: i32) -> (i32, i32) {
    %c0_i32 = arith.constant 0 : i32
    %c0_i32_0 = arith.constant 0 : i32
    %c0_i32_1 = arith.constant 0 : i32
    return %c0_i32, %c0_i32_0 : i32, i32
  }
  func.func @transform_14(%arg0: i32) -> (i32, i32) {
    %c0_i32 = arith.constant 0 : i32
    %c0_i32_0 = arith.constant 0 : i32
    %c0_i32_1 = arith.constant 0 : i32
    return %c0_i32, %c0_i32_0 : i32, i32
  }
  func.func @transform_15(%arg0: i32) -> (i32, i32) {
    %c0_i32 = arith.constant 0 : i32
    %c0_i32_0 = arith.constant 0 : i32
    %c0_i32_1 = arith.constant 0 : i32
    return %c0_i32, %c0_i32_0 : i32, i32
  }
  func.func @transform_16(%arg0: i32) -> (i32, i32, i32) {
    %c0_i32 = arith.constant 0 : i32
    %c0_i32_0 = arith.constant 0 : i32
    %c0_i32_1 = arith.constant 0 : i32
    return %arg0, %c0_i32, %c0_i32_0 : i32, i32, i32
  }
}

module attributes {stable_mosaic.version = 11 : i64} {
  func.func @_transformer_block_kernel(%arg0: i32, %arg1: memref<1x1x8xi32, #tpu.memory_space<vmem>>, %arg2: memref<1x8x32xf32, #tpu.memory_space<vmem>>, %arg3: memref<1x8x32xf32, #tpu.memory_space<vmem>>, %arg4: memref<32x32xbf16, #tpu.memory_space<vmem>>, %arg5: memref<32x32xbf16, #tpu.memory_space<vmem>>, %arg6: memref<32x32xbf16, #tpu.memory_space<vmem>>, %arg7: memref<32x32xbf16, #tpu.memory_space<vmem>>, %arg8: memref<1x32xf32, #tpu.memory_space<vmem>>, %arg9: memref<1x32xf32, #tpu.memory_space<vmem>>, %arg10: memref<1x32xf32, #tpu.memory_space<vmem>>, %arg11: memref<32x128xbf16, #tpu.memory_space<vmem>>, %arg12: memref<1x128xf32, #tpu.memory_space<vmem>>, %arg13: memref<128x32xbf16, #tpu.memory_space<vmem>>, %arg14: memref<1x32xf32, #tpu.memory_space<vmem>>, %arg15: memref<1x32xf32, #tpu.memory_space<vmem>>, %arg16: memref<1x32xf32, #tpu.memory_space<vmem>>, %arg17: memref<1x8x32xf32, #tpu.memory_space<vmem>>) attributes {dimension_semantics = [#tpu.dimension_semantics<parallel>], iteration_bounds = array<i64: 2>, scalar_prefetch = 0 : i64, scratch_operands = 0 : i64, tpu.core_type = #tpu.core_type<tc>, window_params = [{transform_indices = @transform_0, window_bounds = array<i64: 1, 1, 8>}, {transform_indices = @transform_1, window_bounds = array<i64: 1, 8, 32>}, {transform_indices = @transform_2, window_bounds = array<i64: 1, 8, 32>}, {pipeline_mode = #tpu.pipeline_mode<synchronous>, transform_indices = @transform_3, window_bounds = array<i64: 32, 32>}, {pipeline_mode = #tpu.pipeline_mode<synchronous>, transform_indices = @transform_4, window_bounds = array<i64: 32, 32>}, {pipeline_mode = #tpu.pipeline_mode<synchronous>, transform_indices = @transform_5, window_bounds = array<i64: 32, 32>}, {pipeline_mode = #tpu.pipeline_mode<synchronous>, transform_indices = @transform_6, window_bounds = array<i64: 32, 32>}, {pipeline_mode = #tpu.pipeline_mode<synchronous>, transform_indices = @transform_7, window_bounds = array<i64: 1, 32>}, {pipeline_mode = #tpu.pipeline_mode<synchronous>, transform_indices = @transform_8, window_bounds = array<i64: 1, 32>}, {pipeline_mode = #tpu.pipeline_mode<synchronous>, transform_indices = @transform_9, window_bounds = array<i64: 1, 32>}, {pipeline_mode = #tpu.pipeline_mode<synchronous>, transform_indices = @transform_10, window_bounds = array<i64: 32, 128>}, {pipeline_mode = #tpu.pipeline_mode<synchronous>, transform_indices = @transform_11, window_bounds = array<i64: 1, 128>}, {pipeline_mode = #tpu.pipeline_mode<synchronous>, transform_indices = @transform_12, window_bounds = array<i64: 128, 32>}, {pipeline_mode = #tpu.pipeline_mode<synchronous>, transform_indices = @transform_13, window_bounds = array<i64: 1, 32>}, {pipeline_mode = #tpu.pipeline_mode<synchronous>, transform_indices = @transform_14, window_bounds = array<i64: 1, 32>}, {pipeline_mode = #tpu.pipeline_mode<synchronous>, transform_indices = @transform_15, window_bounds = array<i64: 1, 32>}, {transform_indices = @transform_16, window_bounds = array<i64: 1, 8, 32>}]} {
    %c0 = arith.constant 0 : index
    %c0_0 = arith.constant 0 : index
    %c0_1 = arith.constant 0 : index
    %0 = vector.load %arg2[%c0, %c0_0, %c0_1] : memref<1x8x32xf32, #tpu.memory_space<vmem>>, vector<1x8x32xf32>
    %1 = vector.shape_cast %0 : vector<1x8x32xf32> to vector<8x32xf32>
    %c0_2 = arith.constant 0 : index
    %c0_3 = arith.constant 0 : index
    %c0_4 = arith.constant 0 : index
    %2 = vector.load %arg3[%c0_2, %c0_3, %c0_4] : memref<1x8x32xf32, #tpu.memory_space<vmem>>, vector<1x8x32xf32>
    %3 = vector.shape_cast %2 : vector<1x8x32xf32> to vector<8x32xf32>
    %c0_5 = arith.constant 0 : index
    %c0_6 = arith.constant 0 : index
    %c0_7 = arith.constant 0 : index
    %4 = vector.load %arg1[%c0_5, %c0_6, %c0_7] : memref<1x1x8xi32, #tpu.memory_space<vmem>>, vector<1x1x8xi32>
    %5 = vector.shape_cast %4 : vector<1x1x8xi32> to vector<1x8xi32>
    %c0_i32 = arith.constant 0 : i32
    %6 = vector.broadcast %c0_i32 : i32 to vector<1x8xi32>
    %7 = arith.cmpi ne, %5, %6 : vector<1x8xi32>
    %8 = vector.shape_cast %7 : vector<1x8xi1> to vector<1x8xi1>
    %9 = vector.broadcast %8 : vector<1x8xi1> to vector<8x8xi1>
    %c0_8 = arith.constant 0 : index
    %c0_9 = arith.constant 0 : index
    %10 = vector.load %arg4[%c0_8, %c0_9] : memref<32x32xbf16, #tpu.memory_space<vmem>>, vector<32x32xbf16>
    %c0_10 = arith.constant 0 : index
    %c0_11 = arith.constant 0 : index
    %11 = vector.load %arg5[%c0_10, %c0_11] : memref<32x32xbf16, #tpu.memory_space<vmem>>, vector<32x32xbf16>
    %c0_12 = arith.constant 0 : index
    %c0_13 = arith.constant 0 : index
    %12 = vector.load %arg6[%c0_12, %c0_13] : memref<32x32xbf16, #tpu.memory_space<vmem>>, vector<32x32xbf16>
    %c0_14 = arith.constant 0 : index
    %c0_15 = arith.constant 0 : index
    %13 = vector.load %arg7[%c0_14, %c0_15] : memref<32x32xbf16, #tpu.memory_space<vmem>>, vector<32x32xbf16>
    %c0_16 = arith.constant 0 : index
    %c0_17 = arith.constant 0 : index
    %14 = vector.load %arg8[%c0_16, %c0_17] : memref<1x32xf32, #tpu.memory_space<vmem>>, vector<1x32xf32>
    %15 = arith.truncf %1 : vector<8x32xf32> to vector<8x32xbf16>
    %16 = arith.truncf %3 : vector<8x32xf32> to vector<8x32xbf16>
    %cst = arith.constant dense<0.000000e+00> : vector<8x32xf32>
    %17 = tpu.matmul %15, %10, %cst {dimension_numbers = #tpu.dot_dimension_numbers<[1], [0], [0], [1], [0, 0, 1, 1], [], []>} : vector<8x32xbf16>, vector<32x32xbf16>, vector<8x32xf32> -> vector<8x32xf32>
    %cst_18 = arith.constant dense<0.000000e+00> : vector<8x32xf32>
    %18 = tpu.matmul %16, %11, %cst_18 {dimension_numbers = #tpu.dot_dimension_numbers<[1], [0], [0], [1], [0, 0, 1, 1], [], []>} : vector<8x32xbf16>, vector<32x32xbf16>, vector<8x32xf32> -> vector<8x32xf32>
    %cst_19 = arith.constant dense<0.000000e+00> : vector<8x32xf32>
    %19 = tpu.matmul %16, %12, %cst_19 {dimension_numbers = #tpu.dot_dimension_numbers<[1], [0], [0], [1], [0, 0, 1, 1], [], []>} : vector<8x32xbf16>, vector<32x32xbf16>, vector<8x32xf32> -> vector<8x32xf32>
    %20 = vector.shape_cast %14 : vector<1x32xf32> to vector<1x32xf32>
    %21 = vector.broadcast %20 : vector<1x32xf32> to vector<8x32xf32>
    %22 = vector.extract_strided_slice %17 {offsets = [0, 0], sizes = [8, 8], strides = [1, 1]} : vector<8x32xf32> to vector<8x8xf32>
    %23 = arith.truncf %22 : vector<8x8xf32> to vector<8x8xbf16>
    %24 = vector.extract_strided_slice %18 {offsets = [0, 0], sizes = [8, 8], strides = [1, 1]} : vector<8x32xf32> to vector<8x8xf32>
    %25 = arith.truncf %24 : vector<8x8xf32> to vector<8x8xbf16>
    %26 = vector.extract_strided_slice %19 {offsets = [0, 0], sizes = [8, 8], strides = [1, 1]} : vector<8x32xf32> to vector<8x8xf32>
    %27 = arith.truncf %26 : vector<8x8xf32> to vector<8x8xbf16>
    %cst_20 = arith.constant dense<0.000000e+00> : vector<8x8xf32>
    %28 = tpu.matmul %23, %25, %cst_20 {dimension_numbers = #tpu.dot_dimension_numbers<[1], [1], [0], [0], [0, 0, 1, 0], [], []>} : vector<8x8xbf16>, vector<8x8xbf16>, vector<8x8xf32> -> vector<8x8xf32>
    %cst_21 = arith.constant -9.99999995E+11 : f32
    %29 = vector.broadcast %cst_21 : f32 to vector<8x8xf32>
    %30 = arith.select %9, %28, %29 : vector<8x8xi1>, vector<8x8xf32>
    %cst_22 = arith.constant 0.176776692 : f32
    %31 = vector.broadcast %cst_22 : f32 to vector<8x8xf32>
    %32 = arith.mulf %30, %31 : vector<8x8xf32>
    %cst_23 = arith.constant dense<0xFF800000> : vector<8xf32>
    %33 = vector.multi_reduction <maximumf>, %32, %cst_23 [1] : vector<8x8xf32> to vector<8xf32>
    %34 = vector.shape_cast %33 : vector<8xf32> to vector<8x1xf32>
    %35 = vector.broadcast %34 : vector<8x1xf32> to vector<8x8xf32>
    %36 = arith.subf %32, %35 : vector<8x8xf32>
    %37 = math.exp %36 : vector<8x8xf32>
    %cst_24 = arith.constant dense<0.000000e+00> : vector<8xf32>
    %38 = vector.multi_reduction <add>, %37, %cst_24 [1] : vector<8x8xf32> to vector<8xf32>
    %39 = vector.shape_cast %38 : vector<8xf32> to vector<8x1xf32>
    %40 = vector.broadcast %39 : vector<8x1xf32> to vector<8x8xf32>
    %41 = arith.divf %37, %40 : vector<8x8xf32>
    %42 = arith.truncf %41 : vector<8x8xf32> to vector<8x8xbf16>
    %cst_25 = arith.constant dense<0.000000e+00> : vector<8x8xf32>
    %43 = tpu.matmul %42, %27, %cst_25 {dimension_numbers = #tpu.dot_dimension_numbers<[1], [0], [0], [1], [0, 0, 1, 1], [], []>} : vector<8x8xbf16>, vector<8x8xbf16>, vector<8x8xf32> -> vector<8x8xf32>
    %44 = arith.truncf %43 : vector<8x8xf32> to vector<8x8xbf16>
    %45 = vector.extract_strided_slice %13 {offsets = [0, 0], sizes = [8, 32], strides = [1, 1]} : vector<32x32xbf16> to vector<8x32xbf16>
    %cst_26 = arith.constant dense<0.000000e+00> : vector<8x32xf32>
    %46 = tpu.matmul %44, %45, %cst_26 {dimension_numbers = #tpu.dot_dimension_numbers<[1], [0], [0], [1], [0, 0, 1, 1], [], []>} : vector<8x8xbf16>, vector<8x32xbf16>, vector<8x32xf32> -> vector<8x32xf32>
    %47 = arith.addf %21, %46 : vector<8x32xf32>
    %48 = vector.extract_strided_slice %17 {offsets = [0, 8], sizes = [8, 8], strides = [1, 1]} : vector<8x32xf32> to vector<8x8xf32>
    %49 = arith.truncf %48 : vector<8x8xf32> to vector<8x8xbf16>
    %50 = vector.extract_strided_slice %18 {offsets = [0, 8], sizes = [8, 8], strides = [1, 1]} : vector<8x32xf32> to vector<8x8xf32>
    %51 = arith.truncf %50 : vector<8x8xf32> to vector<8x8xbf16>
    %52 = vector.extract_strided_slice %19 {offsets = [0, 8], sizes = [8, 8], strides = [1, 1]} : vector<8x32xf32> to vector<8x8xf32>
    %53 = arith.truncf %52 : vector<8x8xf32> to vector<8x8xbf16>
    %cst_27 = arith.constant dense<0.000000e+00> : vector<8x8xf32>
    %54 = tpu.matmul %49, %51, %cst_27 {dimension_numbers = #tpu.dot_dimension_numbers<[1], [1], [0], [0], [0, 0, 1, 0], [], []>} : vector<8x8xbf16>, vector<8x8xbf16>, vector<8x8xf32> -> vector<8x8xf32>
    %cst_28 = arith.constant -9.99999995E+11 : f32
    %55 = vector.broadcast %cst_28 : f32 to vector<8x8xf32>
    %56 = arith.select %9, %54, %55 : vector<8x8xi1>, vector<8x8xf32>
    %cst_29 = arith.constant 0.176776692 : f32
    %57 = vector.broadcast %cst_29 : f32 to vector<8x8xf32>
    %58 = arith.mulf %56, %57 : vector<8x8xf32>
    %cst_30 = arith.constant dense<0xFF800000> : vector<8xf32>
    %59 = vector.multi_reduction <maximumf>, %58, %cst_30 [1] : vector<8x8xf32> to vector<8xf32>
    %60 = vector.shape_cast %59 : vector<8xf32> to vector<8x1xf32>
    %61 = vector.broadcast %60 : vector<8x1xf32> to vector<8x8xf32>
    %62 = arith.subf %58, %61 : vector<8x8xf32>
    %63 = math.exp %62 : vector<8x8xf32>
    %cst_31 = arith.constant dense<0.000000e+00> : vector<8xf32>
    %64 = vector.multi_reduction <add>, %63, %cst_31 [1] : vector<8x8xf32> to vector<8xf32>
    %65 = vector.shape_cast %64 : vector<8xf32> to vector<8x1xf32>
    %66 = vector.broadcast %65 : vector<8x1xf32> to vector<8x8xf32>
    %67 = arith.divf %63, %66 : vector<8x8xf32>
    %68 = arith.truncf %67 : vector<8x8xf32> to vector<8x8xbf16>
    %cst_32 = arith.constant dense<0.000000e+00> : vector<8x8xf32>
    %69 = tpu.matmul %68, %53, %cst_32 {dimension_numbers = #tpu.dot_dimension_numbers<[1], [0], [0], [1], [0, 0, 1, 1], [], []>} : vector<8x8xbf16>, vector<8x8xbf16>, vector<8x8xf32> -> vector<8x8xf32>
    %70 = arith.truncf %69 : vector<8x8xf32> to vector<8x8xbf16>
    %71 = vector.extract_strided_slice %13 {offsets = [8, 0], sizes = [8, 32], strides = [1, 1]} : vector<32x32xbf16> to vector<8x32xbf16>
    %cst_33 = arith.constant dense<0.000000e+00> : vector<8x32xf32>
    %72 = tpu.matmul %70, %71, %cst_33 {dimension_numbers = #tpu.dot_dimension_numbers<[1], [0], [0], [1], [0, 0, 1, 1], [], []>} : vector<8x8xbf16>, vector<8x32xbf16>, vector<8x32xf32> -> vector<8x32xf32>
    %73 = arith.addf %47, %72 : vector<8x32xf32>
    %74 = vector.extract_strided_slice %17 {offsets = [0, 16], sizes = [8, 8], strides = [1, 1]} : vector<8x32xf32> to vector<8x8xf32>
    %75 = arith.truncf %74 : vector<8x8xf32> to vector<8x8xbf16>
    %76 = vector.extract_strided_slice %18 {offsets = [0, 16], sizes = [8, 8], strides = [1, 1]} : vector<8x32xf32> to vector<8x8xf32>
    %77 = arith.truncf %76 : vector<8x8xf32> to vector<8x8xbf16>
    %78 = vector.extract_strided_slice %19 {offsets = [0, 16], sizes = [8, 8], strides = [1, 1]} : vector<8x32xf32> to vector<8x8xf32>
    %79 = arith.truncf %78 : vector<8x8xf32> to vector<8x8xbf16>
    %cst_34 = arith.constant dense<0.000000e+00> : vector<8x8xf32>
    %80 = tpu.matmul %75, %77, %cst_34 {dimension_numbers = #tpu.dot_dimension_numbers<[1], [1], [0], [0], [0, 0, 1, 0], [], []>} : vector<8x8xbf16>, vector<8x8xbf16>, vector<8x8xf32> -> vector<8x8xf32>
    %cst_35 = arith.constant -9.99999995E+11 : f32
    %81 = vector.broadcast %cst_35 : f32 to vector<8x8xf32>
    %82 = arith.select %9, %80, %81 : vector<8x8xi1>, vector<8x8xf32>
    %cst_36 = arith.constant 0.176776692 : f32
    %83 = vector.broadcast %cst_36 : f32 to vector<8x8xf32>
    %84 = arith.mulf %82, %83 : vector<8x8xf32>
    %cst_37 = arith.constant dense<0xFF800000> : vector<8xf32>
    %85 = vector.multi_reduction <maximumf>, %84, %cst_37 [1] : vector<8x8xf32> to vector<8xf32>
    %86 = vector.shape_cast %85 : vector<8xf32> to vector<8x1xf32>
    %87 = vector.broadcast %86 : vector<8x1xf32> to vector<8x8xf32>
    %88 = arith.subf %84, %87 : vector<8x8xf32>
    %89 = math.exp %88 : vector<8x8xf32>
    %cst_38 = arith.constant dense<0.000000e+00> : vector<8xf32>
    %90 = vector.multi_reduction <add>, %89, %cst_38 [1] : vector<8x8xf32> to vector<8xf32>
    %91 = vector.shape_cast %90 : vector<8xf32> to vector<8x1xf32>
    %92 = vector.broadcast %91 : vector<8x1xf32> to vector<8x8xf32>
    %93 = arith.divf %89, %92 : vector<8x8xf32>
    %94 = arith.truncf %93 : vector<8x8xf32> to vector<8x8xbf16>
    %cst_39 = arith.constant dense<0.000000e+00> : vector<8x8xf32>
    %95 = tpu.matmul %94, %79, %cst_39 {dimension_numbers = #tpu.dot_dimension_numbers<[1], [0], [0], [1], [0, 0, 1, 1], [], []>} : vector<8x8xbf16>, vector<8x8xbf16>, vector<8x8xf32> -> vector<8x8xf32>
    %96 = arith.truncf %95 : vector<8x8xf32> to vector<8x8xbf16>
    %97 = vector.extract_strided_slice %13 {offsets = [16, 0], sizes = [8, 32], strides = [1, 1]} : vector<32x32xbf16> to vector<8x32xbf16>
    %cst_40 = arith.constant dense<0.000000e+00> : vector<8x32xf32>
    %98 = tpu.matmul %96, %97, %cst_40 {dimension_numbers = #tpu.dot_dimension_numbers<[1], [0], [0], [1], [0, 0, 1, 1], [], []>} : vector<8x8xbf16>, vector<8x32xbf16>, vector<8x32xf32> -> vector<8x32xf32>
    %99 = arith.addf %73, %98 : vector<8x32xf32>
    %100 = vector.extract_strided_slice %17 {offsets = [0, 24], sizes = [8, 8], strides = [1, 1]} : vector<8x32xf32> to vector<8x8xf32>
    %101 = arith.truncf %100 : vector<8x8xf32> to vector<8x8xbf16>
    %102 = vector.extract_strided_slice %18 {offsets = [0, 24], sizes = [8, 8], strides = [1, 1]} : vector<8x32xf32> to vector<8x8xf32>
    %103 = arith.truncf %102 : vector<8x8xf32> to vector<8x8xbf16>
    %104 = vector.extract_strided_slice %19 {offsets = [0, 24], sizes = [8, 8], strides = [1, 1]} : vector<8x32xf32> to vector<8x8xf32>
    %105 = arith.truncf %104 : vector<8x8xf32> to vector<8x8xbf16>
    %cst_41 = arith.constant dense<0.000000e+00> : vector<8x8xf32>
    %106 = tpu.matmul %101, %103, %cst_41 {dimension_numbers = #tpu.dot_dimension_numbers<[1], [1], [0], [0], [0, 0, 1, 0], [], []>} : vector<8x8xbf16>, vector<8x8xbf16>, vector<8x8xf32> -> vector<8x8xf32>
    %cst_42 = arith.constant -9.99999995E+11 : f32
    %107 = vector.broadcast %cst_42 : f32 to vector<8x8xf32>
    %108 = arith.select %9, %106, %107 : vector<8x8xi1>, vector<8x8xf32>
    %cst_43 = arith.constant 0.176776692 : f32
    %109 = vector.broadcast %cst_43 : f32 to vector<8x8xf32>
    %110 = arith.mulf %108, %109 : vector<8x8xf32>
    %cst_44 = arith.constant dense<0xFF800000> : vector<8xf32>
    %111 = vector.multi_reduction <maximumf>, %110, %cst_44 [1] : vector<8x8xf32> to vector<8xf32>
    %112 = vector.shape_cast %111 : vector<8xf32> to vector<8x1xf32>
    %113 = vector.broadcast %112 : vector<8x1xf32> to vector<8x8xf32>
    %114 = arith.subf %110, %113 : vector<8x8xf32>
    %115 = math.exp %114 : vector<8x8xf32>
    %cst_45 = arith.constant dense<0.000000e+00> : vector<8xf32>
    %116 = vector.multi_reduction <add>, %115, %cst_45 [1] : vector<8x8xf32> to vector<8xf32>
    %117 = vector.shape_cast %116 : vector<8xf32> to vector<8x1xf32>
    %118 = vector.broadcast %117 : vector<8x1xf32> to vector<8x8xf32>
    %119 = arith.divf %115, %118 : vector<8x8xf32>
    %120 = arith.truncf %119 : vector<8x8xf32> to vector<8x8xbf16>
    %cst_46 = arith.constant dense<0.000000e+00> : vector<8x8xf32>
    %121 = tpu.matmul %120, %105, %cst_46 {dimension_numbers = #tpu.dot_dimension_numbers<[1], [0], [0], [1], [0, 0, 1, 1], [], []>} : vector<8x8xbf16>, vector<8x8xbf16>, vector<8x8xf32> -> vector<8x8xf32>
    %122 = arith.truncf %121 : vector<8x8xf32> to vector<8x8xbf16>
    %123 = vector.extract_strided_slice %13 {offsets = [24, 0], sizes = [8, 32], strides = [1, 1]} : vector<32x32xbf16> to vector<8x32xbf16>
    %cst_47 = arith.constant dense<0.000000e+00> : vector<8x32xf32>
    %124 = tpu.matmul %122, %123, %cst_47 {dimension_numbers = #tpu.dot_dimension_numbers<[1], [0], [0], [1], [0, 0, 1, 1], [], []>} : vector<8x8xbf16>, vector<8x32xbf16>, vector<8x32xf32> -> vector<8x32xf32>
    %125 = arith.addf %99, %124 : vector<8x32xf32>
    %126 = arith.addf %125, %1 : vector<8x32xf32>
    %c0_48 = arith.constant 0 : index
    %c0_49 = arith.constant 0 : index
    %127 = vector.load %arg9[%c0_48, %c0_49] : memref<1x32xf32, #tpu.memory_space<vmem>>, vector<1x32xf32>
    %c0_50 = arith.constant 0 : index
    %c0_51 = arith.constant 0 : index
    %128 = vector.load %arg10[%c0_50, %c0_51] : memref<1x32xf32, #tpu.memory_space<vmem>>, vector<1x32xf32>
    %cst_52 = arith.constant dense<0.000000e+00> : vector<8xf32>
    %129 = vector.multi_reduction <add>, %126, %cst_52 [1] : vector<8x32xf32> to vector<8xf32>
    %130 = vector.shape_cast %129 : vector<8xf32> to vector<8x1xf32>
    %cst_53 = arith.constant 3.200000e+01 : f32
    %131 = vector.broadcast %cst_53 : f32 to vector<8x1xf32>
    %132 = arith.divf %130, %131 : vector<8x1xf32>
    %133 = vector.broadcast %132 : vector<8x1xf32> to vector<8x32xf32>
    %134 = arith.subf %126, %133 : vector<8x32xf32>
    %135 = arith.mulf %134, %134 : vector<8x32xf32>
    %cst_54 = arith.constant dense<0.000000e+00> : vector<8xf32>
    %136 = vector.multi_reduction <add>, %135, %cst_54 [1] : vector<8x32xf32> to vector<8xf32>
    %137 = vector.shape_cast %136 : vector<8xf32> to vector<8x1xf32>
    %cst_55 = arith.constant 3.200000e+01 : f32
    %138 = vector.broadcast %cst_55 : f32 to vector<8x1xf32>
    %139 = arith.divf %137, %138 : vector<8x1xf32>
    %140 = vector.broadcast %132 : vector<8x1xf32> to vector<8x32xf32>
    %141 = arith.subf %126, %140 : vector<8x32xf32>
    %cst_56 = arith.constant 9.99999974E-6 : f32
    %142 = vector.broadcast %cst_56 : f32 to vector<8x1xf32>
    %143 = arith.addf %139, %142 : vector<8x1xf32>
    %144 = math.rsqrt %143 : vector<8x1xf32>
    %145 = vector.broadcast %144 : vector<8x1xf32> to vector<8x32xf32>
    %146 = arith.mulf %141, %145 : vector<8x32xf32>
    %147 = vector.broadcast %127 : vector<1x32xf32> to vector<8x32xf32>
    %148 = arith.mulf %146, %147 : vector<8x32xf32>
    %149 = vector.broadcast %128 : vector<1x32xf32> to vector<8x32xf32>
    %150 = arith.addf %148, %149 : vector<8x32xf32>
    %c0_57 = arith.constant 0 : index
    %c0_58 = arith.constant 0 : index
    %151 = vector.load %arg11[%c0_57, %c0_58] : memref<32x128xbf16, #tpu.memory_space<vmem>>, vector<32x128xbf16>
    %c0_59 = arith.constant 0 : index
    %c0_60 = arith.constant 0 : index
    %152 = vector.load %arg12[%c0_59, %c0_60] : memref<1x128xf32, #tpu.memory_space<vmem>>, vector<1x128xf32>
    %c0_61 = arith.constant 0 : index
    %c0_62 = arith.constant 0 : index
    %153 = vector.load %arg13[%c0_61, %c0_62] : memref<128x32xbf16, #tpu.memory_space<vmem>>, vector<128x32xbf16>
    %c0_63 = arith.constant 0 : index
    %c0_64 = arith.constant 0 : index
    %154 = vector.load %arg14[%c0_63, %c0_64] : memref<1x32xf32, #tpu.memory_space<vmem>>, vector<1x32xf32>
    %155 = arith.truncf %150 : vector<8x32xf32> to vector<8x32xbf16>
    %cst_65 = arith.constant dense<0.000000e+00> : vector<8x128xf32>
    %156 = tpu.matmul %155, %151, %cst_65 {dimension_numbers = #tpu.dot_dimension_numbers<[1], [0], [0], [1], [0, 0, 1, 1], [], []>} : vector<8x32xbf16>, vector<32x128xbf16>, vector<8x128xf32> -> vector<8x128xf32>
    %157 = vector.broadcast %152 : vector<1x128xf32> to vector<8x128xf32>
    %158 = arith.addf %156, %157 : vector<8x128xf32>
    %cst_66 = arith.constant 0.000000e+00 : f32
    %159 = vector.broadcast %cst_66 : f32 to vector<8x128xf32>
    %160 = arith.maximumf %158, %159 : vector<8x128xf32>
    %161 = arith.truncf %160 : vector<8x128xf32> to vector<8x128xbf16>
    %cst_67 = arith.constant dense<0.000000e+00> : vector<8x32xf32>
    %162 = tpu.matmul %161, %153, %cst_67 {dimension_numbers = #tpu.dot_dimension_numbers<[1], [0], [0], [1], [0, 0, 1, 1], [], []>} : vector<8x128xbf16>, vector<128x32xbf16>, vector<8x32xf32> -> vector<8x32xf32>
    %163 = vector.broadcast %154 : vector<1x32xf32> to vector<8x32xf32>
    %164 = arith.addf %162, %163 : vector<8x32xf32>
    %165 = arith.addf %164, %150 : vector<8x32xf32>
    %c0_68 = arith.constant 0 : index
    %c0_69 = arith.constant 0 : index
    %166 = vector.load %arg15[%c0_68, %c0_69] : memref<1x32xf32, #tpu.memory_space<vmem>>, vector<1x32xf32>
    %c0_70 = arith.constant 0 : index
    %c0_71 = arith.constant 0 : index
    %167 = vector.load %arg16[%c0_70, %c0_71] : memref<1x32xf32, #tpu.memory_space<vmem>>, vector<1x32xf32>
    %cst_72 = arith.constant dense<0.000000e+00> : vector<8xf32>
    %168 = vector.multi_reduction <add>, %165, %cst_72 [1] : vector<8x32xf32> to vector<8xf32>
    %169 = vector.shape_cast %168 : vector<8xf32> to vector<8x1xf32>
    %cst_73 = arith.constant 3.200000e+01 : f32
    %170 = vector.broadcast %cst_73 : f32 to vector<8x1xf32>
    %171 = arith.divf %169, %170 : vector<8x1xf32>
    %172 = vector.broadcast %171 : vector<8x1xf32> to vector<8x32xf32>
    %173 = arith.subf %165, %172 : vector<8x32xf32>
    %174 = arith.mulf %173, %173 : vector<8x32xf32>
    %cst_74 = arith.constant dense<0.000000e+00> : vector<8xf32>
    %175 = vector.multi_reduction <add>, %174, %cst_74 [1] : vector<8x32xf32> to vector<8xf32>
    %176 = vector.shape_cast %175 : vector<8xf32> to vector<8x1xf32>
    %cst_75 = arith.constant 3.200000e+01 : f32
    %177 = vector.broadcast %cst_75 : f32 to vector<8x1xf32>
    %178 = arith.divf %176, %177 : vector<8x1xf32>
    %179 = vector.broadcast %171 : vector<8x1xf32> to vector<8x32xf32>
    %180 = arith.subf %165, %179 : vector<8x32xf32>
    %cst_76 = arith.constant 9.99999974E-6 : f32
    %181 = vector.broadcast %cst_76 : f32 to vector<8x1xf32>
    %182 = arith.addf %178, %181 : vector<8x1xf32>
    %183 = math.rsqrt %182 : vector<8x1xf32>
    %184 = vector.broadcast %183 : vector<8x1xf32> to vector<8x32xf32>
    %185 = arith.mulf %180, %184 : vector<8x32xf32>
    %186 = vector.broadcast %166 : vector<1x32xf32> to vector<8x32xf32>
    %187 = arith.mulf %185, %186 : vector<8x32xf32>
    %188 = vector.broadcast %167 : vector<1x32xf32> to vector<8x32xf32>
    %189 = arith.addf %187, %188 : vector<8x32xf32>
    %c0_77 = arith.constant 0 : index
    %c0_78 = arith.constant 0 : index
    %c0_79 = arith.constant 0 : index
    %190 = vector.load %arg17[%c0_77, %c0_78, %c0_79] : memref<1x8x32xf32, #tpu.memory_space<vmem>>, vector<1x8x32xf32>
    %191 = vector.shape_cast %190 : vector<1x8x32xf32> to vector<8x32xf32>
    %192 = vector.shape_cast %189 : vector<8x32xf32> to vector<1x8x32xf32>
    tpu.vector_store %arg17[%c0_77, %c0_78, %c0_79], %192 {strides = array<i32>} : memref<1x8x32xf32, #tpu.memory_space<vmem>>, vector<1x8x32xf32>,
    return
  }
  func.func @transform_0(%arg0: i32) -> (i32, i32, i32) {
    %c0_i32 = arith.constant 0 : i32
    %c0_i32_0 = arith.constant 0 : i32
    %c0_i32_1 = arith.constant 0 : i32
    return %arg0, %c0_i32, %c0_i32_0 : i32, i32, i32
  }
  func.func @transform_1(%arg0: i32) -> (i32, i32, i32) {
    %c0_i32 = arith.constant 0 : i32
    %c0_i32_0 = arith.constant 0 : i32
    %c0_i32_1 = arith.constant 0 : i32
    return %arg0, %c0_i32, %c0_i32_0 : i32, i32, i32
  }
  func.func @transform_2(%arg0: i32) -> (i32, i32, i32) {
    %c0_i32 = arith.constant 0 : i32
    %c0_i32_0 = arith.constant 0 : i32
    %c0_i32_1 = arith.constant 0 : i32
    return %arg0, %c0_i32, %c0_i32_0 : i32, i32, i32
  }
  func.func @transform_3(%arg0: i32) -> (i32, i32) {
    %c0_i32 = arith.constant 0 : i32
    %c0_i32_0 = arith.constant 0 : i32
    %c0_i32_1 = arith.constant 0 : i32
    return %c0_i32, %c0_i32_0 : i32, i32
  }
  func.func @transform_4(%arg0: i32) -> (i32, i32) {
    %c0_i32 = arith.constant 0 : i32
    %c0_i32_0 = arith.constant 0 : i32
    %c0_i32_1 = arith.constant 0 : i32
    return %c0_i32, %c0_i32_0 : i32, i32
  }
  func.func @transform_5(%arg0: i32) -> (i32, i32) {
    %c0_i32 = arith.constant 0 : i32
    %c0_i32_0 = arith.constant 0 : i32
    %c0_i32_1 = arith.constant 0 : i32
    return %c0_i32, %c0_i32_0 : i32, i32
  }
  func.func @transform_6(%arg0: i32) -> (i32, i32) {
    %c0_i32 = arith.constant 0 : i32
    %c0_i32_0 = arith.constant 0 : i32
    %c0_i32_1 = arith.constant 0 : i32
    return %c0_i32, %c0_i32_0 : i32, i32
  }
  func.func @transform_7(%arg0: i32) -> (i32, i32) {
    %c0_i32 = arith.constant 0 : i32
    %c0_i32_0 = arith.constant 0 : i32
    %c0_i32_1 = arith.constant 0 : i32
    return %c0_i32, %c0_i32_0 : i32, i32
  }
  func.func @transform_8(%arg0: i32) -> (i32, i32) {
    %c0_i32 = arith.constant 0 : i32
    %c0_i32_0 = arith.constant 0 : i32
    %c0_i32_1 = arith.constant 0 : i32
    return %c0_i32, %c0_i32_0 : i32, i32
  }
  func.func @transform_9(%arg0: i32) -> (i32, i32) {
    %c0_i32 = arith.constant 0 : i32
    %c0_i32_0 = arith.constant 0 : i32
    %c0_i32_1 = arith.constant 0 : i32
    return %c0_i32, %c0_i32_0 : i32, i32
  }
  func.func @transform_10(%arg0: i32) -> (i32, i32) {
    %c0_i32 = arith.constant 0 : i32
    %c0_i32_0 = arith.constant 0 : i32
    %c0_i32_1 = arith.constant 0 : i32
    return %c0_i32, %c0_i32_0 : i32, i32
  }
  func.func @transform_11(%arg0: i32) -> (i32, i32) {
    %c0_i32 = arith.constant 0 : i32
    %c0_i32_0 = arith.constant 0 : i32
    %c0_i32_1 = arith.constant 0 : i32
    return %c0_i32, %c0_i32_0 : i32, i32
  }
  func.func @transform_12(%arg0: i32) -> (i32, i32) {
    %c0_i32 = arith.constant 0 : i32
    %c0_i32_0 = arith.constant 0 : i32
    %c0_i32_1 = arith.constant 0 : i32
    return %c0_i32, %c0_i32_0 : i32, i32
  }
  func.func @transform_13(%arg0: i32) -> (i32, i32) {
    %c0_i32 = arith.constant 0 : i32
    %c0_i32_0 = arith.constant 0 : i32
    %c0_i32_1 = arith.constant 0 : i32
    return %c0_i32, %c0_i32_0 : i32, i32
  }
  func.func @transform_14(%arg0: i32) -> (i32, i32) {
    %c0_i32 = arith.constant 0 : i32
    %c0_i32_0 = arith.constant 0 : i32
    %c0_i32_1 = arith.constant 0 : i32
    return %c0_i32, %c0_i32_0 : i32, i32
  }
  func.func @transform_15(%arg0: i32) -> (i32, i32) {
    %c0_i32 = arith.constant 0 : i32
    %c0_i32_0 = arith.constant 0 : i32
    %c0_i32_1 = arith.constant 0 : i32
    return %c0_i32, %c0_i32_0 : i32, i32
  }
  func.func @transform_16(%arg0: i32) -> (i32, i32, i32) {
    %c0_i32 = arith.constant 0 : i32
    %c0_i32_0 = arith.constant 0 : i32
    %c0_i32_1 = arith.constant 0 : i32
    return %arg0, %c0_i32, %c0_i32_0 : i32, i32, i32
  }
}

module attributes {stable_mosaic.version = 11 : i64} {
  func.func @_vocab_linear_kernel(%arg0: i32, %arg1: memref<8x32xf32, #tpu.memory_space<vmem>>, %arg2: memref<32x128xbf16, #tpu.memory_space<vmem>>, %arg3: memref<1x128xf32, #tpu.memory_space<vmem>>, %arg4: memref<8x128xf32, #tpu.memory_space<vmem>>) attributes {dimension_semantics = [#tpu.dimension_semantics<parallel>], iteration_bounds = array<i64: 2>, scalar_prefetch = 0 : i64, scratch_operands = 0 : i64, tpu.core_type = #tpu.core_type<tc>, window_params = [{transform_indices = @transform_0, window_bounds = array<i64: 8, 32>}, {pipeline_mode = #tpu.pipeline_mode<synchronous>, transform_indices = @transform_1, window_bounds = array<i64: 32, 128>}, {pipeline_mode = #tpu.pipeline_mode<synchronous>, transform_indices = @transform_2, window_bounds = array<i64: 1, 128>}, {transform_indices = @transform_3, window_bounds = array<i64: 8, 128>}]} {
    %c0 = arith.constant 0 : index
    %c0_0 = arith.constant 0 : index
    %0 = vector.load %arg1[%c0, %c0_0] : memref<8x32xf32, #tpu.memory_space<vmem>>, vector<8x32xf32>
    %1 = arith.truncf %0 : vector<8x32xf32> to vector<8x32xbf16>
    %c0_1 = arith.constant 0 : index
    %c0_2 = arith.constant 0 : index
    %2 = vector.load %arg2[%c0_1, %c0_2] : memref<32x128xbf16, #tpu.memory_space<vmem>>, vector<32x128xbf16>
    %cst = arith.constant dense<0.000000e+00> : vector<8x128xf32>
    %3 = tpu.matmul %1, %2, %cst {dimension_numbers = #tpu.dot_dimension_numbers<[1], [0], [0], [1], [0, 0, 1, 1], [], []>} : vector<8x32xbf16>, vector<32x128xbf16>, vector<8x128xf32> -> vector<8x128xf32>
    %c0_3 = arith.constant 0 : index
    %c0_4 = arith.constant 0 : index
    %4 = vector.load %arg3[%c0_3, %c0_4] : memref<1x128xf32, #tpu.memory_space<vmem>>, vector<1x128xf32>
    %5 = vector.broadcast %4 : vector<1x128xf32> to vector<8x128xf32>
    %6 = arith.addf %3, %5 : vector<8x128xf32>
    %c0_5 = arith.constant 0 : index
    %c0_6 = arith.constant 0 : index
    %7 = vector.load %arg4[%c0_5, %c0_6] : memref<8x128xf32, #tpu.memory_space<vmem>>, vector<8x128xf32>
    tpu.vector_store %arg4[%c0_5, %c0_6], %6 {strides = array<i32>} : memref<8x128xf32, #tpu.memory_space<vmem>>, vector<8x128xf32>,
    return
  }
  func.func @transform_0(%arg0: i32) -> (i32, i32) {
    %c0_i32 = arith.constant 0 : i32
    %c0_i32_0 = arith.constant 0 : i32
    return %arg0, %c0_i32 : i32, i32
  }
  func.func @transform_1(%arg0: i32) -> (i32, i32) {
    %c0_i32 = arith.constant 0 : i32
    %c0_i32_0 = arith.constant 0 : i32
    %c0_i32_1 = arith.constant 0 : i32
    return %c0_i32, %c0_i32_0 : i32, i32
  }
  func.func @transform_2(%arg0: i32) -> (i32, i32) {
    %c0_i32 = arith.constant 0 : i32
    %c0_i32_0 = arith.constant 0 : i32
    %c0_i32_1 = arith.constant 0 : i32
    return %c0_i32, %c0_i32_0 : i32, i32
  }
  func.func @transform_3(%arg0: i32) -> (i32, i32) {
    %c0_i32 = arith.constant 0 : i32
    %c0_i32_0 = arith.constant 0 : i32
    return %arg0, %c0_i32 : i32, i32
  }
}

</mosaic_0001>

<llo_original>
// kernel: transformer_fwd.13
$region0: #{transformer_fwd.13}
  #allocation0 [shape = 'u32[]', space=smem, size = 0x4, offset = 0x4, fixed_abs, tag = 'smem constant byte address 0x4 - core index']
  #allocation1 [shape = 'u32[72,128]{1,0:T(1,128)}', space=vmem, size = 0x9000, scoped, tag = 'internal scratch']
  %s0 = inlined_call_operand.vmem [shape: f32[16,32], index: 0, kind: input, shape index: {}]
  %s1 = inlined_call_operand.vmem [shape: bf16[32,128], index: 1, kind: input, shape index: {}]
  %s2 = inlined_call_operand.vmem [shape: f32[1,128], index: 2, kind: input, shape index: {}]
  %s3 = inlined_call_operand.vmem [shape: f32[16,128], index: 3, kind: output, shape index: {}]
  %s4 = sld [smem:[#allocation0]]
  $region45: #{transformer_fwd.13} parent=0
    _
  %s6 = ssub.s32 1, %s4
  %s7 = scalar_select 0, %s6, %s4
  loop: start=0, step=1, limit=4
  $region2: #{transformer_fwd.13} parent=0 // loop_pre_header
    _
  $region3: #{transformer_fwd.13} parent=0 // loop_header
    %s9 = sphi 0, %s13
    %p10 = scmp.ge.s32.totalorder %s9, 4
    %s19 = sphi 0, %s21
    %s22 = sphi 0, %s19
    %s23 = sphi 0, %s22
    %s39 = sphi 0, %s23
    %s43 = sphi 0, %s43
    %s45 = sphi 0, %s43
    %s46 = sphi 0, %s45
    %s60 = sphi 0, %s46
    %s64 = sphi 0, %s64
    %s66 = sphi 0, %s64
    %s67 = sphi 0, %s66
    %s81 = sphi 0, %s67
    %s87 = sphi 0, %s89
    %s90 = sphi 0, %s87
    %s91 = sphi 0, %s90
    %s107 = sphi 0, %s91
  $region4: #{transformer_fwd.13} parent=0 // loop_header_branch
    %12 = sbr.rel (%p10) target = $region8
  $region5: #{transformer_fwd.13} parent=0 // loop_body
    %s14 = ssub.s32 %s9, 1
    %s15 = ssub.s32 %s9, 2
    %s16 = sadd.s32 %s9, 1
    %s17 = ssub.s32 %s9, %s16
    %p18 = scmp.eq.s32.totalorder %s17, 0
    %s20 = sadd.s32 %s19, 1
    %s21 = scalar_select %p18, %s19, %s20
    %p24 = pneg %p18
    %p25 = scmp.eq.s32.totalorder %s9, 1
    %p26 = por %p24, %p25
    %p27 = scmp.ne.s32.totalorder %s19, %s22
    %p28 = scmp.eq.s32.totalorder %s9, 0
    %p29 = por %p27, %p28
    %p30 = scmp.ne.s32.totalorder %s19, %s22
    %p31 = scmp.eq.s32.totalorder %s14, 1
    %p32 = por %p30, %p31
    %p33 = scmp.ne.s32.totalorder %s22, %s23
    %p34 = scmp.eq.s32.totalorder %s14, 0
    %p35 = por %p33, %p34
    %p36 = scmp.ne.s32.totalorder %s22, %s23
    %p37 = scmp.eq.s32.totalorder %s15, 1
    %p38 = por %p36, %p37
    %p40 = scmp.ne.s32.totalorder %s23, %s39
    %p41 = scmp.eq.s32.totalorder %s15, 0
    %p42 = por %p40, %p41
    %s44 = sadd.s32 %s43, 1
    %p47 = scmp.eq.s32.totalorder %s9, 1
    %p48 = scmp.ne.s32.totalorder %s43, %s45
    %p49 = scmp.eq.s32.totalorder %s9, 0
    %p50 = por %p48, %p49
    %p51 = scmp.ne.s32.totalorder %s43, %s45
    %p52 = scmp.eq.s32.totalorder %s14, 1
    %p53 = por %p51, %p52
    %p54 = scmp.ne.s32.totalorder %s45, %s46
    %p55 = scmp.eq.s32.totalorder %s14, 0
    %p56 = por %p54, %p55
    %p57 = scmp.ne.s32.totalorder %s45, %s46
    %p58 = scmp.eq.s32.totalorder %s15, 1
    %p59 = por %p57, %p58
    %p61 = scmp.ne.s32.totalorder %s46, %s60
    %p62 = scmp.eq.s32.totalorder %s15, 0
    %p63 = por %p61, %p62
    %s65 = sadd.s32 %s64, 1
    %p68 = scmp.eq.s32.totalorder %s9, 1
    %p69 = scmp.ne.s32.totalorder %s64, %s66
    %p70 = scmp.eq.s32.totalorder %s9, 0
    %p71 = por %p69, %p70
    %p72 = scmp.ne.s32.totalorder %s64, %s66
    %p73 = scmp.eq.s32.totalorder %s14, 1
    %p74 = por %p72, %p73
    %p75 = scmp.ne.s32.totalorder %s66, %s67
    %p76 = scmp.eq.s32.totalorder %s14, 0
    %p77 = por %p75, %p76
    %p78 = scmp.ne.s32.totalorder %s66, %s67
    %p79 = scmp.eq.s32.totalorder %s15, 1
    %p80 = por %p78, %p79
    %p82 = scmp.ne.s32.totalorder %s67, %s81
    %p83 = scmp.eq.s32.totalorder %s15, 0
    %p84 = por %p82, %p83
    %s85 = ssub.s32 %s9, %s16
    %p86 = scmp.eq.s32.totalorder %s85, 0
    %s88 = sadd.s32 %s87, 1
    %s89 = scalar_select %p86, %s87, %s88
    %p92 = pneg %p86
    %p93 = scmp.eq.s32.totalorder %s9, 1
    %p94 = por %p92, %p93
    %p95 = scmp.ne.s32.totalorder %s87, %s90
    %p96 = scmp.eq.s32.totalorder %s9, 0
    %p97 = por %p95, %p96
    %p98 = scmp.ne.s32.totalorder %s87, %s90
    %p99 = scmp.eq.s32.totalorder %s14, 1
    %p100 = por %p98, %p99
    %p101 = scmp.ne.s32.totalorder %s90, %s91
    %p102 = scmp.eq.s32.totalorder %s14, 0
    %p103 = por %p101, %p102
    %p104 = scmp.ne.s32.totalorder %s90, %s91
    %p105 = scmp.eq.s32.totalorder %s15, 1
    %p106 = por %p104, %p105
    %p108 = scmp.ne.s32.totalorder %s91, %s107
    %p109 = scmp.eq.s32.totalorder %s15, 0
    %p110 = por %p108, %p109
    %p111 = scmp.le.s32.totalorder 1, %s9
    %p112 = scmp.lt.s32.totalorder %s9, 3
    %p113 = pnand %p111, %p112
    %p114 = pneg %p113
    // Predicated region
    $region9: #{transformer_fwd.13} parent=5 // pred_check
      _
    $region10: #{transformer_fwd.13} parent=5 // pred_check_branch
      %116 = sbr.rel (%p113) target = $region12
    $region11: #{transformer_fwd.13} parent=5 // pred_region
      %s117 = ssub.s32 %s9, 1
      // Predicated region
      $region13: #{transformer_fwd.13} parent=11 // pred_check
        %p118 = pneg %p56
      $region14: #{transformer_fwd.13} parent=11 // pred_check_branch
        %120 = sbr.rel (%p118) target = $region16
      $region15: #{transformer_fwd.13} parent=11 // pred_region
        _
      $region16: #{transformer_fwd.13} parent=11 // pred_fallthru
        _
      // Predicated region
      $region17: #{transformer_fwd.13} parent=11 // pred_check
        %p121 = pneg %p77
      $region18: #{transformer_fwd.13} parent=11 // pred_check_branch
        %123 = sbr.rel (%p121) target = $region20
      $region19: #{transformer_fwd.13} parent=11 // pred_region
        _
      $region20: #{transformer_fwd.13} parent=11 // pred_fallthru
        _
    $region12: #{transformer_fwd.13} parent=5 // pred_fallthru
      _
    %p124 = scmp.lt.s32.totalorder %s9, 2
    // Predicated region
    $region21: #{transformer_fwd.13} parent=5 // pred_check
      %p125 = pneg %p124
    $region22: #{transformer_fwd.13} parent=5 // pred_check_branch
      %127 = sbr.rel (%p125) target = $region24
    $region23: #{transformer_fwd.13} parent=5 // pred_region
      // Predicated region
      $region25: #{transformer_fwd.13} parent=23 // pred_check
        %p128 = pneg %p29
      $region26: #{transformer_fwd.13} parent=23 // pred_check_branch
        %130 = sbr.rel (%p128) target = $region28
      $region27: #{transformer_fwd.13} parent=23 // pred_region
        %p131 = scmp.lt.s32.totalorder %s9, 1
        %s132 = scalar_select %p131, %s9, 1
        %s133 = smul.addr %s132, 8
        %s134 = scalar_lea.vmem %s0, %s133
      $region28: #{transformer_fwd.13} parent=23 // pred_fallthru
        _
    $region24: #{transformer_fwd.13} parent=5 // pred_fallthru
      _
    %p135 = scmp.le.s32.totalorder 1, %s9
    %p136 = scmp.lt.s32.totalorder %s9, 3
    %p137 = pnand %p135, %p136
    %p138 = pneg %p137
    // Predicated region
    $region29: #{transformer_fwd.13} parent=5 // pred_check
      _
    $region30: #{transformer_fwd.13} parent=5 // pred_check_branch
      %140 = sbr.rel (%p137) target = $region32
    $region31: #{transformer_fwd.13} parent=5 // pred_region
      %s141 = ssub.s32 %s9, 1
      %p142 = scmp.lt.s32.totalorder %s14, 1
      %s143 = scalar_select %p142, %s14, 1
      %s144 = smul.addr %s143, 8
      %s145 = scalar_lea.vmem %s0, %s144
      %p146 = pneg %p35
      %p147 = pneg %p32
      %p148 = pneg %p56
      %p149 = pneg %p53
      %p150 = pneg %p77
      %p151 = pneg %p74
      %p152 = pneg %p103
      %p153 = pneg %p100
      %p154 = scmp.lt.s32.totalorder %s14, 1
      %s155 = scalar_select %p154, %s14, 1
      %s156 = smul.addr %s155, 8
      %s157 = scalar_lea.vmem %s3, %s156
      %p158 = scmp.lt.s32.totalorder %s14, 1
      %s159 = scalar_select %p158, %s14, 1
      %s160 = smul.addr %s159, 8
      %s161 = scalar_lea.vmem %s0, %s160
      %p162 = scmp.lt.s32.totalorder %s14, 1
      %s163 = scalar_select %p162, %s14, 1
      %s164 = smul.addr %s163, 8
      %s165 = scalar_lea.vmem %s3, %s164
      %v167 = vld [vmem:[%s161] sm:$0xff]
      %v168 = vpack.c.bf16 %v167, %v167
      %v169 = vld [vmem:[%s1] sm:$0xf]
      %v170 = vld [vmem:[%s1 + $0x4] sm:$0xf]
      %v171 = vld [vmem:[%s1 + $0x8] sm:$0xf]
      %v172 = vld [vmem:[%s1 + $0xc] sm:$0xf]
      %v173 = vld [vmem:[%s2] sm:$0x1]
      %v175 = vperm.slane %v173, 0
      %v181 = vunpack.c.l.b16 %v169
      %v182 = vunpack.c.l.b16 %v170
      %v183 = vunpack.c.l.b16 %v171
      %v184 = vunpack.c.l.b16 %v172
      %v185 = vpack.c.b16 %v182, %v181
      %v186 = vpack.c.b16 %v184, %v183
      %vm189 = vcmask 261120
      %v191 = vsel %vm189, %v168, 0
      %193 = vmatpush.bf16.msra.mxu0 0
      %194 = vmatpush.bf16.msra.mxu0 0
      %195 = vmatpush.bf16.msra.mxu0 0
      %196 = vmatpush.bf16.msra.mxu0 0
      %197 = vmatpush.bf16.msra.mxu0 0
      %198 = vmatpush.bf16.msra.mxu0 0
      %199 = vmatpush.bf16.msra.mxu0 %v186
      %200 = vmatpush.bf16.msra.mxu0 %v185
      %201 = vmatmul.bf16.gmra.mxu0 %v191
      %v202 = vpop.f32.mrf.mxu0
      %v203 = vadd.f32 %v175, %v202
      %v204 = vpop.f32.mrf.mxu0
      %205 = vdwg.mxu0
      %206 = vst [vmem:[%s165] sm:$0xff] %v203
      %p207 = scmp.lt.s32.totalorder %s14, 1
      %s208 = scalar_select %p207, %s14, 1
      %s209 = smul.addr %s208, 8
      %s210 = scalar_lea.vmem %s3, %s209
      // Predicated region
      $region33: #{transformer_fwd.13} parent=31 // pred_check
        %p211 = pneg %p100
      $region34: #{transformer_fwd.13} parent=31 // pred_check_branch
        %213 = sbr.rel (%p211) target = $region36
      $region35: #{transformer_fwd.13} parent=31 // pred_region
        _
      $region36: #{transformer_fwd.13} parent=31 // pred_fallthru
        _
    $region32: #{transformer_fwd.13} parent=5 // pred_fallthru
      _
    %p214 = scmp.le.s32.totalorder 2, %s9
    // Predicated region
    $region37: #{transformer_fwd.13} parent=5 // pred_check
      %p215 = pneg %p214
    $region38: #{transformer_fwd.13} parent=5 // pred_check_branch
      %217 = sbr.rel (%p215) target = $region40
    $region39: #{transformer_fwd.13} parent=5 // pred_region
      %s218 = ssub.s32 %s9, 2
      // Predicated region
      $region41: #{transformer_fwd.13} parent=39 // pred_check
        %p219 = pneg %p106
      $region42: #{transformer_fwd.13} parent=39 // pred_check_branch
        %221 = sbr.rel (%p219) target = $region44
      $region43: #{transformer_fwd.13} parent=39 // pred_region
        %p222 = scmp.lt.s32.totalorder %s15, 1
        %s223 = scalar_select %p222, %s15, 1
        %s224 = smul.addr %s223, 8
        %s225 = scalar_lea.vmem %s3, %s224
      $region44: #{transformer_fwd.13} parent=39 // pred_fallthru
        _
    $region40: #{transformer_fwd.13} parent=5 // pred_fallthru
      _
  $region6: #{transformer_fwd.13} parent=0 // loop_footer
    %s13 = sadd.s32 1, %s9
  $region7: #{transformer_fwd.13} parent=0 // loop_footer_branch
    %8 = sbr.rel target = $region3
  $region8: #{transformer_fwd.13} parent=0 // loop_exit
    _

// kernel: transformer_fwd.9
$region0: #{transformer_fwd.9}
  #allocation0 [shape = 'u32[]', space=smem, size = 0x4, offset = 0x4, fixed_abs, tag = 'smem constant byte address 0x4 - core index']
  #allocation1 [shape = 'u32[72,128]{1,0:T(1,128)}', space=vmem, size = 0x9000, scoped, tag = 'internal scratch']
  %s0 = inlined_call_operand.vmem [shape: s32[2,1,8], index: 0, kind: input, shape index: {}]
  %s1 = inlined_call_operand.vmem [shape: f32[2,8,32], index: 1, kind: input, shape index: {}]
  %s2 = inlined_call_operand.vmem [shape: bf16[32,32], index: 2, kind: input, shape index: {}]
  %s3 = inlined_call_operand.vmem [shape: bf16[32,32], index: 3, kind: input, shape index: {}]
  %s4 = inlined_call_operand.vmem [shape: bf16[32,32], index: 4, kind: input, shape index: {}]
  %s5 = inlined_call_operand.vmem [shape: bf16[32,32], index: 5, kind: input, shape index: {}]
  %s6 = inlined_call_operand.vmem [shape: f32[1,32], index: 6, kind: input, shape index: {}]
  %s7 = inlined_call_operand.vmem [shape: f32[1,32], index: 7, kind: input, shape index: {}]
  %s8 = inlined_call_operand.vmem [shape: f32[1,32], index: 8, kind: input, shape index: {}]
  %s9 = inlined_call_operand.vmem [shape: f32[2,8,32], index: 9, kind: output, shape index: {}]
  %s10 = sld [smem:[#allocation0]]
  $region69: #{transformer_fwd.9} parent=0
    _
  %s12 = ssub.s32 1, %s10
  %s13 = scalar_select 0, %s12, %s10
  loop: start=0, step=1, limit=4
  $region2: #{transformer_fwd.9} parent=0 // loop_pre_header
    _
  $region3: #{transformer_fwd.9} parent=0 // loop_header
    %s15 = sphi 0, %s19
    %p16 = scmp.ge.s32.totalorder %s15, 4
    %s25 = sphi 0, %s27
    %s28 = sphi 0, %s25
    %s29 = sphi 0, %s28
    %s45 = sphi 0, %s29
    %s51 = sphi 0, %s53
    %s54 = sphi 0, %s51
    %s55 = sphi 0, %s54
    %s71 = sphi 0, %s55
    %s75 = sphi 0, %s75
    %s77 = sphi 0, %s75
    %s78 = sphi 0, %s77
    %s92 = sphi 0, %s78
    %s96 = sphi 0, %s96
    %s98 = sphi 0, %s96
    %s99 = sphi 0, %s98
    %s113 = sphi 0, %s99
    %s117 = sphi 0, %s117
    %s119 = sphi 0, %s117
    %s120 = sphi 0, %s119
    %s134 = sphi 0, %s120
    %s138 = sphi 0, %s138
    %s140 = sphi 0, %s138
    %s141 = sphi 0, %s140
    %s155 = sphi 0, %s141
    %s159 = sphi 0, %s159
    %s161 = sphi 0, %s159
    %s162 = sphi 0, %s161
    %s176 = sphi 0, %s162
    %s180 = sphi 0, %s180
    %s182 = sphi 0, %s180
    %s183 = sphi 0, %s182
    %s197 = sphi 0, %s183
    %s201 = sphi 0, %s201
    %s203 = sphi 0, %s201
    %s204 = sphi 0, %s203
    %s218 = sphi 0, %s204
    %s224 = sphi 0, %s226
    %s227 = sphi 0, %s224
    %s228 = sphi 0, %s227
    %s244 = sphi 0, %s228
  $region4: #{transformer_fwd.9} parent=0 // loop_header_branch
    %18 = sbr.rel (%p16) target = $region8
  $region5: #{transformer_fwd.9} parent=0 // loop_body
    %s20 = ssub.s32 %s15, 1
    %s21 = ssub.s32 %s15, 2
    %s22 = sadd.s32 %s15, 1
    %s23 = ssub.s32 %s15, %s22
    %p24 = scmp.eq.s32.totalorder %s23, 0
    %s26 = sadd.s32 %s25, 1
    %s27 = scalar_select %p24, %s25, %s26
    %p30 = pneg %p24
    %p31 = scmp.eq.s32.totalorder %s15, 1
    %p32 = por %p30, %p31
    %p33 = scmp.ne.s32.totalorder %s25, %s28
    %p34 = scmp.eq.s32.totalorder %s15, 0
    %p35 = por %p33, %p34
    %p36 = scmp.ne.s32.totalorder %s25, %s28
    %p37 = scmp.eq.s32.totalorder %s20, 1
    %p38 = por %p36, %p37
    %p39 = scmp.ne.s32.totalorder %s28, %s29
    %p40 = scmp.eq.s32.totalorder %s20, 0
    %p41 = por %p39, %p40
    %p42 = scmp.ne.s32.totalorder %s28, %s29
    %p43 = scmp.eq.s32.totalorder %s21, 1
    %p44 = por %p42, %p43
    %p46 = scmp.ne.s32.totalorder %s29, %s45
    %p47 = scmp.eq.s32.totalorder %s21, 0
    %p48 = por %p46, %p47
    %s49 = ssub.s32 %s15, %s22
    %p50 = scmp.eq.s32.totalorder %s49, 0
    %s52 = sadd.s32 %s51, 1
    %s53 = scalar_select %p50, %s51, %s52
    %p56 = pneg %p50
    %p57 = scmp.eq.s32.totalorder %s15, 1
    %p58 = por %p56, %p57
    %p59 = scmp.ne.s32.totalorder %s51, %s54
    %p60 = scmp.eq.s32.totalorder %s15, 0
    %p61 = por %p59, %p60
    %p62 = scmp.ne.s32.totalorder %s51, %s54
    %p63 = scmp.eq.s32.totalorder %s20, 1
    %p64 = por %p62, %p63
    %p65 = scmp.ne.s32.totalorder %s54, %s55
    %p66 = scmp.eq.s32.totalorder %s20, 0
    %p67 = por %p65, %p66
    %p68 = scmp.ne.s32.totalorder %s54, %s55
    %p69 = scmp.eq.s32.totalorder %s21, 1
    %p70 = por %p68, %p69
    %p72 = scmp.ne.s32.totalorder %s55, %s71
    %p73 = scmp.eq.s32.totalorder %s21, 0
    %p74 = por %p72, %p73
    %s76 = sadd.s32 %s75, 1
    %p79 = scmp.eq.s32.totalorder %s15, 1
    %p80 = scmp.ne.s32.totalorder %s75, %s77
    %p81 = scmp.eq.s32.totalorder %s15, 0
    %p82 = por %p80, %p81
    %p83 = scmp.ne.s32.totalorder %s75, %s77
    %p84 = scmp.eq.s32.totalorder %s20, 1
    %p85 = por %p83, %p84
    %p86 = scmp.ne.s32.totalorder %s77, %s78
    %p87 = scmp.eq.s32.totalorder %s20, 0
    %p88 = por %p86, %p87
    %p89 = scmp.ne.s32.totalorder %s77, %s78
    %p90 = scmp.eq.s32.totalorder %s21, 1
    %p91 = por %p89, %p90
    %p93 = scmp.ne.s32.totalorder %s78, %s92
    %p94 = scmp.eq.s32.totalorder %s21, 0
    %p95 = por %p93, %p94
    %s97 = sadd.s32 %s96, 1
    %p100 = scmp.eq.s32.totalorder %s15, 1
    %p101 = scmp.ne.s32.totalorder %s96, %s98
    %p102 = scmp.eq.s32.totalorder %s15, 0
    %p103 = por %p101, %p102
    %p104 = scmp.ne.s32.totalorder %s96, %s98
    %p105 = scmp.eq.s32.totalorder %s20, 1
    %p106 = por %p104, %p105
    %p107 = scmp.ne.s32.totalorder %s98, %s99
    %p108 = scmp.eq.s32.totalorder %s20, 0
    %p109 = por %p107, %p108
    %p110 = scmp.ne.s32.totalorder %s98, %s99
    %p111 = scmp.eq.s32.totalorder %s21, 1
    %p112 = por %p110, %p111
    %p114 = scmp.ne.s32.totalorder %s99, %s113
    %p115 = scmp.eq.s32.totalorder %s21, 0
    %p116 = por %p114, %p115
    %s118 = sadd.s32 %s117, 1
    %p121 = scmp.eq.s32.totalorder %s15, 1
    %p122 = scmp.ne.s32.totalorder %s117, %s119
    %p123 = scmp.eq.s32.totalorder %s15, 0
    %p124 = por %p122, %p123
    %p125 = scmp.ne.s32.totalorder %s117, %s119
    %p126 = scmp.eq.s32.totalorder %s20, 1
    %p127 = por %p125, %p126
    %p128 = scmp.ne.s32.totalorder %s119, %s120
    %p129 = scmp.eq.s32.totalorder %s20, 0
    %p130 = por %p128, %p129
    %p131 = scmp.ne.s32.totalorder %s119, %s120
    %p132 = scmp.eq.s32.totalorder %s21, 1
    %p133 = por %p131, %p132
    %p135 = scmp.ne.s32.totalorder %s120, %s134
    %p136 = scmp.eq.s32.totalorder %s21, 0
    %p137 = por %p135, %p136
    %s139 = sadd.s32 %s138, 1
    %p142 = scmp.eq.s32.totalorder %s15, 1
    %p143 = scmp.ne.s32.totalorder %s138, %s140
    %p144 = scmp.eq.s32.totalorder %s15, 0
    %p145 = por %p143, %p144
    %p146 = scmp.ne.s32.totalorder %s138, %s140
    %p147 = scmp.eq.s32.totalorder %s20, 1
    %p148 = por %p146, %p147
    %p149 = scmp.ne.s32.totalorder %s140, %s141
    %p150 = scmp.eq.s32.totalorder %s20, 0
    %p151 = por %p149, %p150
    %p152 = scmp.ne.s32.totalorder %s140, %s141
    %p153 = scmp.eq.s32.totalorder %s21, 1
    %p154 = por %p152, %p153
    %p156 = scmp.ne.s32.totalorder %s141, %s155
    %p157 = scmp.eq.s32.totalorder %s21, 0
    %p158 = por %p156, %p157
    %s160 = sadd.s32 %s159, 1
    %p163 = scmp.eq.s32.totalorder %s15, 1
    %p164 = scmp.ne.s32.totalorder %s159, %s161
    %p165 = scmp.eq.s32.totalorder %s15, 0
    %p166 = por %p164, %p165
    %p167 = scmp.ne.s32.totalorder %s159, %s161
    %p168 = scmp.eq.s32.totalorder %s20, 1
    %p169 = por %p167, %p168
    %p170 = scmp.ne.s32.totalorder %s161, %s162
    %p171 = scmp.eq.s32.totalorder %s20, 0
    %p172 = por %p170, %p171
    %p173 = scmp.ne.s32.totalorder %s161, %s162
    %p174 = scmp.eq.s32.totalorder %s21, 1
    %p175 = por %p173, %p174
    %p177 = scmp.ne.s32.totalorder %s162, %s176
    %p178 = scmp.eq.s32.totalorder %s21, 0
    %p179 = por %p177, %p178
    %s181 = sadd.s32 %s180, 1
    %p184 = scmp.eq.s32.totalorder %s15, 1
    %p185 = scmp.ne.s32.totalorder %s180, %s182
    %p186 = scmp.eq.s32.totalorder %s15, 0
    %p187 = por %p185, %p186
    %p188 = scmp.ne.s32.totalorder %s180, %s182
    %p189 = scmp.eq.s32.totalorder %s20, 1
    %p190 = por %p188, %p189
    %p191 = scmp.ne.s32.totalorder %s182, %s183
    %p192 = scmp.eq.s32.totalorder %s20, 0
    %p193 = por %p191, %p192
    %p194 = scmp.ne.s32.totalorder %s182, %s183
    %p195 = scmp.eq.s32.totalorder %s21, 1
    %p196 = por %p194, %p195
    %p198 = scmp.ne.s32.totalorder %s183, %s197
    %p199 = scmp.eq.s32.totalorder %s21, 0
    %p200 = por %p198, %p199
    %s202 = sadd.s32 %s201, 1
    %p205 = scmp.eq.s32.totalorder %s15, 1
    %p206 = scmp.ne.s32.totalorder %s201, %s203
    %p207 = scmp.eq.s32.totalorder %s15, 0
    %p208 = por %p206, %p207
    %p209 = scmp.ne.s32.totalorder %s201, %s203
    %p210 = scmp.eq.s32.totalorder %s20, 1
    %p211 = por %p209, %p210
    %p212 = scmp.ne.s32.totalorder %s203, %s204
    %p213 = scmp.eq.s32.totalorder %s20, 0
    %p214 = por %p212, %p213
    %p215 = scmp.ne.s32.totalorder %s203, %s204
    %p216 = scmp.eq.s32.totalorder %s21, 1
    %p217 = por %p215, %p216
    %p219 = scmp.ne.s32.totalorder %s204, %s218
    %p220 = scmp.eq.s32.totalorder %s21, 0
    %p221 = por %p219, %p220
    %s222 = ssub.s32 %s15, %s22
    %p223 = scmp.eq.s32.totalorder %s222, 0
    %s225 = sadd.s32 %s224, 1
    %s226 = scalar_select %p223, %s224, %s225
    %p229 = pneg %p223
    %p230 = scmp.eq.s32.totalorder %s15, 1
    %p231 = por %p229, %p230
    %p232 = scmp.ne.s32.totalorder %s224, %s227
    %p233 = scmp.eq.s32.totalorder %s15, 0
    %p234 = por %p232, %p233
    %p235 = scmp.ne.s32.totalorder %s224, %s227
    %p236 = scmp.eq.s32.totalorder %s20, 1
    %p237 = por %p235, %p236
    %p238 = scmp.ne.s32.totalorder %s227, %s228
    %p239 = scmp.eq.s32.totalorder %s20, 0
    %p240 = por %p238, %p239
    %p241 = scmp.ne.s32.totalorder %s227, %s228
    %p242 = scmp.eq.s32.totalorder %s21, 1
    %p243 = por %p241, %p242
    %p245 = scmp.ne.s32.totalorder %s228, %s244
    %p246 = scmp.eq.s32.totalorder %s21, 0
    %p247 = por %p245, %p246
    %p248 = scmp.le.s32.totalorder 1, %s15
    %p249 = scmp.lt.s32.totalorder %s15, 3
    %p250 = pnand %p248, %p249
    %p251 = pneg %p250
    // Predicated region
    $region9: #{transformer_fwd.9} parent=5 // pred_check
      _
    $region10: #{transformer_fwd.9} parent=5 // pred_check_branch
      %253 = sbr.rel (%p250) target = $region12
    $region11: #{transformer_fwd.9} parent=5 // pred_region
      %s254 = ssub.s32 %s15, 1
      // Predicated region
      $region13: #{transformer_fwd.9} parent=11 // pred_check
        %p255 = pneg %p88
      $region14: #{transformer_fwd.9} parent=11 // pred_check_branch
        %257 = sbr.rel (%p255) target = $region16
      $region15: #{transformer_fwd.9} parent=11 // pred_region
        _
      $region16: #{transformer_fwd.9} parent=11 // pred_fallthru
        _
      // Predicated region
      $region17: #{transformer_fwd.9} parent=11 // pred_check
        %p258 = pneg %p109
      $region18: #{transformer_fwd.9} parent=11 // pred_check_branch
        %260 = sbr.rel (%p258) target = $region20
      $region19: #{transformer_fwd.9} parent=11 // pred_region
        _
      $region20: #{transformer_fwd.9} parent=11 // pred_fallthru
        _
      // Predicated region
      $region21: #{transformer_fwd.9} parent=11 // pred_check
        %p261 = pneg %p130
      $region22: #{transformer_fwd.9} parent=11 // pred_check_branch
        %263 = sbr.rel (%p261) target = $region24
      $region23: #{transformer_fwd.9} parent=11 // pred_region
        _
      $region24: #{transformer_fwd.9} parent=11 // pred_fallthru
        _
      // Predicated region
      $region25: #{transformer_fwd.9} parent=11 // pred_check
        %p264 = pneg %p151
      $region26: #{transformer_fwd.9} parent=11 // pred_check_branch
        %266 = sbr.rel (%p264) target = $region28
      $region27: #{transformer_fwd.9} parent=11 // pred_region
        _
      $region28: #{transformer_fwd.9} parent=11 // pred_fallthru
        _
      // Predicated region
      $region29: #{transformer_fwd.9} parent=11 // pred_check
        %p267 = pneg %p172
      $region30: #{transformer_fwd.9} parent=11 // pred_check_branch
        %269 = sbr.rel (%p267) target = $region32
      $region31: #{transformer_fwd.9} parent=11 // pred_region
        _
      $region32: #{transformer_fwd.9} parent=11 // pred_fallthru
        _
      // Predicated region
      $region33: #{transformer_fwd.9} parent=11 // pred_check
        %p270 = pneg %p193
      $region34: #{transformer_fwd.9} parent=11 // pred_check_branch
        %272 = sbr.rel (%p270) target = $region36
      $region35: #{transformer_fwd.9} parent=11 // pred_region
        _
      $region36: #{transformer_fwd.9} parent=11 // pred_fallthru
        _
      // Predicated region
      $region37: #{transformer_fwd.9} parent=11 // pred_check
        %p273 = pneg %p214
      $region38: #{transformer_fwd.9} parent=11 // pred_check_branch
        %275 = sbr.rel (%p273) target = $region40
      $region39: #{transformer_fwd.9} parent=11 // pred_region
        _
      $region40: #{transformer_fwd.9} parent=11 // pred_fallthru
        _
    $region12: #{transformer_fwd.9} parent=5 // pred_fallthru
      _
    %p276 = scmp.lt.s32.totalorder %s15, 2
    // Predicated region
    $region41: #{transformer_fwd.9} parent=5 // pred_check
      %p277 = pneg %p276
    $region42: #{transformer_fwd.9} parent=5 // pred_check_branch
      %279 = sbr.rel (%p277) target = $region44
    $region43: #{transformer_fwd.9} parent=5 // pred_region
      // Predicated region
      $region45: #{transformer_fwd.9} parent=43 // pred_check
        %p280 = pneg %p35
      $region46: #{transformer_fwd.9} parent=43 // pred_check_branch
        %282 = sbr.rel (%p280) target = $region48
      $region47: #{transformer_fwd.9} parent=43 // pred_region
        %p283 = scmp.lt.s32.totalorder %s15, 1
        %s284 = scalar_select %p283, %s15, 1
        %s285 = scalar_lea.vmem %s0, %s284
      $region48: #{transformer_fwd.9} parent=43 // pred_fallthru
        _
      // Predicated region
      $region49: #{transformer_fwd.9} parent=43 // pred_check
        %p286 = pneg %p61
      $region50: #{transformer_fwd.9} parent=43 // pred_check_branch
        %288 = sbr.rel (%p286) target = $region52
      $region51: #{transformer_fwd.9} parent=43 // pred_region
        %p289 = scmp.lt.s32.totalorder %s15, 1
        %s290 = scalar_select %p289, %s15, 1
        %s291 = smul.addr %s290, 8
        %s292 = scalar_lea.vmem %s1, %s291
      $region52: #{transformer_fwd.9} parent=43 // pred_fallthru
        _
    $region44: #{transformer_fwd.9} parent=5 // pred_fallthru
      _
    %p293 = scmp.le.s32.totalorder 1, %s15
    %p294 = scmp.lt.s32.totalorder %s15, 3
    %p295 = pnand %p293, %p294
    %p296 = pneg %p295
    // Predicated region
    $region53: #{transformer_fwd.9} parent=5 // pred_check
      _
    $region54: #{transformer_fwd.9} parent=5 // pred_check_branch
      %298 = sbr.rel (%p295) target = $region56
    $region55: #{transformer_fwd.9} parent=5 // pred_region
      %s299 = ssub.s32 %s15, 1
      %p300 = scmp.lt.s32.totalorder %s20, 1
      %s301 = scalar_select %p300, %s20, 1
      %s302 = scalar_lea.vmem %s0, %s301
      %p303 = pneg %p41
      %p304 = pneg %p38
      %p305 = scmp.lt.s32.totalorder %s20, 1
      %s306 = scalar_select %p305, %s20, 1
      %s307 = smul.addr %s306, 8
      %s308 = scalar_lea.vmem %s1, %s307
      %p309 = pneg %p67
      %p310 = pneg %p64
      %p311 = pneg %p88
      %p312 = pneg %p85
      %p313 = pneg %p109
      %p314 = pneg %p106
      %p315 = pneg %p130
      %p316 = pneg %p127
      %p317 = pneg %p151
      %p318 = pneg %p148
      %p319 = pneg %p172
      %p320 = pneg %p169
      %p321 = pneg %p193
      %p322 = pneg %p190
      %p323 = pneg %p214
      %p324 = pneg %p211
      %p325 = pneg %p240
      %p326 = pneg %p237
      %p327 = scmp.lt.s32.totalorder %s20, 1
      %s328 = scalar_select %p327, %s20, 1
      %s329 = smul.addr %s328, 8
      %s330 = scalar_lea.vmem %s9, %s329
      %p331 = scmp.lt.s32.totalorder %s20, 1
      %s332 = scalar_select %p331, %s20, 1
      %s333 = scalar_lea.vmem %s0, %s332
      %p334 = scmp.lt.s32.totalorder %s20, 1
      %s335 = scalar_select %p334, %s20, 1
      %s336 = smul.addr %s335, 8
      %s337 = scalar_lea.vmem %s1, %s336
      %p338 = scmp.lt.s32.totalorder %s20, 1
      %s339 = scalar_select %p338, %s20, 1
      %s340 = smul.addr %s339, 8
      %s341 = scalar_lea.vmem %s9, %s340
      %v343 = vld [vmem:[%s337] sm:$0xff]
      %v344 = vld [vmem:[%s333] sm:$0x1]
      %vm345 = vcmp.ne.s32.totalorder %v344, 0
      %v346 = vsel %vm345, 1, 0
      %v347 = vperm.slane %v346, 0
      %vm348 = vcmp.eq.s32.totalorder %v347, 1
      %v349 = vlaneseq
      %v350 = vshrl.u32 %v349, 7
      %v351 = vlaneseq
      %v352 = vand.u32 %v351, 127
      %vm353 = vcmp.le.s32.totalorder %v352, %v350
      %vm354 = vmand %vm348, %vm353
      %v355 = vld [vmem:[%s2] sm:$0xf]
      %v356 = vld [vmem:[%s2 + $0x4] sm:$0xf]
      %v357 = vld [vmem:[%s2 + $0x8] sm:$0xf]
      %v358 = vld [vmem:[%s2 + $0xc] sm:$0xf]
      %v359 = vld [vmem:[%s3] sm:$0xf]
      %v360 = vld [vmem:[%s3 + $0x4] sm:$0xf]
      %v361 = vld [vmem:[%s3 + $0x8] sm:$0xf]
      %v362 = vld [vmem:[%s3 + $0xc] sm:$0xf]
      %v363 = vld [vmem:[%s4] sm:$0xf]
      %v364 = vld [vmem:[%s4 + $0x4] sm:$0xf]
      %v365 = vld [vmem:[%s4 + $0x8] sm:$0xf]
      %v366 = vld [vmem:[%s4 + $0xc] sm:$0xf]
      %v367 = vld [vmem:[%s5] sm:$0xf]
      %v368 = vld [vmem:[%s5 + $0x4] sm:$0xf]
      %v369 = vld [vmem:[%s5 + $0x8] sm:$0xf]
      %v370 = vld [vmem:[%s5 + $0xc] sm:$0xf]
      %v371 = vld [vmem:[%s6] sm:$0x1]
      %v372 = vpack.c.bf16 %v343, %v343
      %v377 = vunpack.c.l.b16 %v355
      %v378 = vunpack.c.l.b16 %v356
      %v379 = vunpack.c.l.b16 %v357
      %v380 = vunpack.c.l.b16 %v358
      %v381 = vpack.c.b16 %v378, %v377
      %v382 = vpack.c.b16 %v380, %v379
      %vm385 = vcmask 261120
      %v387 = vsel %vm385, %v372, 0
      %389 = vmatpush.bf16.msra.mxu0 0
      %390 = vmatpush.bf16.msra.mxu0 0
      %391 = vmatpush.bf16.msra.mxu0 0
      %392 = vmatpush.bf16.msra.mxu0 0
      %393 = vmatpush.bf16.msra.mxu0 0
      %394 = vmatpush.bf16.msra.mxu0 0
      %395 = vmatpush.bf16.msra.mxu0 %v382
      %396 = vmatpush.bf16.msra.mxu0 %v381
      %397 = vmatmul.bf16.gmra.mxu0 %v387
      %v398 = vpop.f32.mrf.mxu0
      %v399 = vadd.f32 0.0, %v398
      %v400 = vpop.f32.mrf.mxu0
      %401 = vdwg.mxu0
      %v406 = vunpack.c.l.b16 %v359
      %v407 = vunpack.c.l.b16 %v360
      %v408 = vunpack.c.l.b16 %v361
      %v409 = vunpack.c.l.b16 %v362
      %v410 = vpack.c.b16 %v407, %v406
      %v411 = vpack.c.b16 %v409, %v408
      %414 = vmatpush.bf16.msra.mxu0 0
      %415 = vmatpush.bf16.msra.mxu0 0
      %416 = vmatpush.bf16.msra.mxu0 0
      %417 = vmatpush.bf16.msra.mxu0 0
      %418 = vmatpush.bf16.msra.mxu0 0
      %419 = vmatpush.bf16.msra.mxu0 0
      %420 = vmatpush.bf16.msra.mxu0 %v411
      %421 = vmatpush.bf16.msra.mxu0 %v410
      %422 = vmatmul.bf16.gmra.mxu0 %v387
      %v423 = vpop.f32.mrf.mxu0
      %v424 = vadd.f32 0.0, %v423
      %v425 = vpop.f32.mrf.mxu0
      %426 = vdwg.mxu0
      %v431 = vunpack.c.l.b16 %v363
      %v432 = vunpack.c.l.b16 %v364
      %v433 = vunpack.c.l.b16 %v365
      %v434 = vunpack.c.l.b16 %v366
      %v435 = vpack.c.b16 %v432, %v431
      %v436 = vpack.c.b16 %v434, %v433
      %439 = vmatpush.bf16.msra.mxu0 0
      %440 = vmatpush.bf16.msra.mxu0 0
      %441 = vmatpush.bf16.msra.mxu0 0
      %442 = vmatpush.bf16.msra.mxu0 0
      %443 = vmatpush.bf16.msra.mxu0 0
      %444 = vmatpush.bf16.msra.mxu0 0
      %445 = vmatpush.bf16.msra.mxu0 %v436
      %446 = vmatpush.bf16.msra.mxu0 %v435
      %447 = vmatmul.bf16.gmra.mxu0 %v387
      %v448 = vpop.f32.mrf.mxu0
      %v449 = vadd.f32 0.0, %v448
      %v450 = vpop.f32.mrf.mxu0
      %451 = vdwg.mxu0
      %v453 = vperm.slane %v371, 0
      %v455 = vpack.c.bf16 %v399, %v399
      %v456 = vpack.c.bf16 %v424, %v424
      %v457 = vpack.c.bf16 %v449, %v449
      %vm458 = vcmask 64512
      %v460 = vsel %vm458, %v455, 0
      %v463 = vsel %vm458, %v456, 0
      %465 = vmatpush.bf16.xpose.msra.mxu0 0
      %466 = vmatpush.bf16.xpose.msra.mxu0 0
      %467 = vmatpush.bf16.xpose.msra.mxu0 0
      %468 = vmatpush.bf16.xpose.msra.mxu0 0
      %469 = vmatpush.bf16.xpose.msra.mxu0 0
      %470 = vmatpush.bf16.xpose.msra.mxu0 0
      %471 = vmatpush.bf16.xpose.msra.mxu0 0
      %472 = vmatpush.bf16.xpose.msra.mxu0 %v463
      %473 = vmatmul.bf16.gmra.mxu0 %v460
      %v474 = vpop.f32.mrf.mxu0
      %v475 = vadd.f32 0.0, %v474
      %v476 = vpop.f32.mrf.mxu0
      %477 = vdwg.mxu0
      %v478 = vsel %vm354, %v475, -1e+12
      %v479 = vmul.f32 %v478, 0.17677669
      %v480 = vsel %vm458, %v479, -inf
      %481 = vmax.xlane.f32.xlu0 %v480
      %v482 = vpop.xlane.xlu0 %481
      %v483 = vsub.f32 %v479, %v482
      %v484 = vmul.f32 %v483, 1.442695
      %v485 = vpow.pop %v484
      %v486 = vsel %vm458, %v485, 0.0
      %487 = vadd.xlane.f32.xlu0 %v486
      %v488 = vpop.xlane.xlu0 %487
      %v489 = vrcp.pop %v488
      %v490 = vmul.f32 %v488, %v489
      %v491 = vsub.f32 1.0, %v490
      %v492 = vmul.f32 %v489, %v491
      %v493 = vadd.f32 %v489, %v492
      %vm494 = vweird.f32 %v488
      %vm495 = vweird.f32 %v489
      %vm496 = vmor %vm494, %vm495
      %v497 = vsel %vm496, %v489, %v493
      %v498 = vand.u32 2147483647, %v488
      %vm499 = vcmp.eq.f32.partialorder %v498, 8.507059e+37
      %v500 = vand.u32 %v488, 2147483648
      %v501 = vor.u32 1.1754944e-38, %v500
      %v502 = vsel %vm499, %v501, %v497
      %v503 = vmul.f32 %v485, %v502
      %v504 = vpack.c.bf16 %v503, %v503
      %v506 = vsel %vm458, %v504, 0
      %vm508 = vcmask 1043456
      %v510 = vsel %vm508, %v457, 0
      %512 = vmatpush.bf16.msra.mxu0 0
      %513 = vmatpush.bf16.msra.mxu0 0
      %514 = vmatpush.bf16.msra.mxu0 0
      %515 = vmatpush.bf16.msra.mxu0 0
      %516 = vmatpush.bf16.msra.mxu0 0
      %517 = vmatpush.bf16.msra.mxu0 0
      %518 = vmatpush.bf16.msra.mxu0 0
      %519 = vmatpush.bf16.msra.mxu0 %v510
      %520 = vmatmul.bf16.gmra.mxu0 %v506
      %v521 = vpop.f32.mrf.mxu0
      %v522 = vadd.f32 0.0, %v521
      %v523 = vpop.f32.mrf.mxu0
      %524 = vdwg.mxu0
      %v525 = vpack.c.bf16 %v522, %v522
      %v527 = vsel %vm458, %v525, 0
      %v530 = vsel %vm508, %v367, 0
      %532 = vmatpush.bf16.msra.mxu0 0
      %533 = vmatpush.bf16.msra.mxu0 0
      %534 = vmatpush.bf16.msra.mxu0 0
      %535 = vmatpush.bf16.msra.mxu0 0
      %536 = vmatpush.bf16.msra.mxu0 0
      %537 = vmatpush.bf16.msra.mxu0 0
      %538 = vmatpush.bf16.msra.mxu0 0
      %539 = vmatpush.bf16.msra.mxu0 %v530
      %540 = vmatmul.bf16.gmra.mxu0 %v527
      %v541 = vpop.f32.mrf.mxu0
      %v542 = vadd.f32 0.0, %v541
      %v543 = vpop.f32.mrf.mxu0
      %544 = vdwg.mxu0
      %v545 = vadd.f32 %v453, %v542
      %547 = vrot.lane.b32.xlu0 %v455, 120
      %v548 = vpop.permute.xlu0 %547
      %550 = vrot.lane.b32.xlu0 %v456, 120
      %v551 = vpop.permute.xlu0 %550
      %v553 = vsel %vm458, %v548, 0
      %v556 = vsel %vm458, %v551, 0
      %558 = vmatpush.bf16.xpose.msra.mxu0 0
      %559 = vmatpush.bf16.xpose.msra.mxu0 0
      %560 = vmatpush.bf16.xpose.msra.mxu0 0
      %561 = vmatpush.bf16.xpose.msra.mxu0 0
      %562 = vmatpush.bf16.xpose.msra.mxu0 0
      %563 = vmatpush.bf16.xpose.msra.mxu0 0
      %564 = vmatpush.bf16.xpose.msra.mxu0 0
      %565 = vmatpush.bf16.xpose.msra.mxu0 %v556
      %566 = vmatmul.bf16.gmra.mxu0 %v553
      %v567 = vpop.f32.mrf.mxu0
      %v568 = vadd.f32 0.0, %v567
      %v569 = vpop.f32.mrf.mxu0
      %570 = vdwg.mxu0
      %v571 = vsel %vm354, %v568, -1e+12
      %v572 = vmul.f32 %v571, 0.17677669
      %v573 = vsel %vm458, %v572, -inf
      %574 = vmax.xlane.f32.xlu0 %v573
      %v575 = vpop.xlane.xlu0 %574
      %v576 = vsub.f32 %v572, %v575
      %v577 = vmul.f32 %v576, 1.442695
      %v578 = vpow.pop %v577
      %v579 = vsel %vm458, %v578, 0.0
      %580 = vadd.xlane.f32.xlu0 %v579
      %v581 = vpop.xlane.xlu0 %580
      %v582 = vrcp.pop %v581
      %v583 = vmul.f32 %v581, %v582
      %v584 = vsub.f32 1.0, %v583
      %v585 = vmul.f32 %v582, %v584
      %v586 = vadd.f32 %v582, %v585
      %vm587 = vweird.f32 %v581
      %vm588 = vweird.f32 %v582
      %vm589 = vmor %vm587, %vm588
      %v590 = vsel %vm589, %v582, %v586
      %v591 = vand.u32 2147483647, %v581
      %vm592 = vcmp.eq.f32.partialorder %v591, 8.507059e+37
      %v593 = vand.u32 %v581, 2147483648
      %v594 = vor.u32 1.1754944e-38, %v593
      %v595 = vsel %vm592, %v594, %v590
      %v596 = vmul.f32 %v578, %v595
      %v597 = vpack.c.bf16 %v596, %v596
      %599 = vrot.lane.b32.xlu0 %v457, 120
      %v600 = vpop.permute.xlu0 %599
      %v602 = vsel %vm458, %v597, 0
      %v605 = vsel %vm508, %v600, 0
      %607 = vmatpush.bf16.msra.mxu0 0
      %608 = vmatpush.bf16.msra.mxu0 0
      %609 = vmatpush.bf16.msra.mxu0 0
      %610 = vmatpush.bf16.msra.mxu0 0
      %611 = vmatpush.bf16.msra.mxu0 0
      %612 = vmatpush.bf16.msra.mxu0 0
      %613 = vmatpush.bf16.msra.mxu0 0
      %614 = vmatpush.bf16.msra.mxu0 %v605
      %615 = vmatmul.bf16.gmra.mxu0 %v602
      %v616 = vpop.f32.mrf.mxu0
      %v617 = vadd.f32 0.0, %v616
      %v618 = vpop.f32.mrf.mxu0
      %619 = vdwg.mxu0
      %v620 = vpack.c.bf16 %v617, %v617
      %v622 = vsel %vm458, %v620, 0
      %v625 = vsel %vm508, %v368, 0
      %627 = vmatpush.bf16.msra.mxu0 0
      %628 = vmatpush.bf16.msra.mxu0 0
      %629 = vmatpush.bf16.msra.mxu0 0
      %630 = vmatpush.bf16.msra.mxu0 0
      %631 = vmatpush.bf16.msra.mxu0 0
      %632 = vmatpush.bf16.msra.mxu0 0
      %633 = vmatpush.bf16.msra.mxu0 0
      %634 = vmatpush.bf16.msra.mxu0 %v625
      %635 = vmatmul.bf16.gmra.mxu0 %v622
      %v636 = vpop.f32.mrf.mxu0
      %v637 = vadd.f32 0.0, %v636
      %v638 = vpop.f32.mrf.mxu0
      %639 = vdwg.mxu0
      %v640 = vadd.f32 %v545, %v637
      %641 = vrot.lane.b32.xlu0 %v455, 112
      %v642 = vpop.permute.xlu0 %641
      %643 = vrot.lane.b32.xlu0 %v456, 112
      %v644 = vpop.permute.xlu0 %643
      %v646 = vsel %vm458, %v642, 0
      %v649 = vsel %vm458, %v644, 0
      %651 = vmatpush.bf16.xpose.msra.mxu0 0
      %652 = vmatpush.bf16.xpose.msra.mxu0 0
      %653 = vmatpush.bf16.xpose.msra.mxu0 0
      %654 = vmatpush.bf16.xpose.msra.mxu0 0
      %655 = vmatpush.bf16.xpose.msra.mxu0 0
      %656 = vmatpush.bf16.xpose.msra.mxu0 0
      %657 = vmatpush.bf16.xpose.msra.mxu0 0
      %658 = vmatpush.bf16.xpose.msra.mxu0 %v649
      %659 = vmatmul.bf16.gmra.mxu0 %v646
      %v660 = vpop.f32.mrf.mxu0
      %v661 = vadd.f32 0.0, %v660
      %v662 = vpop.f32.mrf.mxu0
      %663 = vdwg.mxu0
      %v664 = vsel %vm354, %v661, -1e+12
      %v665 = vmul.f32 %v664, 0.17677669
      %v666 = vsel %vm458, %v665, -inf
      %667 = vmax.xlane.f32.xlu0 %v666
      %v668 = vpop.xlane.xlu0 %667
      %v669 = vsub.f32 %v665, %v668
      %v670 = vmul.f32 %v669, 1.442695
      %v671 = vpow.pop %v670
      %v672 = vsel %vm458, %v671, 0.0
      %673 = vadd.xlane.f32.xlu0 %v672
      %v674 = vpop.xlane.xlu0 %673
      %v675 = vrcp.pop %v674
      %v676 = vmul.f32 %v674, %v675
      %v677 = vsub.f32 1.0, %v676
      %v678 = vmul.f32 %v675, %v677
      %v679 = vadd.f32 %v675, %v678
      %vm680 = vweird.f32 %v674
      %vm681 = vweird.f32 %v675
      %vm682 = vmor %vm680, %vm681
      %v683 = vsel %vm682, %v675, %v679
      %v684 = vand.u32 2147483647, %v674
      %vm685 = vcmp.eq.f32.partialorder %v684, 8.507059e+37
      %v686 = vand.u32 %v674, 2147483648
      %v687 = vor.u32 1.1754944e-38, %v686
      %v688 = vsel %vm685, %v687, %v683
      %v689 = vmul.f32 %v671, %v688
      %v690 = vpack.c.bf16 %v689, %v689
      %691 = vrot.lane.b32.xlu0 %v457, 112
      %v692 = vpop.permute.xlu0 %691
      %v694 = vsel %vm458, %v690, 0
      %v697 = vsel %vm508, %v692, 0
      %699 = vmatpush.bf16.msra.mxu0 0
      %700 = vmatpush.bf16.msra.mxu0 0
      %701 = vmatpush.bf16.msra.mxu0 0
      %702 = vmatpush.bf16.msra.mxu0 0
      %703 = vmatpush.bf16.msra.mxu0 0
      %704 = vmatpush.bf16.msra.mxu0 0
      %705 = vmatpush.bf16.msra.mxu0 0
      %706 = vmatpush.bf16.msra.mxu0 %v697
      %707 = vmatmul.bf16.gmra.mxu0 %v694
      %v708 = vpop.f32.mrf.mxu0
      %v709 = vadd.f32 0.0, %v708
      %v710 = vpop.f32.mrf.mxu0
      %711 = vdwg.mxu0
      %v712 = vpack.c.bf16 %v709, %v709
      %v714 = vsel %vm458, %v712, 0
      %v717 = vsel %vm508, %v369, 0
      %719 = vmatpush.bf16.msra.mxu0 0
      %720 = vmatpush.bf16.msra.mxu0 0
      %721 = vmatpush.bf16.msra.mxu0 0
      %722 = vmatpush.bf16.msra.mxu0 0
      %723 = vmatpush.bf16.msra.mxu0 0
      %724 = vmatpush.bf16.msra.mxu0 0
      %725 = vmatpush.bf16.msra.mxu0 0
      %726 = vmatpush.bf16.msra.mxu0 %v717
      %727 = vmatmul.bf16.gmra.mxu0 %v714
      %v728 = vpop.f32.mrf.mxu0
      %v729 = vadd.f32 0.0, %v728
      %v730 = vpop.f32.mrf.mxu0
      %731 = vdwg.mxu0
      %v732 = vadd.f32 %v640, %v729
      %733 = vrot.lane.b32.xlu0 %v455, 104
      %v734 = vpop.permute.xlu0 %733
      %735 = vrot.lane.b32.xlu0 %v456, 104
      %v736 = vpop.permute.xlu0 %735
      %v738 = vsel %vm458, %v734, 0
      %v741 = vsel %vm458, %v736, 0
      %743 = vmatpush.bf16.xpose.msra.mxu0 0
      %744 = vmatpush.bf16.xpose.msra.mxu0 0
      %745 = vmatpush.bf16.xpose.msra.mxu0 0
      %746 = vmatpush.bf16.xpose.msra.mxu0 0
      %747 = vmatpush.bf16.xpose.msra.mxu0 0
      %748 = vmatpush.bf16.xpose.msra.mxu0 0
      %749 = vmatpush.bf16.xpose.msra.mxu0 0
      %750 = vmatpush.bf16.xpose.msra.mxu0 %v741
      %751 = vmatmul.bf16.gmra.mxu0 %v738
      %v752 = vpop.f32.mrf.mxu0
      %v753 = vadd.f32 0.0, %v752
      %v754 = vpop.f32.mrf.mxu0
      %755 = vdwg.mxu0
      %v756 = vsel %vm354, %v753, -1e+12
      %v757 = vmul.f32 %v756, 0.17677669
      %v758 = vsel %vm458, %v757, -inf
      %759 = vmax.xlane.f32.xlu0 %v758
      %v760 = vpop.xlane.xlu0 %759
      %v761 = vsub.f32 %v757, %v760
      %v762 = vmul.f32 %v761, 1.442695
      %v763 = vpow.pop %v762
      %v764 = vsel %vm458, %v763, 0.0
      %765 = vadd.xlane.f32.xlu0 %v764
      %v766 = vpop.xlane.xlu0 %765
      %v767 = vrcp.pop %v766
      %v768 = vmul.f32 %v766, %v767
      %v769 = vsub.f32 1.0, %v768
      %v770 = vmul.f32 %v767, %v769
      %v771 = vadd.f32 %v767, %v770
      %vm772 = vweird.f32 %v766
      %vm773 = vweird.f32 %v767
      %vm774 = vmor %vm772, %vm773
      %v775 = vsel %vm774, %v767, %v771
      %v776 = vand.u32 2147483647, %v766
      %vm777 = vcmp.eq.f32.partialorder %v776, 8.507059e+37
      %v778 = vand.u32 %v766, 2147483648
      %v779 = vor.u32 1.1754944e-38, %v778
      %v780 = vsel %vm777, %v779, %v775
      %v781 = vmul.f32 %v763, %v780
      %v782 = vpack.c.bf16 %v781, %v781
      %783 = vrot.lane.b32.xlu0 %v457, 104
      %v784 = vpop.permute.xlu0 %783
      %v786 = vsel %vm458, %v782, 0
      %v789 = vsel %vm508, %v784, 0
      %791 = vmatpush.bf16.msra.mxu0 0
      %792 = vmatpush.bf16.msra.mxu0 0
      %793 = vmatpush.bf16.msra.mxu0 0
      %794 = vmatpush.bf16.msra.mxu0 0
      %795 = vmatpush.bf16.msra.mxu0 0
      %796 = vmatpush.bf16.msra.mxu0 0
      %797 = vmatpush.bf16.msra.mxu0 0
      %798 = vmatpush.bf16.msra.mxu0 %v789
      %799 = vmatmul.bf16.gmra.mxu0 %v786
      %v800 = vpop.f32.mrf.mxu0
      %v801 = vadd.f32 0.0, %v800
      %v802 = vpop.f32.mrf.mxu0
      %803 = vdwg.mxu0
      %v804 = vpack.c.bf16 %v801, %v801
      %v806 = vsel %vm458, %v804, 0
      %v809 = vsel %vm508, %v370, 0
      %811 = vmatpush.bf16.msra.mxu0 0
      %812 = vmatpush.bf16.msra.mxu0 0
      %813 = vmatpush.bf16.msra.mxu0 0
      %814 = vmatpush.bf16.msra.mxu0 0
      %815 = vmatpush.bf16.msra.mxu0 0
      %816 = vmatpush.bf16.msra.mxu0 0
      %817 = vmatpush.bf16.msra.mxu0 0
      %818 = vmatpush.bf16.msra.mxu0 %v809
      %819 = vmatmul.bf16.gmra.mxu0 %v806
      %v820 = vpop.f32.mrf.mxu0
      %v821 = vadd.f32 0.0, %v820
      %v822 = vpop.f32.mrf.mxu0
      %823 = vdwg.mxu0
      %v824 = vadd.f32 %v732, %v821
      %v825 = vadd.f32 %v824, %v343
      %v826 = vld [vmem:[%s7] sm:$0x1]
      %v827 = vld [vmem:[%s8] sm:$0x1]
      %v828 = vsel %vm385, %v825, 0.0
      %829 = vadd.xlane.f32.xlu0 %v828
      %v830 = vpop.xlane.xlu0 %829
      %v831 = vrcp.pop 32.0
      %v832 = vmul.f32 32.0, %v831
      %v833 = vsub.f32 1.0, %v832
      %v834 = vmul.f32 %v831, %v833
      %v835 = vadd.f32 %v831, %v834
      %vm836 = vweird.f32 %v831
      %v837 = vsel %vm836, %v831, %v835
      %v838 = vmul.f32 %v830, %v837
      %v839 = vsub.f32 %v825, %v838
      %v840 = vmul.f32 %v839, %v839
      %v841 = vsel %vm385, %v840, 0.0
      %842 = vadd.xlane.f32.xlu0 %v841
      %v843 = vpop.xlane.xlu0 %842
      %v844 = vmul.f32 %v843, %v837
      %v845 = vadd.f32 %v844, 1e-05
      %v846 = vrsqrt.pop %v845
      %v847 = vmul.f32 %v846, %v845
      %v848 = vmul.f32 %v847, %v846
      %v849 = vmul.f32 0.5, %v848
      %v850 = vsub.f32 1.5, %v849
      %v851 = vmul.f32 %v846, %v850
      %vm852 = vweird.f32 %v845
      %vm853 = vweird.f32 %v846
      %vm854 = vmor %vm852, %vm853
      %v855 = vsel %vm854, %v846, %v851
      %v856 = vmul.f32 %v839, %v855
      %v858 = vperm.slane %v826, 0
      %v860 = vmul.f32 %v856, %v858
      %v862 = vperm.slane %v827, 0
      %v864 = vadd.f32 %v860, %v862
      %865 = vst.msk [vmem:[%s341] sm:$0xff] %vm385, %v864
      %p866 = scmp.lt.s32.totalorder %s20, 1
      %s867 = scalar_select %p866, %s20, 1
      %s868 = smul.addr %s867, 8
      %s869 = scalar_lea.vmem %s9, %s868
      // Predicated region
      $region57: #{transformer_fwd.9} parent=55 // pred_check
        %p870 = pneg %p237
      $region58: #{transformer_fwd.9} parent=55 // pred_check_branch
        %872 = sbr.rel (%p870) target = $region60
      $region59: #{transformer_fwd.9} parent=55 // pred_region
        _
      $region60: #{transformer_fwd.9} parent=55 // pred_fallthru
        _
    $region56: #{transformer_fwd.9} parent=5 // pred_fallthru
      _
    %p873 = scmp.le.s32.totalorder 2, %s15
    // Predicated region
    $region61: #{transformer_fwd.9} parent=5 // pred_check
      %p874 = pneg %p873
    $region62: #{transformer_fwd.9} parent=5 // pred_check_branch
      %876 = sbr.rel (%p874) target = $region64
    $region63: #{transformer_fwd.9} parent=5 // pred_region
      %s877 = ssub.s32 %s15, 2
      // Predicated region
      $region65: #{transformer_fwd.9} parent=63 // pred_check
        %p878 = pneg %p243
      $region66: #{transformer_fwd.9} parent=63 // pred_check_branch
        %880 = sbr.rel (%p878) target = $region68
      $region67: #{transformer_fwd.9} parent=63 // pred_region
        %p881 = scmp.lt.s32.totalorder %s21, 1
        %s882 = scalar_select %p881, %s21, 1
        %s883 = smul.addr %s882, 8
        %s884 = scalar_lea.vmem %s9, %s883
      $region68: #{transformer_fwd.9} parent=63 // pred_fallthru
        _
    $region64: #{transformer_fwd.9} parent=5 // pred_fallthru
      _
  $region6: #{transformer_fwd.9} parent=0 // loop_footer
    %s19 = sadd.s32 1, %s15
  $region7: #{transformer_fwd.9} parent=0 // loop_footer_branch
    %14 = sbr.rel target = $region3
  $region8: #{transformer_fwd.9} parent=0 // loop_exit
    _

// kernel: transformer_fwd.12
$region0: #{transformer_fwd.12}
  #allocation0 [shape = 'u32[]', space=smem, size = 0x4, offset = 0x4, fixed_abs, tag = 'smem constant byte address 0x4 - core index']
  #allocation1 [shape = 'u32[72,128]{1,0:T(1,128)}', space=vmem, size = 0x9000, scoped, tag = 'internal scratch']
  %s0 = inlined_call_operand.vmem [shape: s32[2,1,8], index: 0, kind: input, shape index: {}]
  %s1 = inlined_call_operand.vmem [shape: f32[2,8,32], index: 1, kind: input, shape index: {}]
  %s2 = inlined_call_operand.vmem [shape: f32[2,8,32], index: 2, kind: input, shape index: {}]
  %s3 = inlined_call_operand.vmem [shape: bf16[32,32], index: 3, kind: input, shape index: {}]
  %s4 = inlined_call_operand.vmem [shape: bf16[32,32], index: 4, kind: input, shape index: {}]
  %s5 = inlined_call_operand.vmem [shape: bf16[32,32], index: 5, kind: input, shape index: {}]
  %s6 = inlined_call_operand.vmem [shape: bf16[32,32], index: 6, kind: input, shape index: {}]
  %s7 = inlined_call_operand.vmem [shape: f32[1,32], index: 7, kind: input, shape index: {}]
  %s8 = inlined_call_operand.vmem [shape: f32[1,32], index: 8, kind: input, shape index: {}]
  %s9 = inlined_call_operand.vmem [shape: f32[1,32], index: 9, kind: input, shape index: {}]
  %s10 = inlined_call_operand.vmem [shape: bf16[32,128], index: 10, kind: input, shape index: {}]
  %s11 = inlined_call_operand.vmem [shape: f32[1,128], index: 11, kind: input, shape index: {}]
  %s12 = inlined_call_operand.vmem [shape: bf16[128,32], index: 12, kind: input, shape index: {}]
  %s13 = inlined_call_operand.vmem [shape: f32[1,32], index: 13, kind: input, shape index: {}]
  %s14 = inlined_call_operand.hbm [shape: f32[1,32], index: 14, kind: input, shape index: {}]
  %s15 = inlined_call_operand.hbm [shape: f32[1,32], index: 15, kind: input, shape index: {}]
  %s16 = inlined_call_operand.vmem [shape: f32[2,8,32], index: 16, kind: output, shape index: {}]
  %s17 = sld [smem:[#allocation0]]
  $region105: #{transformer_fwd.12} parent=0
    _
  %s19 = ssub.s32 1, %s17
  %s20 = scalar_select 0, %s19, %s17
  $region1: #{transformer_fwd.12} parent=0
    #allocation2 [shape = 'u8[512]{0}', space=vmem, size = 0x400, scoped, tag = 'input window, operand 14, single buffered']
    #allocation3 [shape = 's32[2]{0}', space=sflag, size = 0x8, scoped, tag = 'scoped memory for transformer_fwd.12']
    #allocation4 [shape = 'u8[512]{0}', space=vmem, size = 0x400, scoped, tag = 'input window, operand 15, single buffered']
    #allocation5 [shape = 's32[1]{0}', space=sflag, size = 0x4, scoped, tag = 'scoped memory for transformer_fwd.12']
    %21 = vsyncpa [#allocation3], 0
    %22 = vsyncpa [#allocation5], 0
    loop: start=0, step=1, limit=4
    $region2: #{transformer_fwd.12} parent=1 // loop_pre_header
      _
    $region3: #{transformer_fwd.12} parent=1 // loop_header
      %s24 = sphi 0, %s28
      %p25 = scmp.ge.s32.totalorder %s24, 4
      %s34 = sphi 0, %s36
      %s37 = sphi 0, %s34
      %s38 = sphi 0, %s37
      %s54 = sphi 0, %s38
      %s60 = sphi 0, %s62
      %s63 = sphi 0, %s60
      %s64 = sphi 0, %s63
      %s80 = sphi 0, %s64
      %s86 = sphi 0, %s88
      %s89 = sphi 0, %s86
      %s90 = sphi 0, %s89
      %s106 = sphi 0, %s90
      %s110 = sphi 0, %s110
      %s112 = sphi 0, %s110
      %s113 = sphi 0, %s112
      %s127 = sphi 0, %s113
      %s131 = sphi 0, %s131
      %s133 = sphi 0, %s131
      %s134 = sphi 0, %s133
      %s148 = sphi 0, %s134
      %s152 = sphi 0, %s152
      %s154 = sphi 0, %s152
      %s155 = sphi 0, %s154
      %s169 = sphi 0, %s155
      %s173 = sphi 0, %s173
      %s175 = sphi 0, %s173
      %s176 = sphi 0, %s175
      %s190 = sphi 0, %s176
      %s194 = sphi 0, %s194
      %s196 = sphi 0, %s194
      %s197 = sphi 0, %s196
      %s211 = sphi 0, %s197
      %s215 = sphi 0, %s215
      %s217 = sphi 0, %s215
      %s218 = sphi 0, %s217
      %s232 = sphi 0, %s218
      %s236 = sphi 0, %s236
      %s238 = sphi 0, %s236
      %s239 = sphi 0, %s238
      %s253 = sphi 0, %s239
      %s257 = sphi 0, %s257
      %s259 = sphi 0, %s257
      %s260 = sphi 0, %s259
      %s274 = sphi 0, %s260
      %s278 = sphi 0, %s278
      %s280 = sphi 0, %s278
      %s281 = sphi 0, %s280
      %s295 = sphi 0, %s281
      %s299 = sphi 0, %s299
      %s301 = sphi 0, %s299
      %s302 = sphi 0, %s301
      %s316 = sphi 0, %s302
      %s320 = sphi 0, %s320
      %s322 = sphi 0, %s320
      %s323 = sphi 0, %s322
      %s337 = sphi 0, %s323
      %s341 = sphi 0, %s341
      %s343 = sphi 0, %s341
      %s344 = sphi 0, %s343
      %s358 = sphi 0, %s344
      %s362 = sphi 0, %s362
      %s364 = sphi 0, %s362
      %s365 = sphi 0, %s364
      %s379 = sphi 0, %s365
      %s385 = sphi 0, %s387
      %s388 = sphi 0, %s385
      %s389 = sphi 0, %s388
      %s405 = sphi 0, %s389
    $region4: #{transformer_fwd.12} parent=1 // loop_header_branch
      %27 = sbr.rel (%p25) target = $region8
    $region5: #{transformer_fwd.12} parent=1 // loop_body
      %s29 = ssub.s32 %s24, 1
      %s30 = ssub.s32 %s24, 2
      %s31 = sadd.s32 %s24, 1
      %s32 = ssub.s32 %s24, %s31
      %p33 = scmp.eq.s32.totalorder %s32, 0
      %s35 = sadd.s32 %s34, 1
      %s36 = scalar_select %p33, %s34, %s35
      %p39 = pneg %p33
      %p40 = scmp.eq.s32.totalorder %s24, 1
      %p41 = por %p39, %p40
      %p42 = scmp.ne.s32.totalorder %s34, %s37
      %p43 = scmp.eq.s32.totalorder %s24, 0
      %p44 = por %p42, %p43
      %p45 = scmp.ne.s32.totalorder %s34, %s37
      %p46 = scmp.eq.s32.totalorder %s29, 1
      %p47 = por %p45, %p46
      %p48 = scmp.ne.s32.totalorder %s37, %s38
      %p49 = scmp.eq.s32.totalorder %s29, 0
      %p50 = por %p48, %p49
      %p51 = scmp.ne.s32.totalorder %s37, %s38
      %p52 = scmp.eq.s32.totalorder %s30, 1
      %p53 = por %p51, %p52
      %p55 = scmp.ne.s32.totalorder %s38, %s54
      %p56 = scmp.eq.s32.totalorder %s30, 0
      %p57 = por %p55, %p56
      %s58 = ssub.s32 %s24, %s31
      %p59 = scmp.eq.s32.totalorder %s58, 0
      %s61 = sadd.s32 %s60, 1
      %s62 = scalar_select %p59, %s60, %s61
      %p65 = pneg %p59
      %p66 = scmp.eq.s32.totalorder %s24, 1
      %p67 = por %p65, %p66
      %p68 = scmp.ne.s32.totalorder %s60, %s63
      %p69 = scmp.eq.s32.totalorder %s24, 0
      %p70 = por %p68, %p69
      %p71 = scmp.ne.s32.totalorder %s60, %s63
      %p72 = scmp.eq.s32.totalorder %s29, 1
      %p73 = por %p71, %p72
      %p74 = scmp.ne.s32.totalorder %s63, %s64
      %p75 = scmp.eq.s32.totalorder %s29, 0
      %p76 = por %p74, %p75
      %p77 = scmp.ne.s32.totalorder %s63, %s64
      %p78 = scmp.eq.s32.totalorder %s30, 1
      %p79 = por %p77, %p78
      %p81 = scmp.ne.s32.totalorder %s64, %s80
      %p82 = scmp.eq.s32.totalorder %s30, 0
      %p83 = por %p81, %p82
      %s84 = ssub.s32 %s24, %s31
      %p85 = scmp.eq.s32.totalorder %s84, 0
      %s87 = sadd.s32 %s86, 1
      %s88 = scalar_select %p85, %s86, %s87
      %p91 = pneg %p85
      %p92 = scmp.eq.s32.totalorder %s24, 1
      %p93 = por %p91, %p92
      %p94 = scmp.ne.s32.totalorder %s86, %s89
      %p95 = scmp.eq.s32.totalorder %s24, 0
      %p96 = por %p94, %p95
      %p97 = scmp.ne.s32.totalorder %s86, %s89
      %p98 = scmp.eq.s32.totalorder %s29, 1
      %p99 = por %p97, %p98
      %p100 = scmp.ne.s32.totalorder %s89, %s90
      %p101 = scmp.eq.s32.totalorder %s29, 0
      %p102 = por %p100, %p101
      %p103 = scmp.ne.s32.totalorder %s89, %s90
      %p104 = scmp.eq.s32.totalorder %s30, 1
      %p105 = por %p103, %p104
      %p107 = scmp.ne.s32.totalorder %s90, %s106
      %p108 = scmp.eq.s32.totalorder %s30, 0
      %p109 = por %p107, %p108
      %s111 = sadd.s32 %s110, 1
      %p114 = scmp.eq.s32.totalorder %s24, 1
      %p115 = scmp.ne.s32.totalorder %s110, %s112
      %p116 = scmp.eq.s32.totalorder %s24, 0
      %p117 = por %p115, %p116
      %p118 = scmp.ne.s32.totalorder %s110, %s112
      %p119 = scmp.eq.s32.totalorder %s29, 1
      %p120 = por %p118, %p119
      %p121 = scmp.ne.s32.totalorder %s112, %s113
      %p122 = scmp.eq.s32.totalorder %s29, 0
      %p123 = por %p121, %p122
      %p124 = scmp.ne.s32.totalorder %s112, %s113
      %p125 = scmp.eq.s32.totalorder %s30, 1
      %p126 = por %p124, %p125
      %p128 = scmp.ne.s32.totalorder %s113, %s127
      %p129 = scmp.eq.s32.totalorder %s30, 0
      %p130 = por %p128, %p129
      %s132 = sadd.s32 %s131, 1
      %p135 = scmp.eq.s32.totalorder %s24, 1
      %p136 = scmp.ne.s32.totalorder %s131, %s133
      %p137 = scmp.eq.s32.totalorder %s24, 0
      %p138 = por %p136, %p137
      %p139 = scmp.ne.s32.totalorder %s131, %s133
      %p140 = scmp.eq.s32.totalorder %s29, 1
      %p141 = por %p139, %p140
      %p142 = scmp.ne.s32.totalorder %s133, %s134
      %p143 = scmp.eq.s32.totalorder %s29, 0
      %p144 = por %p142, %p143
      %p145 = scmp.ne.s32.totalorder %s133, %s134
      %p146 = scmp.eq.s32.totalorder %s30, 1
      %p147 = por %p145, %p146
      %p149 = scmp.ne.s32.totalorder %s134, %s148
      %p150 = scmp.eq.s32.totalorder %s30, 0
      %p151 = por %p149, %p150
      %s153 = sadd.s32 %s152, 1
      %p156 = scmp.eq.s32.totalorder %s24, 1
      %p157 = scmp.ne.s32.totalorder %s152, %s154
      %p158 = scmp.eq.s32.totalorder %s24, 0
      %p159 = por %p157, %p158
      %p160 = scmp.ne.s32.totalorder %s152, %s154
      %p161 = scmp.eq.s32.totalorder %s29, 1
      %p162 = por %p160, %p161
      %p163 = scmp.ne.s32.totalorder %s154, %s155
      %p164 = scmp.eq.s32.totalorder %s29, 0
      %p165 = por %p163, %p164
      %p166 = scmp.ne.s32.totalorder %s154, %s155
      %p167 = scmp.eq.s32.totalorder %s30, 1
      %p168 = por %p166, %p167
      %p170 = scmp.ne.s32.totalorder %s155, %s169
      %p171 = scmp.eq.s32.totalorder %s30, 0
      %p172 = por %p170, %p171
      %s174 = sadd.s32 %s173, 1
      %p177 = scmp.eq.s32.totalorder %s24, 1
      %p178 = scmp.ne.s32.totalorder %s173, %s175
      %p179 = scmp.eq.s32.totalorder %s24, 0
      %p180 = por %p178, %p179
      %p181 = scmp.ne.s32.totalorder %s173, %s175
      %p182 = scmp.eq.s32.totalorder %s29, 1
      %p183 = por %p181, %p182
      %p184 = scmp.ne.s32.totalorder %s175, %s176
      %p185 = scmp.eq.s32.totalorder %s29, 0
      %p186 = por %p184, %p185
      %p187 = scmp.ne.s32.totalorder %s175, %s176
      %p188 = scmp.eq.s32.totalorder %s30, 1
      %p189 = por %p187, %p188
      %p191 = scmp.ne.s32.totalorder %s176, %s190
      %p192 = scmp.eq.s32.totalorder %s30, 0
      %p193 = por %p191, %p192
      %s195 = sadd.s32 %s194, 1
      %p198 = scmp.eq.s32.totalorder %s24, 1
      %p199 = scmp.ne.s32.totalorder %s194, %s196
      %p200 = scmp.eq.s32.totalorder %s24, 0
      %p201 = por %p199, %p200
      %p202 = scmp.ne.s32.totalorder %s194, %s196
      %p203 = scmp.eq.s32.totalorder %s29, 1
      %p204 = por %p202, %p203
      %p205 = scmp.ne.s32.totalorder %s196, %s197
      %p206 = scmp.eq.s32.totalorder %s29, 0
      %p207 = por %p205, %p206
      %p208 = scmp.ne.s32.totalorder %s196, %s197
      %p209 = scmp.eq.s32.totalorder %s30, 1
      %p210 = por %p208, %p209
      %p212 = scmp.ne.s32.totalorder %s197, %s211
      %p213 = scmp.eq.s32.totalorder %s30, 0
      %p214 = por %p212, %p213
      %s216 = sadd.s32 %s215, 1
      %p219 = scmp.eq.s32.totalorder %s24, 1
      %p220 = scmp.ne.s32.totalorder %s215, %s217
      %p221 = scmp.eq.s32.totalorder %s24, 0
      %p222 = por %p220, %p221
      %p223 = scmp.ne.s32.totalorder %s215, %s217
      %p224 = scmp.eq.s32.totalorder %s29, 1
      %p225 = por %p223, %p224
      %p226 = scmp.ne.s32.totalorder %s217, %s218
      %p227 = scmp.eq.s32.totalorder %s29, 0
      %p228 = por %p226, %p227
      %p229 = scmp.ne.s32.totalorder %s217, %s218
      %p230 = scmp.eq.s32.totalorder %s30, 1
      %p231 = por %p229, %p230
      %p233 = scmp.ne.s32.totalorder %s218, %s232
      %p234 = scmp.eq.s32.totalorder %s30, 0
      %p235 = por %p233, %p234
      %s237 = sadd.s32 %s236, 1
      %p240 = scmp.eq.s32.totalorder %s24, 1
      %p241 = scmp.ne.s32.totalorder %s236, %s238
      %p242 = scmp.eq.s32.totalorder %s24, 0
      %p243 = por %p241, %p242
      %p244 = scmp.ne.s32.totalorder %s236, %s238
      %p245 = scmp.eq.s32.totalorder %s29, 1
      %p246 = por %p244, %p245
      %p247 = scmp.ne.s32.totalorder %s238, %s239
      %p248 = scmp.eq.s32.totalorder %s29, 0
      %p249 = por %p247, %p248
      %p250 = scmp.ne.s32.totalorder %s238, %s239
      %p251 = scmp.eq.s32.totalorder %s30, 1
      %p252 = por %p250, %p251
      %p254 = scmp.ne.s32.totalorder %s239, %s253
      %p255 = scmp.eq.s32.totalorder %s30, 0
      %p256 = por %p254, %p255
      %s258 = sadd.s32 %s257, 1
      %p261 = scmp.eq.s32.totalorder %s24, 1
      %p262 = scmp.ne.s32.totalorder %s257, %s259
      %p263 = scmp.eq.s32.totalorder %s24, 0
      %p264 = por %p262, %p263
      %p265 = scmp.ne.s32.totalorder %s257, %s259
      %p266 = scmp.eq.s32.totalorder %s29, 1
      %p267 = por %p265, %p266
      %p268 = scmp.ne.s32.totalorder %s259, %s260
      %p269 = scmp.eq.s32.totalorder %s29, 0
      %p270 = por %p268, %p269
      %p271 = scmp.ne.s32.totalorder %s259, %s260
      %p272 = scmp.eq.s32.totalorder %s30, 1
      %p273 = por %p271, %p272
      %p275 = scmp.ne.s32.totalorder %s260, %s274
      %p276 = scmp.eq.s32.totalorder %s30, 0
      %p277 = por %p275, %p276
      %s279 = sadd.s32 %s278, 1
      %p282 = scmp.eq.s32.totalorder %s24, 1
      %p283 = scmp.ne.s32.totalorder %s278, %s280
      %p284 = scmp.eq.s32.totalorder %s24, 0
      %p285 = por %p283, %p284
      %p286 = scmp.ne.s32.totalorder %s278, %s280
      %p287 = scmp.eq.s32.totalorder %s29, 1
      %p288 = por %p286, %p287
      %p289 = scmp.ne.s32.totalorder %s280, %s281
      %p290 = scmp.eq.s32.totalorder %s29, 0
      %p291 = por %p289, %p290
      %p292 = scmp.ne.s32.totalorder %s280, %s281
      %p293 = scmp.eq.s32.totalorder %s30, 1
      %p294 = por %p292, %p293
      %p296 = scmp.ne.s32.totalorder %s281, %s295
      %p297 = scmp.eq.s32.totalorder %s30, 0
      %p298 = por %p296, %p297
      %s300 = sadd.s32 %s299, 1
      %p303 = scmp.eq.s32.totalorder %s24, 1
      %p304 = scmp.ne.s32.totalorder %s299, %s301
      %p305 = scmp.eq.s32.totalorder %s24, 0
      %p306 = por %p304, %p305
      %p307 = scmp.ne.s32.totalorder %s299, %s301
      %p308 = scmp.eq.s32.totalorder %s29, 1
      %p309 = por %p307, %p308
      %p310 = scmp.ne.s32.totalorder %s301, %s302
      %p311 = scmp.eq.s32.totalorder %s29, 0
      %p312 = por %p310, %p311
      %p313 = scmp.ne.s32.totalorder %s301, %s302
      %p314 = scmp.eq.s32.totalorder %s30, 1
      %p315 = por %p313, %p314
      %p317 = scmp.ne.s32.totalorder %s302, %s316
      %p318 = scmp.eq.s32.totalorder %s30, 0
      %p319 = por %p317, %p318
      %s321 = sadd.s32 %s320, 1
      %p324 = scmp.eq.s32.totalorder %s24, 1
      %p325 = scmp.ne.s32.totalorder %s320, %s322
      %p326 = scmp.eq.s32.totalorder %s24, 0
      %p327 = por %p325, %p326
      %p328 = scmp.ne.s32.totalorder %s320, %s322
      %p329 = scmp.eq.s32.totalorder %s29, 1
      %p330 = por %p328, %p329
      %p331 = scmp.ne.s32.totalorder %s322, %s323
      %p332 = scmp.eq.s32.totalorder %s29, 0
      %p333 = por %p331, %p332
      %p334 = scmp.ne.s32.totalorder %s322, %s323
      %p335 = scmp.eq.s32.totalorder %s30, 1
      %p336 = por %p334, %p335
      %p338 = scmp.ne.s32.totalorder %s323, %s337
      %p339 = scmp.eq.s32.totalorder %s30, 0
      %p340 = por %p338, %p339
      %s342 = sadd.s32 %s341, 1
      %p345 = scmp.eq.s32.totalorder %s24, 1
      %p346 = scmp.ne.s32.totalorder %s341, %s343
      %p347 = scmp.eq.s32.totalorder %s24, 0
      %p348 = por %p346, %p347
      %p349 = scmp.ne.s32.totalorder %s341, %s343
      %p350 = scmp.eq.s32.totalorder %s29, 1
      %p351 = por %p349, %p350
      %p352 = scmp.ne.s32.totalorder %s343, %s344
      %p353 = scmp.eq.s32.totalorder %s29, 0
      %p354 = por %p352, %p353
      %p355 = scmp.ne.s32.totalorder %s343, %s344
      %p356 = scmp.eq.s32.totalorder %s30, 1
      %p357 = por %p355, %p356
      %p359 = scmp.ne.s32.totalorder %s344, %s358
      %p360 = scmp.eq.s32.totalorder %s30, 0
      %p361 = por %p359, %p360
      %s363 = sadd.s32 %s362, 1
      %p366 = scmp.eq.s32.totalorder %s24, 1
      %p367 = scmp.ne.s32.totalorder %s362, %s364
      %p368 = scmp.eq.s32.totalorder %s24, 0
      %p369 = por %p367, %p368
      %p370 = scmp.ne.s32.totalorder %s362, %s364
      %p371 = scmp.eq.s32.totalorder %s29, 1
      %p372 = por %p370, %p371
      %p373 = scmp.ne.s32.totalorder %s364, %s365
      %p374 = scmp.eq.s32.totalorder %s29, 0
      %p375 = por %p373, %p374
      %p376 = scmp.ne.s32.totalorder %s364, %s365
      %p377 = scmp.eq.s32.totalorder %s30, 1
      %p378 = por %p376, %p377
      %p380 = scmp.ne.s32.totalorder %s365, %s379
      %p381 = scmp.eq.s32.totalorder %s30, 0
      %p382 = por %p380, %p381
      %s383 = ssub.s32 %s24, %s31
      %p384 = scmp.eq.s32.totalorder %s383, 0
      %s386 = sadd.s32 %s385, 1
      %s387 = scalar_select %p384, %s385, %s386
      %p390 = pneg %p384
      %p391 = scmp.eq.s32.totalorder %s24, 1
      %p392 = por %p390, %p391
      %p393 = scmp.ne.s32.totalorder %s385, %s388
      %p394 = scmp.eq.s32.totalorder %s24, 0
      %p395 = por %p393, %p394
      %p396 = scmp.ne.s32.totalorder %s385, %s388
      %p397 = scmp.eq.s32.totalorder %s29, 1
      %p398 = por %p396, %p397
      %p399 = scmp.ne.s32.totalorder %s388, %s389
      %p400 = scmp.eq.s32.totalorder %s29, 0
      %p401 = por %p399, %p400
      %p402 = scmp.ne.s32.totalorder %s388, %s389
      %p403 = scmp.eq.s32.totalorder %s30, 1
      %p404 = por %p402, %p403
      %p406 = scmp.ne.s32.totalorder %s389, %s405
      %p407 = scmp.eq.s32.totalorder %s30, 0
      %p408 = por %p406, %p407
      %p409 = scmp.le.s32.totalorder 1, %s24
      %p410 = scmp.lt.s32.totalorder %s24, 3
      %p411 = pnand %p409, %p410
      %p412 = pneg %p411
      // Predicated region
      $region9: #{transformer_fwd.12} parent=5 // pred_check
        _
      $region10: #{transformer_fwd.12} parent=5 // pred_check_branch
        %414 = sbr.rel (%p411) target = $region12
      $region11: #{transformer_fwd.12} parent=5 // pred_region
        %s415 = ssub.s32 %s24, 1
        // Predicated region
        $region13: #{transformer_fwd.12} parent=11 // pred_check
          %p416 = pneg %p123
        $region14: #{transformer_fwd.12} parent=11 // pred_check_branch
          %418 = sbr.rel (%p416) target = $region16
        $region15: #{transformer_fwd.12} parent=11 // pred_region
          _
        $region16: #{transformer_fwd.12} parent=11 // pred_fallthru
          _
        // Predicated region
        $region17: #{transformer_fwd.12} parent=11 // pred_check
          %p419 = pneg %p144
        $region18: #{transformer_fwd.12} parent=11 // pred_check_branch
          %421 = sbr.rel (%p419) target = $region20
        $region19: #{transformer_fwd.12} parent=11 // pred_region
          _
        $region20: #{transformer_fwd.12} parent=11 // pred_fallthru
          _
        // Predicated region
        $region21: #{transformer_fwd.12} parent=11 // pred_check
          %p422 = pneg %p165
        $region22: #{transformer_fwd.12} parent=11 // pred_check_branch
          %424 = sbr.rel (%p422) target = $region24
        $region23: #{transformer_fwd.12} parent=11 // pred_region
          _
        $region24: #{transformer_fwd.12} parent=11 // pred_fallthru
          _
        // Predicated region
        $region25: #{transformer_fwd.12} parent=11 // pred_check
          %p425 = pneg %p186
        $region26: #{transformer_fwd.12} parent=11 // pred_check_branch
          %427 = sbr.rel (%p425) target = $region28
        $region27: #{transformer_fwd.12} parent=11 // pred_region
          _
        $region28: #{transformer_fwd.12} parent=11 // pred_fallthru
          _
        // Predicated region
        $region29: #{transformer_fwd.12} parent=11 // pred_check
          %p428 = pneg %p207
        $region30: #{transformer_fwd.12} parent=11 // pred_check_branch
          %430 = sbr.rel (%p428) target = $region32
        $region31: #{transformer_fwd.12} parent=11 // pred_region
          _
        $region32: #{transformer_fwd.12} parent=11 // pred_fallthru
          _
        // Predicated region
        $region33: #{transformer_fwd.12} parent=11 // pred_check
          %p431 = pneg %p228
        $region34: #{transformer_fwd.12} parent=11 // pred_check_branch
          %433 = sbr.rel (%p431) target = $region36
        $region35: #{transformer_fwd.12} parent=11 // pred_region
          _
        $region36: #{transformer_fwd.12} parent=11 // pred_fallthru
          _
        // Predicated region
        $region37: #{transformer_fwd.12} parent=11 // pred_check
          %p434 = pneg %p249
        $region38: #{transformer_fwd.12} parent=11 // pred_check_branch
          %436 = sbr.rel (%p434) target = $region40
        $region39: #{transformer_fwd.12} parent=11 // pred_region
          _
        $region40: #{transformer_fwd.12} parent=11 // pred_fallthru
          _
        // Predicated region
        $region41: #{transformer_fwd.12} parent=11 // pred_check
          %p437 = pneg %p270
        $region42: #{transformer_fwd.12} parent=11 // pred_check_branch
          %439 = sbr.rel (%p437) target = $region44
        $region43: #{transformer_fwd.12} parent=11 // pred_region
          _
        $region44: #{transformer_fwd.12} parent=11 // pred_fallthru
          _
        // Predicated region
        $region45: #{transformer_fwd.12} parent=11 // pred_check
          %p440 = pneg %p291
        $region46: #{transformer_fwd.12} parent=11 // pred_check_branch
          %442 = sbr.rel (%p440) target = $region48
        $region47: #{transformer_fwd.12} parent=11 // pred_region
          _
        $region48: #{transformer_fwd.12} parent=11 // pred_fallthru
          _
        // Predicated region
        $region49: #{transformer_fwd.12} parent=11 // pred_check
          %p443 = pneg %p312
        $region50: #{transformer_fwd.12} parent=11 // pred_check_branch
          %445 = sbr.rel (%p443) target = $region52
        $region51: #{transformer_fwd.12} parent=11 // pred_region
          _
        $region52: #{transformer_fwd.12} parent=11 // pred_fallthru
          _
        // Predicated region
        $region53: #{transformer_fwd.12} parent=11 // pred_check
          %p446 = pneg %p333
        $region54: #{transformer_fwd.12} parent=11 // pred_check_branch
          %448 = sbr.rel (%p446) target = $region56
        $region55: #{transformer_fwd.12} parent=11 // pred_region
          _
        $region56: #{transformer_fwd.12} parent=11 // pred_fallthru
          _
        // Predicated region
        $region57: #{transformer_fwd.12} parent=11 // pred_check
          %p449 = pneg %p354
        $region58: #{transformer_fwd.12} parent=11 // pred_check_branch
          %451 = sbr.rel (%p449) target = $region60
        $region59: #{transformer_fwd.12} parent=11 // pred_region
          %453 = vsyncadd [#allocation3], 0
          %s455 = sshll.u32 %s14, 4
          %s456 = int_to_ptr.hbm [resolvable:$true] %s455
          %s457 = sshll.u32 [#allocation2], 4
          %s458 = int_to_ptr.vmem [resolvable:$true] %s457
          %460 = dma.hbm_to_vmem [thread:$0]  %s456, 16, %s458, [#allocation3]
        $region60: #{transformer_fwd.12} parent=11 // pred_fallthru
          _
        // Predicated region
        $region61: #{transformer_fwd.12} parent=11 // pred_check
          %p461 = pneg %p375
        $region62: #{transformer_fwd.12} parent=11 // pred_check_branch
          %463 = sbr.rel (%p461) target = $region64
        $region63: #{transformer_fwd.12} parent=11 // pred_region
          %465 = vsyncadd [#allocation5], 0
          %s467 = sshll.u32 %s15, 4
          %s468 = int_to_ptr.hbm [resolvable:$true] %s467
          %s469 = sshll.u32 [#allocation4], 4
          %s470 = int_to_ptr.vmem [resolvable:$true] %s469
          %472 = dma.hbm_to_vmem [thread:$0]  %s468, 16, %s470, [#allocation5]
        $region64: #{transformer_fwd.12} parent=11 // pred_fallthru
          _
      $region12: #{transformer_fwd.12} parent=5 // pred_fallthru
        _
      %p473 = scmp.lt.s32.totalorder %s24, 2
      // Predicated region
      $region65: #{transformer_fwd.12} parent=5 // pred_check
        %p474 = pneg %p473
      $region66: #{transformer_fwd.12} parent=5 // pred_check_branch
        %476 = sbr.rel (%p474) target = $region68
      $region67: #{transformer_fwd.12} parent=5 // pred_region
        // Predicated region
        $region69: #{transformer_fwd.12} parent=67 // pred_check
          %p477 = pneg %p44
        $region70: #{transformer_fwd.12} parent=67 // pred_check_branch
          %479 = sbr.rel (%p477) target = $region72
        $region71: #{transformer_fwd.12} parent=67 // pred_region
          %p480 = scmp.lt.s32.totalorder %s24, 1
          %s481 = scalar_select %p480, %s24, 1
          %s482 = scalar_lea.vmem %s0, %s481
        $region72: #{transformer_fwd.12} parent=67 // pred_fallthru
          _
        // Predicated region
        $region73: #{transformer_fwd.12} parent=67 // pred_check
          %p483 = pneg %p70
        $region74: #{transformer_fwd.12} parent=67 // pred_check_branch
          %485 = sbr.rel (%p483) target = $region76
        $region75: #{transformer_fwd.12} parent=67 // pred_region
          %p486 = scmp.lt.s32.totalorder %s24, 1
          %s487 = scalar_select %p486, %s24, 1
          %s488 = smul.addr %s487, 8
          %s489 = scalar_lea.vmem %s1, %s488
        $region76: #{transformer_fwd.12} parent=67 // pred_fallthru
          _
        // Predicated region
        $region77: #{transformer_fwd.12} parent=67 // pred_check
          %p490 = pneg %p96
        $region78: #{transformer_fwd.12} parent=67 // pred_check_branch
          %492 = sbr.rel (%p490) target = $region80
        $region79: #{transformer_fwd.12} parent=67 // pred_region
          %p493 = scmp.lt.s32.totalorder %s24, 1
          %s494 = scalar_select %p493, %s24, 1
          %s495 = smul.addr %s494, 8
          %s496 = scalar_lea.vmem %s2, %s495
        $region80: #{transformer_fwd.12} parent=67 // pred_fallthru
          _
      $region68: #{transformer_fwd.12} parent=5 // pred_fallthru
        _
      %p497 = scmp.le.s32.totalorder 1, %s24
      %p498 = scmp.lt.s32.totalorder %s24, 3
      %p499 = pnand %p497, %p498
      %p500 = pneg %p499
      // Predicated region
      $region81: #{transformer_fwd.12} parent=5 // pred_check
        _
      $region82: #{transformer_fwd.12} parent=5 // pred_check_branch
        %502 = sbr.rel (%p499) target = $region84
      $region83: #{transformer_fwd.12} parent=5 // pred_region
        %s503 = ssub.s32 %s24, 1
        // Predicated region
        $region85: #{transformer_fwd.12} parent=83 // pred_check
          %p504 = pneg %p354
        $region86: #{transformer_fwd.12} parent=83 // pred_check_branch
          %506 = sbr.rel (%p504) target = $region88
        $region87: #{transformer_fwd.12} parent=83 // pred_region
          %508 = dma.done [#allocation3], 16
        $region88: #{transformer_fwd.12} parent=83 // pred_fallthru
          _
        // Predicated region
        $region89: #{transformer_fwd.12} parent=83 // pred_check
          %p509 = pneg %p375
        $region90: #{transformer_fwd.12} parent=83 // pred_check_branch
          %511 = sbr.rel (%p509) target = $region92
        $region91: #{transformer_fwd.12} parent=83 // pred_region
          %513 = dma.done [#allocation5], 16
        $region92: #{transformer_fwd.12} parent=83 // pred_fallthru
          _
        %p514 = scmp.lt.s32.totalorder %s29, 1
        %s515 = scalar_select %p514, %s29, 1
        %s516 = scalar_lea.vmem %s0, %s515
        %p517 = pneg %p50
        %p518 = pneg %p47
        %p519 = scmp.lt.s32.totalorder %s29, 1
        %s520 = scalar_select %p519, %s29, 1
        %s521 = smul.addr %s520, 8
        %s522 = scalar_lea.vmem %s1, %s521
        %p523 = pneg %p76
        %p524 = pneg %p73
        %p525 = scmp.lt.s32.totalorder %s29, 1
        %s526 = scalar_select %p525, %s29, 1
        %s527 = smul.addr %s526, 8
        %s528 = scalar_lea.vmem %s2, %s527
        %p529 = pneg %p102
        %p530 = pneg %p99
        %p531 = pneg %p123
        %p532 = pneg %p120
        %p533 = pneg %p144
        %p534 = pneg %p141
        %p535 = pneg %p165
        %p536 = pneg %p162
        %p537 = pneg %p186
        %p538 = pneg %p183
        %p539 = pneg %p207
        %p540 = pneg %p204
        %p541 = pneg %p228
        %p542 = pneg %p225
        %p543 = pneg %p249
        %p544 = pneg %p246
        %p545 = pneg %p270
        %p546 = pneg %p267
        %p547 = pneg %p291
        %p548 = pneg %p288
        %p549 = pneg %p312
        %p550 = pneg %p309
        %p551 = pneg %p333
        %p552 = pneg %p330
        %p553 = pneg %p354
        %p554 = pneg %p351
        %p555 = pneg %p375
        %p556 = pneg %p372
        %p557 = pneg %p401
        %p558 = pneg %p398
        %p559 = scmp.lt.s32.totalorder %s29, 1
        %s560 = scalar_select %p559, %s29, 1
        %s561 = smul.addr %s560, 8
        %s562 = scalar_lea.vmem %s16, %s561
        %p563 = scmp.lt.s32.totalorder %s29, 1
        %s564 = scalar_select %p563, %s29, 1
        %s565 = scalar_lea.vmem %s0, %s564
        %p566 = scmp.lt.s32.totalorder %s29, 1
        %s567 = scalar_select %p566, %s29, 1
        %s568 = smul.addr %s567, 8
        %s569 = scalar_lea.vmem %s1, %s568
        %p570 = scmp.lt.s32.totalorder %s29, 1
        %s571 = scalar_select %p570, %s29, 1
        %s572 = smul.addr %s571, 8
        %s573 = scalar_lea.vmem %s2, %s572
        %p574 = scmp.lt.s32.totalorder %s29, 1
        %s575 = scalar_select %p574, %s29, 1
        %s576 = smul.addr %s575, 8
        %s577 = scalar_lea.vmem %s16, %s576
        %v579 = vld [vmem:[%s569] sm:$0xff]
        %v580 = vld [vmem:[%s573] sm:$0xff]
        %v581 = vld [vmem:[%s565] sm:$0x1]
        %vm582 = vcmp.ne.s32.totalorder %v581, 0
        %v583 = vsel %vm582, 1, 0
        %v584 = vperm.slane %v583, 0
        %vm585 = vcmp.eq.s32.totalorder %v584, 1
        %v586 = vld [vmem:[%s3] sm:$0xf]
        %v587 = vld [vmem:[%s3 + $0x4] sm:$0xf]
        %v588 = vld [vmem:[%s3 + $0x8] sm:$0xf]
        %v589 = vld [vmem:[%s3 + $0xc] sm:$0xf]
        %v590 = vld [vmem:[%s4] sm:$0xf]
        %v591 = vld [vmem:[%s4 + $0x4] sm:$0xf]
        %v592 = vld [vmem:[%s4 + $0x8] sm:$0xf]
        %v593 = vld [vmem:[%s4 + $0xc] sm:$0xf]
        %v594 = vld [vmem:[%s5] sm:$0xf]
        %v595 = vld [vmem:[%s5 + $0x4] sm:$0xf]
        %v596 = vld [vmem:[%s5 + $0x8] sm:$0xf]
        %v597 = vld [vmem:[%s5 + $0xc] sm:$0xf]
        %v598 = vld [vmem:[%s6] sm:$0xf]
        %v599 = vld [vmem:[%s6 + $0x4] sm:$0xf]
        %v600 = vld [vmem:[%s6 + $0x8] sm:$0xf]
        %v601 = vld [vmem:[%s6 + $0xc] sm:$0xf]
        %v602 = vld [vmem:[%s7] sm:$0x1]
        %v603 = vpack.c.bf16 %v579, %v579
        %v604 = vpack.c.bf16 %v580, %v580
        %v609 = vunpack.c.l.b16 %v586
        %v610 = vunpack.c.l.b16 %v587
        %v611 = vunpack.c.l.b16 %v588
        %v612 = vunpack.c.l.b16 %v589
        %v613 = vpack.c.b16 %v610, %v609
        %v614 = vpack.c.b16 %v612, %v611
        %vm617 = vcmask 261120
        %v619 = vsel %vm617, %v603, 0
        %621 = vmatpush.bf16.msra.mxu0 0
        %622 = vmatpush.bf16.msra.mxu0 0
        %623 = vmatpush.bf16.msra.mxu0 0
        %624 = vmatpush.bf16.msra.mxu0 0
        %625 = vmatpush.bf16.msra.mxu0 0
        %626 = vmatpush.bf16.msra.mxu0 0
        %627 = vmatpush.bf16.msra.mxu0 %v614
        %628 = vmatpush.bf16.msra.mxu0 %v613
        %629 = vmatmul.bf16.gmra.mxu0 %v619
        %v630 = vpop.f32.mrf.mxu0
        %v631 = vadd.f32 0.0, %v630
        %v632 = vpop.f32.mrf.mxu0
        %633 = vdwg.mxu0
        %v638 = vunpack.c.l.b16 %v590
        %v639 = vunpack.c.l.b16 %v591
        %v640 = vunpack.c.l.b16 %v592
        %v641 = vunpack.c.l.b16 %v593
        %v642 = vpack.c.b16 %v639, %v638
        %v643 = vpack.c.b16 %v641, %v640
        %v647 = vsel %vm617, %v604, 0
        %649 = vmatpush.bf16.msra.mxu0 0
        %650 = vmatpush.bf16.msra.mxu0 0
        %651 = vmatpush.bf16.msra.mxu0 0
        %652 = vmatpush.bf16.msra.mxu0 0
        %653 = vmatpush.bf16.msra.mxu0 0
        %654 = vmatpush.bf16.msra.mxu0 0
        %655 = vmatpush.bf16.msra.mxu0 %v643
        %656 = vmatpush.bf16.msra.mxu0 %v642
        %657 = vmatmul.bf16.gmra.mxu0 %v647
        %v658 = vpop.f32.mrf.mxu0
        %v659 = vadd.f32 0.0, %v658
        %v660 = vpop.f32.mrf.mxu0
        %661 = vdwg.mxu0
        %v666 = vunpack.c.l.b16 %v594
        %v667 = vunpack.c.l.b16 %v595
        %v668 = vunpack.c.l.b16 %v596
        %v669 = vunpack.c.l.b16 %v597
        %v670 = vpack.c.b16 %v667, %v666
        %v671 = vpack.c.b16 %v669, %v668
        %674 = vmatpush.bf16.msra.mxu0 0
        %675 = vmatpush.bf16.msra.mxu0 0
        %676 = vmatpush.bf16.msra.mxu0 0
        %677 = vmatpush.bf16.msra.mxu0 0
        %678 = vmatpush.bf16.msra.mxu0 0
        %679 = vmatpush.bf16.msra.mxu0 0
        %680 = vmatpush.bf16.msra.mxu0 %v671
        %681 = vmatpush.bf16.msra.mxu0 %v670
        %682 = vmatmul.bf16.gmra.mxu0 %v647
        %v683 = vpop.f32.mrf.mxu0
        %v684 = vadd.f32 0.0, %v683
        %v685 = vpop.f32.mrf.mxu0
        %686 = vdwg.mxu0
        %v688 = vperm.slane %v602, 0
        %v690 = vpack.c.bf16 %v631, %v631
        %v691 = vpack.c.bf16 %v659, %v659
        %v692 = vpack.c.bf16 %v684, %v684
        %vm693 = vcmask 64512
        %v695 = vsel %vm693, %v690, 0
        %v698 = vsel %vm693, %v691, 0
        %700 = vmatpush.bf16.xpose.msra.mxu0 0
        %701 = vmatpush.bf16.xpose.msra.mxu0 0
        %702 = vmatpush.bf16.xpose.msra.mxu0 0
        %703 = vmatpush.bf16.xpose.msra.mxu0 0
        %704 = vmatpush.bf16.xpose.msra.mxu0 0
        %705 = vmatpush.bf16.xpose.msra.mxu0 0
        %706 = vmatpush.bf16.xpose.msra.mxu0 0
        %707 = vmatpush.bf16.xpose.msra.mxu0 %v698
        %708 = vmatmul.bf16.gmra.mxu0 %v695
        %v709 = vpop.f32.mrf.mxu0
        %v710 = vadd.f32 0.0, %v709
        %v711 = vpop.f32.mrf.mxu0
        %712 = vdwg.mxu0
        %v713 = vsel %vm585, %v710, -1e+12
        %v714 = vmul.f32 %v713, 0.17677669
        %v715 = vsel %vm693, %v714, -inf
        %716 = vmax.xlane.f32.xlu0 %v715
        %v717 = vpop.xlane.xlu0 %716
        %v718 = vsub.f32 %v714, %v717
        %v719 = vmul.f32 %v718, 1.442695
        %v720 = vpow.pop %v719
        %v721 = vsel %vm693, %v720, 0.0
        %722 = vadd.xlane.f32.xlu0 %v721
        %v723 = vpop.xlane.xlu0 %722
        %v724 = vrcp.pop %v723
        %v725 = vmul.f32 %v723, %v724
        %v726 = vsub.f32 1.0, %v725
        %v727 = vmul.f32 %v724, %v726
        %v728 = vadd.f32 %v724, %v727
        %vm729 = vweird.f32 %v723
        %vm730 = vweird.f32 %v724
        %vm731 = vmor %vm729, %vm730
        %v732 = vsel %vm731, %v724, %v728
        %v733 = vand.u32 2147483647, %v723
        %vm734 = vcmp.eq.f32.partialorder %v733, 8.507059e+37
        %v735 = vand.u32 %v723, 2147483648
        %v736 = vor.u32 1.1754944e-38, %v735
        %v737 = vsel %vm734, %v736, %v732
        %v738 = vmul.f32 %v720, %v737
        %v739 = vpack.c.bf16 %v738, %v738
        %v741 = vsel %vm693, %v739, 0
        %vm743 = vcmask 1043456
        %v745 = vsel %vm743, %v692, 0
        %747 = vmatpush.bf16.msra.mxu0 0
        %748 = vmatpush.bf16.msra.mxu0 0
        %749 = vmatpush.bf16.msra.mxu0 0
        %750 = vmatpush.bf16.msra.mxu0 0
        %751 = vmatpush.bf16.msra.mxu0 0
        %752 = vmatpush.bf16.msra.mxu0 0
        %753 = vmatpush.bf16.msra.mxu0 0
        %754 = vmatpush.bf16.msra.mxu0 %v745
        %755 = vmatmul.bf16.gmra.mxu0 %v741
        %v756 = vpop.f32.mrf.mxu0
        %v757 = vadd.f32 0.0, %v756
        %v758 = vpop.f32.mrf.mxu0
        %759 = vdwg.mxu0
        %v760 = vpack.c.bf16 %v757, %v757
        %v762 = vsel %vm693, %v760, 0
        %v765 = vsel %vm743, %v598, 0
        %767 = vmatpush.bf16.msra.mxu0 0
        %768 = vmatpush.bf16.msra.mxu0 0
        %769 = vmatpush.bf16.msra.mxu0 0
        %770 = vmatpush.bf16.msra.mxu0 0
        %771 = vmatpush.bf16.msra.mxu0 0
        %772 = vmatpush.bf16.msra.mxu0 0
        %773 = vmatpush.bf16.msra.mxu0 0
        %774 = vmatpush.bf16.msra.mxu0 %v765
        %775 = vmatmul.bf16.gmra.mxu0 %v762
        %v776 = vpop.f32.mrf.mxu0
        %v777 = vadd.f32 0.0, %v776
        %v778 = vpop.f32.mrf.mxu0
        %779 = vdwg.mxu0
        %v780 = vadd.f32 %v688, %v777
        %782 = vrot.lane.b32.xlu0 %v690, 120
        %v783 = vpop.permute.xlu0 %782
        %785 = vrot.lane.b32.xlu0 %v691, 120
        %v786 = vpop.permute.xlu0 %785
        %v788 = vsel %vm693, %v783, 0
        %v791 = vsel %vm693, %v786, 0
        %793 = vmatpush.bf16.xpose.msra.mxu0 0
        %794 = vmatpush.bf16.xpose.msra.mxu0 0
        %795 = vmatpush.bf16.xpose.msra.mxu0 0
        %796 = vmatpush.bf16.xpose.msra.mxu0 0
        %797 = vmatpush.bf16.xpose.msra.mxu0 0
        %798 = vmatpush.bf16.xpose.msra.mxu0 0
        %799 = vmatpush.bf16.xpose.msra.mxu0 0
        %800 = vmatpush.bf16.xpose.msra.mxu0 %v791
        %801 = vmatmul.bf16.gmra.mxu0 %v788
        %v802 = vpop.f32.mrf.mxu0
        %v803 = vadd.f32 0.0, %v802
        %v804 = vpop.f32.mrf.mxu0
        %805 = vdwg.mxu0
        %v806 = vsel %vm585, %v803, -1e+12
        %v807 = vmul.f32 %v806, 0.17677669
        %v808 = vsel %vm693, %v807, -inf
        %809 = vmax.xlane.f32.xlu0 %v808
        %v810 = vpop.xlane.xlu0 %809
        %v811 = vsub.f32 %v807, %v810
        %v812 = vmul.f32 %v811, 1.442695
        %v813 = vpow.pop %v812
        %v814 = vsel %vm693, %v813, 0.0
        %815 = vadd.xlane.f32.xlu0 %v814
        %v816 = vpop.xlane.xlu0 %815
        %v817 = vrcp.pop %v816
        %v818 = vmul.f32 %v816, %v817
        %v819 = vsub.f32 1.0, %v818
        %v820 = vmul.f32 %v817, %v819
        %v821 = vadd.f32 %v817, %v820
        %vm822 = vweird.f32 %v816
        %vm823 = vweird.f32 %v817
        %vm824 = vmor %vm822, %vm823
        %v825 = vsel %vm824, %v817, %v821
        %v826 = vand.u32 2147483647, %v816
        %vm827 = vcmp.eq.f32.partialorder %v826, 8.507059e+37
        %v828 = vand.u32 %v816, 2147483648
        %v829 = vor.u32 1.1754944e-38, %v828
        %v830 = vsel %vm827, %v829, %v825
        %v831 = vmul.f32 %v813, %v830
        %v832 = vpack.c.bf16 %v831, %v831
        %834 = vrot.lane.b32.xlu0 %v692, 120
        %v835 = vpop.permute.xlu0 %834
        %v837 = vsel %vm693, %v832, 0
        %v840 = vsel %vm743, %v835, 0
        %842 = vmatpush.bf16.msra.mxu0 0
        %843 = vmatpush.bf16.msra.mxu0 0
        %844 = vmatpush.bf16.msra.mxu0 0
        %845 = vmatpush.bf16.msra.mxu0 0
        %846 = vmatpush.bf16.msra.mxu0 0
        %847 = vmatpush.bf16.msra.mxu0 0
        %848 = vmatpush.bf16.msra.mxu0 0
        %849 = vmatpush.bf16.msra.mxu0 %v840
        %850 = vmatmul.bf16.gmra.mxu0 %v837
        %v851 = vpop.f32.mrf.mxu0
        %v852 = vadd.f32 0.0, %v851
        %v853 = vpop.f32.mrf.mxu0
        %854 = vdwg.mxu0
        %v855 = vpack.c.bf16 %v852, %v852
        %v857 = vsel %vm693, %v855, 0
        %v860 = vsel %vm743, %v599, 0
        %862 = vmatpush.bf16.msra.mxu0 0
        %863 = vmatpush.bf16.msra.mxu0 0
        %864 = vmatpush.bf16.msra.mxu0 0
        %865 = vmatpush.bf16.msra.mxu0 0
        %866 = vmatpush.bf16.msra.mxu0 0
        %867 = vmatpush.bf16.msra.mxu0 0
        %868 = vmatpush.bf16.msra.mxu0 0
        %869 = vmatpush.bf16.msra.mxu0 %v860
        %870 = vmatmul.bf16.gmra.mxu0 %v857
        %v871 = vpop.f32.mrf.mxu0
        %v872 = vadd.f32 0.0, %v871
        %v873 = vpop.f32.mrf.mxu0
        %874 = vdwg.mxu0
        %v875 = vadd.f32 %v780, %v872
        %876 = vrot.lane.b32.xlu0 %v690, 112
        %v877 = vpop.permute.xlu0 %876
        %878 = vrot.lane.b32.xlu0 %v691, 112
        %v879 = vpop.permute.xlu0 %878
        %v881 = vsel %vm693, %v877, 0
        %v884 = vsel %vm693, %v879, 0
        %886 = vmatpush.bf16.xpose.msra.mxu0 0
        %887 = vmatpush.bf16.xpose.msra.mxu0 0
        %888 = vmatpush.bf16.xpose.msra.mxu0 0
        %889 = vmatpush.bf16.xpose.msra.mxu0 0
        %890 = vmatpush.bf16.xpose.msra.mxu0 0
        %891 = vmatpush.bf16.xpose.msra.mxu0 0
        %892 = vmatpush.bf16.xpose.msra.mxu0 0
        %893 = vmatpush.bf16.xpose.msra.mxu0 %v884
        %894 = vmatmul.bf16.gmra.mxu0 %v881
        %v895 = vpop.f32.mrf.mxu0
        %v896 = vadd.f32 0.0, %v895
        %v897 = vpop.f32.mrf.mxu0
        %898 = vdwg.mxu0
        %v899 = vsel %vm585, %v896, -1e+12
        %v900 = vmul.f32 %v899, 0.17677669
        %v901 = vsel %vm693, %v900, -inf
        %902 = vmax.xlane.f32.xlu0 %v901
        %v903 = vpop.xlane.xlu0 %902
        %v904 = vsub.f32 %v900, %v903
        %v905 = vmul.f32 %v904, 1.442695
        %v906 = vpow.pop %v905
        %v907 = vsel %vm693, %v906, 0.0
        %908 = vadd.xlane.f32.xlu0 %v907
        %v909 = vpop.xlane.xlu0 %908
        %v910 = vrcp.pop %v909
        %v911 = vmul.f32 %v909, %v910
        %v912 = vsub.f32 1.0, %v911
        %v913 = vmul.f32 %v910, %v912
        %v914 = vadd.f32 %v910, %v913
        %vm915 = vweird.f32 %v909
        %vm916 = vweird.f32 %v910
        %vm917 = vmor %vm915, %vm916
        %v918 = vsel %vm917, %v910, %v914
        %v919 = vand.u32 2147483647, %v909
        %vm920 = vcmp.eq.f32.partialorder %v919, 8.507059e+37
        %v921 = vand.u32 %v909, 2147483648
        %v922 = vor.u32 1.1754944e-38, %v921
        %v923 = vsel %vm920, %v922, %v918
        %v924 = vmul.f32 %v906, %v923
        %v925 = vpack.c.bf16 %v924, %v924
        %926 = vrot.lane.b32.xlu0 %v692, 112
        %v927 = vpop.permute.xlu0 %926
        %v929 = vsel %vm693, %v925, 0
        %v932 = vsel %vm743, %v927, 0
        %934 = vmatpush.bf16.msra.mxu0 0
        %935 = vmatpush.bf16.msra.mxu0 0
        %936 = vmatpush.bf16.msra.mxu0 0
        %937 = vmatpush.bf16.msra.mxu0 0
        %938 = vmatpush.bf16.msra.mxu0 0
        %939 = vmatpush.bf16.msra.mxu0 0
        %940 = vmatpush.bf16.msra.mxu0 0
        %941 = vmatpush.bf16.msra.mxu0 %v932
        %942 = vmatmul.bf16.gmra.mxu0 %v929
        %v943 = vpop.f32.mrf.mxu0
        %v944 = vadd.f32 0.0, %v943
        %v945 = vpop.f32.mrf.mxu0
        %946 = vdwg.mxu0
        %v947 = vpack.c.bf16 %v944, %v944
        %v949 = vsel %vm693, %v947, 0
        %v952 = vsel %vm743, %v600, 0
        %954 = vmatpush.bf16.msra.mxu0 0
        %955 = vmatpush.bf16.msra.mxu0 0
        %956 = vmatpush.bf16.msra.mxu0 0
        %957 = vmatpush.bf16.msra.mxu0 0
        %958 = vmatpush.bf16.msra.mxu0 0
        %959 = vmatpush.bf16.msra.mxu0 0
        %960 = vmatpush.bf16.msra.mxu0 0
        %961 = vmatpush.bf16.msra.mxu0 %v952
        %962 = vmatmul.bf16.gmra.mxu0 %v949
        %v963 = vpop.f32.mrf.mxu0
        %v964 = vadd.f32 0.0, %v963
        %v965 = vpop.f32.mrf.mxu0
        %966 = vdwg.mxu0
        %v967 = vadd.f32 %v875, %v964
        %968 = vrot.lane.b32.xlu0 %v690, 104
        %v969 = vpop.permute.xlu0 %968
        %970 = vrot.lane.b32.xlu0 %v691, 104
        %v971 = vpop.permute.xlu0 %970
        %v973 = vsel %vm693, %v969, 0
        %v976 = vsel %vm693, %v971, 0
        %978 = vmatpush.bf16.xpose.msra.mxu0 0
        %979 = vmatpush.bf16.xpose.msra.mxu0 0
        %980 = vmatpush.bf16.xpose.msra.mxu0 0
        %981 = vmatpush.bf16.xpose.msra.mxu0 0
        %982 = vmatpush.bf16.xpose.msra.mxu0 0
        %983 = vmatpush.bf16.xpose.msra.mxu0 0
        %984 = vmatpush.bf16.xpose.msra.mxu0 0
        %985 = vmatpush.bf16.xpose.msra.mxu0 %v976
        %986 = vmatmul.bf16.gmra.mxu0 %v973
        %v987 = vpop.f32.mrf.mxu0
        %v988 = vadd.f32 0.0, %v987
        %v989 = vpop.f32.mrf.mxu0
        %990 = vdwg.mxu0
        %v991 = vsel %vm585, %v988, -1e+12
        %v992 = vmul.f32 %v991, 0.17677669
        %v993 = vsel %vm693, %v992, -inf
        %994 = vmax.xlane.f32.xlu0 %v993
        %v995 = vpop.xlane.xlu0 %994
        %v996 = vsub.f32 %v992, %v995
        %v997 = vmul.f32 %v996, 1.442695
        %v998 = vpow.pop %v997
        %v999 = vsel %vm693, %v998, 0.0
        %1000 = vadd.xlane.f32.xlu0 %v999
        %v1001 = vpop.xlane.xlu0 %1000
        %v1002 = vrcp.pop %v1001
        %v1003 = vmul.f32 %v1001, %v1002
        %v1004 = vsub.f32 1.0, %v1003
        %v1005 = vmul.f32 %v1002, %v1004
        %v1006 = vadd.f32 %v1002, %v1005
        %vm1007 = vweird.f32 %v1001
        %vm1008 = vweird.f32 %v1002
        %vm1009 = vmor %vm1007, %vm1008
        %v1010 = vsel %vm1009, %v1002, %v1006
        %v1011 = vand.u32 2147483647, %v1001
        %vm1012 = vcmp.eq.f32.partialorder %v1011, 8.507059e+37
        %v1013 = vand.u32 %v1001, 2147483648
        %v1014 = vor.u32 1.1754944e-38, %v1013
        %v1015 = vsel %vm1012, %v1014, %v1010
        %v1016 = vmul.f32 %v998, %v1015
        %v1017 = vpack.c.bf16 %v1016, %v1016
        %1018 = vrot.lane.b32.xlu0 %v692, 104
        %v1019 = vpop.permute.xlu0 %1018
        %v1021 = vsel %vm693, %v1017, 0
        %v1024 = vsel %vm743, %v1019, 0
        %1026 = vmatpush.bf16.msra.mxu0 0
        %1027 = vmatpush.bf16.msra.mxu0 0
        %1028 = vmatpush.bf16.msra.mxu0 0
        %1029 = vmatpush.bf16.msra.mxu0 0
        %1030 = vmatpush.bf16.msra.mxu0 0
        %1031 = vmatpush.bf16.msra.mxu0 0
        %1032 = vmatpush.bf16.msra.mxu0 0
        %1033 = vmatpush.bf16.msra.mxu0 %v1024
        %1034 = vmatmul.bf16.gmra.mxu0 %v1021
        %v1035 = vpop.f32.mrf.mxu0
        %v1036 = vadd.f32 0.0, %v1035
        %v1037 = vpop.f32.mrf.mxu0
        %1038 = vdwg.mxu0
        %v1039 = vpack.c.bf16 %v1036, %v1036
        %v1041 = vsel %vm693, %v1039, 0
        %v1044 = vsel %vm743, %v601, 0
        %1046 = vmatpush.bf16.msra.mxu0 0
        %1047 = vmatpush.bf16.msra.mxu0 0
        %1048 = vmatpush.bf16.msra.mxu0 0
        %1049 = vmatpush.bf16.msra.mxu0 0
        %1050 = vmatpush.bf16.msra.mxu0 0
        %1051 = vmatpush.bf16.msra.mxu0 0
        %1052 = vmatpush.bf16.msra.mxu0 0
        %1053 = vmatpush.bf16.msra.mxu0 %v1044
        %1054 = vmatmul.bf16.gmra.mxu0 %v1041
        %v1055 = vpop.f32.mrf.mxu0
        %v1056 = vadd.f32 0.0, %v1055
        %v1057 = vpop.f32.mrf.mxu0
        %1058 = vdwg.mxu0
        %v1059 = vadd.f32 %v967, %v1056
        %v1060 = vadd.f32 %v1059, %v579
        %v1061 = vld [vmem:[%s8] sm:$0x1]
        %v1062 = vld [vmem:[%s9] sm:$0x1]
        %v1063 = vsel %vm617, %v1060, 0.0
        %1064 = vadd.xlane.f32.xlu0 %v1063
        %v1065 = vpop.xlane.xlu0 %1064
        %v1066 = vrcp.pop 32.0
        %v1067 = vmul.f32 32.0, %v1066
        %v1068 = vsub.f32 1.0, %v1067
        %v1069 = vmul.f32 %v1066, %v1068
        %v1070 = vadd.f32 %v1066, %v1069
        %vm1071 = vweird.f32 %v1066
        %v1072 = vsel %vm1071, %v1066, %v1070
        %v1073 = vmul.f32 %v1065, %v1072
        %v1074 = vsub.f32 %v1060, %v1073
        %v1075 = vmul.f32 %v1074, %v1074
        %v1076 = vsel %vm617, %v1075, 0.0
        %1077 = vadd.xlane.f32.xlu0 %v1076
        %v1078 = vpop.xlane.xlu0 %1077
        %v1079 = vmul.f32 %v1078, %v1072
        %v1080 = vadd.f32 %v1079, 1e-05
        %v1081 = vrsqrt.pop %v1080
        %v1082 = vmul.f32 %v1081, %v1080
        %v1083 = vmul.f32 %v1082, %v1081
        %v1084 = vmul.f32 0.5, %v1083
        %v1085 = vsub.f32 1.5, %v1084
        %v1086 = vmul.f32 %v1081, %v1085
        %vm1087 = vweird.f32 %v1080
        %vm1088 = vweird.f32 %v1081
        %vm1089 = vmor %vm1087, %vm1088
        %v1090 = vsel %vm1089, %v1081, %v1086
        %v1091 = vmul.f32 %v1074, %v1090
        %v1093 = vperm.slane %v1061, 0
        %v1095 = vmul.f32 %v1091, %v1093
        %v1097 = vperm.slane %v1062, 0
        %v1099 = vadd.f32 %v1095, %v1097
        %v1100 = vld [vmem:[%s10] sm:$0xf]
        %v1101 = vld [vmem:[%s10 + $0x4] sm:$0xf]
        %v1102 = vld [vmem:[%s10 + $0x8] sm:$0xf]
        %v1103 = vld [vmem:[%s10 + $0xc] sm:$0xf]
        %v1104 = vld [vmem:[%s11] sm:$0x1]
        %v1105 = vld [vmem:[%s12] sm:$0xf]
        %v1106 = vld [vmem:[%s12 + $0x4] sm:$0xf]
        %v1107 = vld [vmem:[%s12 + $0x8] sm:$0xf]
        %v1108 = vld [vmem:[%s12 + $0xc] sm:$0xf]
        %v1109 = vld [vmem:[%s12 + $0x10] sm:$0xf]
        %v1110 = vld [vmem:[%s12 + $0x14] sm:$0xf]
        %v1111 = vld [vmem:[%s12 + $0x18] sm:$0xf]
        %v1112 = vld [vmem:[%s12 + $0x1c] sm:$0xf]
        %v1113 = vld [vmem:[%s12 + $0x20] sm:$0xf]
        %v1114 = vld [vmem:[%s12 + $0x24] sm:$0xf]
        %v1115 = vld [vmem:[%s12 + $0x28] sm:$0xf]
        %v1116 = vld [vmem:[%s12 + $0x2c] sm:$0xf]
        %v1117 = vld [vmem:[%s12 + $0x30] sm:$0xf]
        %v1118 = vld [vmem:[%s12 + $0x34] sm:$0xf]
        %v1119 = vld [vmem:[%s12 + $0x38] sm:$0xf]
        %v1120 = vld [vmem:[%s12 + $0x3c] sm:$0xf]
        %v1121 = vld [vmem:[%s13] sm:$0x1]
        %v1122 = vpack.c.bf16 %v1099, %v1099
        %v1124 = vperm.slane %v1104, 0
        %v1130 = vunpack.c.l.b16 %v1100
        %v1131 = vunpack.c.l.b16 %v1101
        %v1132 = vunpack.c.l.b16 %v1102
        %v1133 = vunpack.c.l.b16 %v1103
        %v1134 = vpack.c.b16 %v1131, %v1130
        %v1135 = vpack.c.b16 %v1133, %v1132
        %v1139 = vsel %vm617, %v1122, 0
        %1141 = vmatpush.bf16.msra.mxu0 0
        %1142 = vmatpush.bf16.msra.mxu0 0
        %1143 = vmatpush.bf16.msra.mxu0 0
        %1144 = vmatpush.bf16.msra.mxu0 0
        %1145 = vmatpush.bf16.msra.mxu0 0
        %1146 = vmatpush.bf16.msra.mxu0 0
        %1147 = vmatpush.bf16.msra.mxu0 %v1135
        %1148 = vmatpush.bf16.msra.mxu0 %v1134
        %1149 = vmatmul.bf16.gmra.mxu0 %v1139
        %v1150 = vpop.f32.mrf.mxu0
        %v1151 = vadd.f32 %v1124, %v1150
        %v1152 = vpop.f32.mrf.mxu0
        %1153 = vdwg.mxu0
        %v1154 = vmax.f32 %v1151, 0.0
        %v1155 = vpack.c.bf16 %v1154, %v1154
        %v1157 = vperm.slane %v1121, 0
        %v1175 = vunpack.c.l.b16 %v1105
        %v1176 = vunpack.c.l.b16 %v1106
        %v1177 = vunpack.c.l.b16 %v1107
        %v1178 = vunpack.c.l.b16 %v1108
        %v1179 = vunpack.c.l.b16 %v1109
        %v1180 = vunpack.c.l.b16 %v1110
        %v1181 = vunpack.c.l.b16 %v1111
        %v1182 = vunpack.c.l.b16 %v1112
        %v1183 = vunpack.c.l.b16 %v1113
        %v1184 = vunpack.c.l.b16 %v1114
        %v1185 = vunpack.c.l.b16 %v1115
        %v1186 = vunpack.c.l.b16 %v1116
        %v1187 = vunpack.c.l.b16 %v1117
        %v1188 = vunpack.c.l.b16 %v1118
        %v1189 = vunpack.c.l.b16 %v1119
        %v1190 = vunpack.c.l.b16 %v1120
        %v1191 = vpack.c.b16 %v1176, %v1175
        %v1192 = vpack.c.b16 %v1178, %v1177
        %v1193 = vpack.c.b16 %v1180, %v1179
        %v1194 = vpack.c.b16 %v1182, %v1181
        %v1195 = vpack.c.b16 %v1184, %v1183
        %v1196 = vpack.c.b16 %v1186, %v1185
        %v1197 = vpack.c.b16 %v1188, %v1187
        %v1198 = vpack.c.b16 %v1190, %v1189
        %1207 = vmatpush.bf16.msra.mxu0 %v1198
        %1208 = vmatpush.bf16.msra.mxu0 %v1197
        %1209 = vmatpush.bf16.msra.mxu0 %v1196
        %1210 = vmatpush.bf16.msra.mxu0 %v1195
        %1211 = vmatpush.bf16.msra.mxu0 %v1194
        %1212 = vmatpush.bf16.msra.mxu0 %v1193
        %1213 = vmatpush.bf16.msra.mxu0 %v1192
        %1214 = vmatpush.bf16.msra.mxu0 %v1191
        %1215 = vmatmul.bf16.gmra.mxu0 %v1155
        %v1216 = vpop.f32.mrf.mxu0
        %v1217 = vadd.f32 %v1157, %v1216
        %v1218 = vpop.f32.mrf.mxu0
        %1219 = vdwg.mxu0
        %v1220 = vadd.f32 %v1217, %v1099
        %v1221 = vld [vmem:[#allocation2] sm:$0x1]
        %v1222 = vld [vmem:[#allocation4] sm:$0x1]
        %v1223 = vsel %vm617, %v1220, 0.0
        %1224 = vadd.xlane.f32.xlu0 %v1223
        %v1225 = vpop.xlane.xlu0 %1224
        %v1226 = vmul.f32 %v1225, %v1072
        %v1227 = vsub.f32 %v1220, %v1226
        %v1228 = vmul.f32 %v1227, %v1227
        %v1229 = vsel %vm617, %v1228, 0.0
        %1230 = vadd.xlane.f32.xlu0 %v1229
        %v1231 = vpop.xlane.xlu0 %1230
        %v1232 = vmul.f32 %v1231, %v1072
        %v1233 = vadd.f32 %v1232, 1e-05
        %v1234 = vrsqrt.pop %v1233
        %v1235 = vmul.f32 %v1234, %v1233
        %v1236 = vmul.f32 %v1235, %v1234
        %v1237 = vmul.f32 0.5, %v1236
        %v1238 = vsub.f32 1.5, %v1237
        %v1239 = vmul.f32 %v1234, %v1238
        %vm1240 = vweird.f32 %v1233
        %vm1241 = vweird.f32 %v1234
        %vm1242 = vmor %vm1240, %vm1241
        %v1243 = vsel %vm1242, %v1234, %v1239
        %v1244 = vmul.f32 %v1227, %v1243
        %v1246 = vperm.slane %v1221, 0
        %v1248 = vmul.f32 %v1244, %v1246
        %v1250 = vperm.slane %v1222, 0
        %v1252 = vadd.f32 %v1248, %v1250
        %1253 = vst.msk [vmem:[%s577] sm:$0xff] %vm617, %v1252
        %p1254 = scmp.lt.s32.totalorder %s29, 1
        %s1255 = scalar_select %p1254, %s29, 1
        %s1256 = smul.addr %s1255, 8
        %s1257 = scalar_lea.vmem %s16, %s1256
        // Predicated region
        $region93: #{transformer_fwd.12} parent=83 // pred_check
          %p1258 = pneg %p398
        $region94: #{transformer_fwd.12} parent=83 // pred_check_branch
          %1260 = sbr.rel (%p1258) target = $region96
        $region95: #{transformer_fwd.12} parent=83 // pred_region
          _
        $region96: #{transformer_fwd.12} parent=83 // pred_fallthru
          _
      $region84: #{transformer_fwd.12} parent=5 // pred_fallthru
        _
      %p1261 = scmp.le.s32.totalorder 2, %s24
      // Predicated region
      $region97: #{transformer_fwd.12} parent=5 // pred_check
        %p1262 = pneg %p1261
      $region98: #{transformer_fwd.12} parent=5 // pred_check_branch
        %1264 = sbr.rel (%p1262) target = $region100
      $region99: #{transformer_fwd.12} parent=5 // pred_region
        %s1265 = ssub.s32 %s24, 2
        // Predicated region
        $region101: #{transformer_fwd.12} parent=99 // pred_check
          %p1266 = pneg %p404
        $region102: #{transformer_fwd.12} parent=99 // pred_check_branch
          %1268 = sbr.rel (%p1266) target = $region104
        $region103: #{transformer_fwd.12} parent=99 // pred_region
          %p1269 = scmp.lt.s32.totalorder %s30, 1
          %s1270 = scalar_select %p1269, %s30, 1
          %s1271 = smul.addr %s1270, 8
          %s1272 = scalar_lea.vmem %s16, %s1271
        $region104: #{transformer_fwd.12} parent=99 // pred_fallthru
          _
      $region100: #{transformer_fwd.12} parent=5 // pred_fallthru
        _
    $region6: #{transformer_fwd.12} parent=1 // loop_footer
      %s28 = sadd.s32 1, %s24
    $region7: #{transformer_fwd.12} parent=1 // loop_footer_branch
      %23 = sbr.rel target = $region3
    $region8: #{transformer_fwd.12} parent=1 // loop_exit
      _
    %1273 = vsyncpa [#allocation3], 1
    %s1274 = scalar_lea.sflag [#allocation3], 1
    %1275 = vsyncpa %s1274, 1
    %1276 = vsyncpa [#allocation5], 1

// kernel: transformer_fwd.7
$region0: #{transformer_fwd.7}
  #allocation0 [shape = 'u32[]', space=smem, size = 0x4, offset = 0x4, fixed_abs, tag = 'smem constant byte address 0x4 - core index']
  #allocation1 [shape = 'u32[72,128]{1,0:T(1,128)}', space=vmem, size = 0x9000, scoped, tag = 'internal scratch']
  %s0 = inlined_call_operand.vmem [shape: s32[2,1,8], index: 0, kind: input, shape index: {}]
  %s1 = inlined_call_operand.vmem [shape: f32[2,8,32], index: 1, kind: input, shape index: {}, may-alias: {1,2}]
  %s2 = inlined_call_operand.vmem [shape: f32[2,8,32], index: 2, kind: input, shape index: {}, may-alias: {1,2}]
  %s3 = inlined_call_operand.vmem [shape: bf16[32,32], index: 3, kind: input, shape index: {}]
  %s4 = inlined_call_operand.vmem [shape: bf16[32,32], index: 4, kind: input, shape index: {}]
  %s5 = inlined_call_operand.vmem [shape: bf16[32,32], index: 5, kind: input, shape index: {}]
  %s6 = inlined_call_operand.vmem [shape: bf16[32,32], index: 6, kind: input, shape index: {}]
  %s7 = inlined_call_operand.vmem [shape: f32[1,32], index: 7, kind: input, shape index: {}]
  %s8 = inlined_call_operand.vmem [shape: f32[1,32], index: 8, kind: input, shape index: {}]
  %s9 = inlined_call_operand.vmem [shape: f32[1,32], index: 9, kind: input, shape index: {}]
  %s10 = inlined_call_operand.vmem [shape: bf16[32,128], index: 10, kind: input, shape index: {}]
  %s11 = inlined_call_operand.vmem [shape: f32[1,128], index: 11, kind: input, shape index: {}]
  %s12 = inlined_call_operand.vmem [shape: bf16[128,32], index: 12, kind: input, shape index: {}]
  %s13 = inlined_call_operand.vmem [shape: f32[1,32], index: 13, kind: input, shape index: {}]
  %s14 = inlined_call_operand.vmem [shape: f32[1,32], index: 14, kind: input, shape index: {}]
  %s15 = inlined_call_operand.vmem [shape: f32[1,32], index: 15, kind: input, shape index: {}]
  %s16 = inlined_call_operand.vmem [shape: f32[2,8,32], index: 16, kind: output, shape index: {}]
  %s17 = sld [smem:[#allocation0]]
  $region97: #{transformer_fwd.7} parent=0
    _
  %s19 = ssub.s32 1, %s17
  %s20 = scalar_select 0, %s19, %s17
  loop: start=0, step=1, limit=4
  $region2: #{transformer_fwd.7} parent=0 // loop_pre_header
    _
  $region3: #{transformer_fwd.7} parent=0 // loop_header
    %s22 = sphi 0, %s26
    %p23 = scmp.ge.s32.totalorder %s22, 4
    %s32 = sphi 0, %s34
    %s35 = sphi 0, %s32
    %s36 = sphi 0, %s35
    %s52 = sphi 0, %s36
    %s58 = sphi 0, %s60
    %s61 = sphi 0, %s58
    %s62 = sphi 0, %s61
    %s78 = sphi 0, %s62
    %s84 = sphi 0, %s86
    %s87 = sphi 0, %s84
    %s88 = sphi 0, %s87
    %s104 = sphi 0, %s88
    %s108 = sphi 0, %s108
    %s110 = sphi 0, %s108
    %s111 = sphi 0, %s110
    %s125 = sphi 0, %s111
    %s129 = sphi 0, %s129
    %s131 = sphi 0, %s129
    %s132 = sphi 0, %s131
    %s146 = sphi 0, %s132
    %s150 = sphi 0, %s150
    %s152 = sphi 0, %s150
    %s153 = sphi 0, %s152
    %s167 = sphi 0, %s153
    %s171 = sphi 0, %s171
    %s173 = sphi 0, %s171
    %s174 = sphi 0, %s173
    %s188 = sphi 0, %s174
    %s192 = sphi 0, %s192
    %s194 = sphi 0, %s192
    %s195 = sphi 0, %s194
    %s209 = sphi 0, %s195
    %s213 = sphi 0, %s213
    %s215 = sphi 0, %s213
    %s216 = sphi 0, %s215
    %s230 = sphi 0, %s216
    %s234 = sphi 0, %s234
    %s236 = sphi 0, %s234
    %s237 = sphi 0, %s236
    %s251 = sphi 0, %s237
    %s255 = sphi 0, %s255
    %s257 = sphi 0, %s255
    %s258 = sphi 0, %s257
    %s272 = sphi 0, %s258
    %s276 = sphi 0, %s276
    %s278 = sphi 0, %s276
    %s279 = sphi 0, %s278
    %s293 = sphi 0, %s279
    %s297 = sphi 0, %s297
    %s299 = sphi 0, %s297
    %s300 = sphi 0, %s299
    %s314 = sphi 0, %s300
    %s318 = sphi 0, %s318
    %s320 = sphi 0, %s318
    %s321 = sphi 0, %s320
    %s335 = sphi 0, %s321
    %s339 = sphi 0, %s339
    %s341 = sphi 0, %s339
    %s342 = sphi 0, %s341
    %s356 = sphi 0, %s342
    %s360 = sphi 0, %s360
    %s362 = sphi 0, %s360
    %s363 = sphi 0, %s362
    %s377 = sphi 0, %s363
    %s383 = sphi 0, %s385
    %s386 = sphi 0, %s383
    %s387 = sphi 0, %s386
    %s403 = sphi 0, %s387
  $region4: #{transformer_fwd.7} parent=0 // loop_header_branch
    %25 = sbr.rel (%p23) target = $region8
  $region5: #{transformer_fwd.7} parent=0 // loop_body
    %s27 = ssub.s32 %s22, 1
    %s28 = ssub.s32 %s22, 2
    %s29 = sadd.s32 %s22, 1
    %s30 = ssub.s32 %s22, %s29
    %p31 = scmp.eq.s32.totalorder %s30, 0
    %s33 = sadd.s32 %s32, 1
    %s34 = scalar_select %p31, %s32, %s33
    %p37 = pneg %p31
    %p38 = scmp.eq.s32.totalorder %s22, 1
    %p39 = por %p37, %p38
    %p40 = scmp.ne.s32.totalorder %s32, %s35
    %p41 = scmp.eq.s32.totalorder %s22, 0
    %p42 = por %p40, %p41
    %p43 = scmp.ne.s32.totalorder %s32, %s35
    %p44 = scmp.eq.s32.totalorder %s27, 1
    %p45 = por %p43, %p44
    %p46 = scmp.ne.s32.totalorder %s35, %s36
    %p47 = scmp.eq.s32.totalorder %s27, 0
    %p48 = por %p46, %p47
    %p49 = scmp.ne.s32.totalorder %s35, %s36
    %p50 = scmp.eq.s32.totalorder %s28, 1
    %p51 = por %p49, %p50
    %p53 = scmp.ne.s32.totalorder %s36, %s52
    %p54 = scmp.eq.s32.totalorder %s28, 0
    %p55 = por %p53, %p54
    %s56 = ssub.s32 %s22, %s29
    %p57 = scmp.eq.s32.totalorder %s56, 0
    %s59 = sadd.s32 %s58, 1
    %s60 = scalar_select %p57, %s58, %s59
    %p63 = pneg %p57
    %p64 = scmp.eq.s32.totalorder %s22, 1
    %p65 = por %p63, %p64
    %p66 = scmp.ne.s32.totalorder %s58, %s61
    %p67 = scmp.eq.s32.totalorder %s22, 0
    %p68 = por %p66, %p67
    %p69 = scmp.ne.s32.totalorder %s58, %s61
    %p70 = scmp.eq.s32.totalorder %s27, 1
    %p71 = por %p69, %p70
    %p72 = scmp.ne.s32.totalorder %s61, %s62
    %p73 = scmp.eq.s32.totalorder %s27, 0
    %p74 = por %p72, %p73
    %p75 = scmp.ne.s32.totalorder %s61, %s62
    %p76 = scmp.eq.s32.totalorder %s28, 1
    %p77 = por %p75, %p76
    %p79 = scmp.ne.s32.totalorder %s62, %s78
    %p80 = scmp.eq.s32.totalorder %s28, 0
    %p81 = por %p79, %p80
    %s82 = ssub.s32 %s22, %s29
    %p83 = scmp.eq.s32.totalorder %s82, 0
    %s85 = sadd.s32 %s84, 1
    %s86 = scalar_select %p83, %s84, %s85
    %p89 = pneg %p83
    %p90 = scmp.eq.s32.totalorder %s22, 1
    %p91 = por %p89, %p90
    %p92 = scmp.ne.s32.totalorder %s84, %s87
    %p93 = scmp.eq.s32.totalorder %s22, 0
    %p94 = por %p92, %p93
    %p95 = scmp.ne.s32.totalorder %s84, %s87
    %p96 = scmp.eq.s32.totalorder %s27, 1
    %p97 = por %p95, %p96
    %p98 = scmp.ne.s32.totalorder %s87, %s88
    %p99 = scmp.eq.s32.totalorder %s27, 0
    %p100 = por %p98, %p99
    %p101 = scmp.ne.s32.totalorder %s87, %s88
    %p102 = scmp.eq.s32.totalorder %s28, 1
    %p103 = por %p101, %p102
    %p105 = scmp.ne.s32.totalorder %s88, %s104
    %p106 = scmp.eq.s32.totalorder %s28, 0
    %p107 = por %p105, %p106
    %s109 = sadd.s32 %s108, 1
    %p112 = scmp.eq.s32.totalorder %s22, 1
    %p113 = scmp.ne.s32.totalorder %s108, %s110
    %p114 = scmp.eq.s32.totalorder %s22, 0
    %p115 = por %p113, %p114
    %p116 = scmp.ne.s32.totalorder %s108, %s110
    %p117 = scmp.eq.s32.totalorder %s27, 1
    %p118 = por %p116, %p117
    %p119 = scmp.ne.s32.totalorder %s110, %s111
    %p120 = scmp.eq.s32.totalorder %s27, 0
    %p121 = por %p119, %p120
    %p122 = scmp.ne.s32.totalorder %s110, %s111
    %p123 = scmp.eq.s32.totalorder %s28, 1
    %p124 = por %p122, %p123
    %p126 = scmp.ne.s32.totalorder %s111, %s125
    %p127 = scmp.eq.s32.totalorder %s28, 0
    %p128 = por %p126, %p127
    %s130 = sadd.s32 %s129, 1
    %p133 = scmp.eq.s32.totalorder %s22, 1
    %p134 = scmp.ne.s32.totalorder %s129, %s131
    %p135 = scmp.eq.s32.totalorder %s22, 0
    %p136 = por %p134, %p135
    %p137 = scmp.ne.s32.totalorder %s129, %s131
    %p138 = scmp.eq.s32.totalorder %s27, 1
    %p139 = por %p137, %p138
    %p140 = scmp.ne.s32.totalorder %s131, %s132
    %p141 = scmp.eq.s32.totalorder %s27, 0
    %p142 = por %p140, %p141
    %p143 = scmp.ne.s32.totalorder %s131, %s132
    %p144 = scmp.eq.s32.totalorder %s28, 1
    %p145 = por %p143, %p144
    %p147 = scmp.ne.s32.totalorder %s132, %s146
    %p148 = scmp.eq.s32.totalorder %s28, 0
    %p149 = por %p147, %p148
    %s151 = sadd.s32 %s150, 1
    %p154 = scmp.eq.s32.totalorder %s22, 1
    %p155 = scmp.ne.s32.totalorder %s150, %s152
    %p156 = scmp.eq.s32.totalorder %s22, 0
    %p157 = por %p155, %p156
    %p158 = scmp.ne.s32.totalorder %s150, %s152
    %p159 = scmp.eq.s32.totalorder %s27, 1
    %p160 = por %p158, %p159
    %p161 = scmp.ne.s32.totalorder %s152, %s153
    %p162 = scmp.eq.s32.totalorder %s27, 0
    %p163 = por %p161, %p162
    %p164 = scmp.ne.s32.totalorder %s152, %s153
    %p165 = scmp.eq.s32.totalorder %s28, 1
    %p166 = por %p164, %p165
    %p168 = scmp.ne.s32.totalorder %s153, %s167
    %p169 = scmp.eq.s32.totalorder %s28, 0
    %p170 = por %p168, %p169
    %s172 = sadd.s32 %s171, 1
    %p175 = scmp.eq.s32.totalorder %s22, 1
    %p176 = scmp.ne.s32.totalorder %s171, %s173
    %p177 = scmp.eq.s32.totalorder %s22, 0
    %p178 = por %p176, %p177
    %p179 = scmp.ne.s32.totalorder %s171, %s173
    %p180 = scmp.eq.s32.totalorder %s27, 1
    %p181 = por %p179, %p180
    %p182 = scmp.ne.s32.totalorder %s173, %s174
    %p183 = scmp.eq.s32.totalorder %s27, 0
    %p184 = por %p182, %p183
    %p185 = scmp.ne.s32.totalorder %s173, %s174
    %p186 = scmp.eq.s32.totalorder %s28, 1
    %p187 = por %p185, %p186
    %p189 = scmp.ne.s32.totalorder %s174, %s188
    %p190 = scmp.eq.s32.totalorder %s28, 0
    %p191 = por %p189, %p190
    %s193 = sadd.s32 %s192, 1
    %p196 = scmp.eq.s32.totalorder %s22, 1
    %p197 = scmp.ne.s32.totalorder %s192, %s194
    %p198 = scmp.eq.s32.totalorder %s22, 0
    %p199 = por %p197, %p198
    %p200 = scmp.ne.s32.totalorder %s192, %s194
    %p201 = scmp.eq.s32.totalorder %s27, 1
    %p202 = por %p200, %p201
    %p203 = scmp.ne.s32.totalorder %s194, %s195
    %p204 = scmp.eq.s32.totalorder %s27, 0
    %p205 = por %p203, %p204
    %p206 = scmp.ne.s32.totalorder %s194, %s195
    %p207 = scmp.eq.s32.totalorder %s28, 1
    %p208 = por %p206, %p207
    %p210 = scmp.ne.s32.totalorder %s195, %s209
    %p211 = scmp.eq.s32.totalorder %s28, 0
    %p212 = por %p210, %p211
    %s214 = sadd.s32 %s213, 1
    %p217 = scmp.eq.s32.totalorder %s22, 1
    %p218 = scmp.ne.s32.totalorder %s213, %s215
    %p219 = scmp.eq.s32.totalorder %s22, 0
    %p220 = por %p218, %p219
    %p221 = scmp.ne.s32.totalorder %s213, %s215
    %p222 = scmp.eq.s32.totalorder %s27, 1
    %p223 = por %p221, %p222
    %p224 = scmp.ne.s32.totalorder %s215, %s216
    %p225 = scmp.eq.s32.totalorder %s27, 0
    %p226 = por %p224, %p225
    %p227 = scmp.ne.s32.totalorder %s215, %s216
    %p228 = scmp.eq.s32.totalorder %s28, 1
    %p229 = por %p227, %p228
    %p231 = scmp.ne.s32.totalorder %s216, %s230
    %p232 = scmp.eq.s32.totalorder %s28, 0
    %p233 = por %p231, %p232
    %s235 = sadd.s32 %s234, 1
    %p238 = scmp.eq.s32.totalorder %s22, 1
    %p239 = scmp.ne.s32.totalorder %s234, %s236
    %p240 = scmp.eq.s32.totalorder %s22, 0
    %p241 = por %p239, %p240
    %p242 = scmp.ne.s32.totalorder %s234, %s236
    %p243 = scmp.eq.s32.totalorder %s27, 1
    %p244 = por %p242, %p243
    %p245 = scmp.ne.s32.totalorder %s236, %s237
    %p246 = scmp.eq.s32.totalorder %s27, 0
    %p247 = por %p245, %p246
    %p248 = scmp.ne.s32.totalorder %s236, %s237
    %p249 = scmp.eq.s32.totalorder %s28, 1
    %p250 = por %p248, %p249
    %p252 = scmp.ne.s32.totalorder %s237, %s251
    %p253 = scmp.eq.s32.totalorder %s28, 0
    %p254 = por %p252, %p253
    %s256 = sadd.s32 %s255, 1
    %p259 = scmp.eq.s32.totalorder %s22, 1
    %p260 = scmp.ne.s32.totalorder %s255, %s257
    %p261 = scmp.eq.s32.totalorder %s22, 0
    %p262 = por %p260, %p261
    %p263 = scmp.ne.s32.totalorder %s255, %s257
    %p264 = scmp.eq.s32.totalorder %s27, 1
    %p265 = por %p263, %p264
    %p266 = scmp.ne.s32.totalorder %s257, %s258
    %p267 = scmp.eq.s32.totalorder %s27, 0
    %p268 = por %p266, %p267
    %p269 = scmp.ne.s32.totalorder %s257, %s258
    %p270 = scmp.eq.s32.totalorder %s28, 1
    %p271 = por %p269, %p270
    %p273 = scmp.ne.s32.totalorder %s258, %s272
    %p274 = scmp.eq.s32.totalorder %s28, 0
    %p275 = por %p273, %p274
    %s277 = sadd.s32 %s276, 1
    %p280 = scmp.eq.s32.totalorder %s22, 1
    %p281 = scmp.ne.s32.totalorder %s276, %s278
    %p282 = scmp.eq.s32.totalorder %s22, 0
    %p283 = por %p281, %p282
    %p284 = scmp.ne.s32.totalorder %s276, %s278
    %p285 = scmp.eq.s32.totalorder %s27, 1
    %p286 = por %p284, %p285
    %p287 = scmp.ne.s32.totalorder %s278, %s279
    %p288 = scmp.eq.s32.totalorder %s27, 0
    %p289 = por %p287, %p288
    %p290 = scmp.ne.s32.totalorder %s278, %s279
    %p291 = scmp.eq.s32.totalorder %s28, 1
    %p292 = por %p290, %p291
    %p294 = scmp.ne.s32.totalorder %s279, %s293
    %p295 = scmp.eq.s32.totalorder %s28, 0
    %p296 = por %p294, %p295
    %s298 = sadd.s32 %s297, 1
    %p301 = scmp.eq.s32.totalorder %s22, 1
    %p302 = scmp.ne.s32.totalorder %s297, %s299
    %p303 = scmp.eq.s32.totalorder %s22, 0
    %p304 = por %p302, %p303
    %p305 = scmp.ne.s32.totalorder %s297, %s299
    %p306 = scmp.eq.s32.totalorder %s27, 1
    %p307 = por %p305, %p306
    %p308 = scmp.ne.s32.totalorder %s299, %s300
    %p309 = scmp.eq.s32.totalorder %s27, 0
    %p310 = por %p308, %p309
    %p311 = scmp.ne.s32.totalorder %s299, %s300
    %p312 = scmp.eq.s32.totalorder %s28, 1
    %p313 = por %p311, %p312
    %p315 = scmp.ne.s32.totalorder %s300, %s314
    %p316 = scmp.eq.s32.totalorder %s28, 0
    %p317 = por %p315, %p316
    %s319 = sadd.s32 %s318, 1
    %p322 = scmp.eq.s32.totalorder %s22, 1
    %p323 = scmp.ne.s32.totalorder %s318, %s320
    %p324 = scmp.eq.s32.totalorder %s22, 0
    %p325 = por %p323, %p324
    %p326 = scmp.ne.s32.totalorder %s318, %s320
    %p327 = scmp.eq.s32.totalorder %s27, 1
    %p328 = por %p326, %p327
    %p329 = scmp.ne.s32.totalorder %s320, %s321
    %p330 = scmp.eq.s32.totalorder %s27, 0
    %p331 = por %p329, %p330
    %p332 = scmp.ne.s32.totalorder %s320, %s321
    %p333 = scmp.eq.s32.totalorder %s28, 1
    %p334 = por %p332, %p333
    %p336 = scmp.ne.s32.totalorder %s321, %s335
    %p337 = scmp.eq.s32.totalorder %s28, 0
    %p338 = por %p336, %p337
    %s340 = sadd.s32 %s339, 1
    %p343 = scmp.eq.s32.totalorder %s22, 1
    %p344 = scmp.ne.s32.totalorder %s339, %s341
    %p345 = scmp.eq.s32.totalorder %s22, 0
    %p346 = por %p344, %p345
    %p347 = scmp.ne.s32.totalorder %s339, %s341
    %p348 = scmp.eq.s32.totalorder %s27, 1
    %p349 = por %p347, %p348
    %p350 = scmp.ne.s32.totalorder %s341, %s342
    %p351 = scmp.eq.s32.totalorder %s27, 0
    %p352 = por %p350, %p351
    %p353 = scmp.ne.s32.totalorder %s341, %s342
    %p354 = scmp.eq.s32.totalorder %s28, 1
    %p355 = por %p353, %p354
    %p357 = scmp.ne.s32.totalorder %s342, %s356
    %p358 = scmp.eq.s32.totalorder %s28, 0
    %p359 = por %p357, %p358
    %s361 = sadd.s32 %s360, 1
    %p364 = scmp.eq.s32.totalorder %s22, 1
    %p365 = scmp.ne.s32.totalorder %s360, %s362
    %p366 = scmp.eq.s32.totalorder %s22, 0
    %p367 = por %p365, %p366
    %p368 = scmp.ne.s32.totalorder %s360, %s362
    %p369 = scmp.eq.s32.totalorder %s27, 1
    %p370 = por %p368, %p369
    %p371 = scmp.ne.s32.totalorder %s362, %s363
    %p372 = scmp.eq.s32.totalorder %s27, 0
    %p373 = por %p371, %p372
    %p374 = scmp.ne.s32.totalorder %s362, %s363
    %p375 = scmp.eq.s32.totalorder %s28, 1
    %p376 = por %p374, %p375
    %p378 = scmp.ne.s32.totalorder %s363, %s377
    %p379 = scmp.eq.s32.totalorder %s28, 0
    %p380 = por %p378, %p379
    %s381 = ssub.s32 %s22, %s29
    %p382 = scmp.eq.s32.totalorder %s381, 0
    %s384 = sadd.s32 %s383, 1
    %s385 = scalar_select %p382, %s383, %s384
    %p388 = pneg %p382
    %p389 = scmp.eq.s32.totalorder %s22, 1
    %p390 = por %p388, %p389
    %p391 = scmp.ne.s32.totalorder %s383, %s386
    %p392 = scmp.eq.s32.totalorder %s22, 0
    %p393 = por %p391, %p392
    %p394 = scmp.ne.s32.totalorder %s383, %s386
    %p395 = scmp.eq.s32.totalorder %s27, 1
    %p396 = por %p394, %p395
    %p397 = scmp.ne.s32.totalorder %s386, %s387
    %p398 = scmp.eq.s32.totalorder %s27, 0
    %p399 = por %p397, %p398
    %p400 = scmp.ne.s32.totalorder %s386, %s387
    %p401 = scmp.eq.s32.totalorder %s28, 1
    %p402 = por %p400, %p401
    %p404 = scmp.ne.s32.totalorder %s387, %s403
    %p405 = scmp.eq.s32.totalorder %s28, 0
    %p406 = por %p404, %p405
    %p407 = scmp.le.s32.totalorder 1, %s22
    %p408 = scmp.lt.s32.totalorder %s22, 3
    %p409 = pnand %p407, %p408
    %p410 = pneg %p409
    // Predicated region
    $region9: #{transformer_fwd.7} parent=5 // pred_check
      _
    $region10: #{transformer_fwd.7} parent=5 // pred_check_branch
      %412 = sbr.rel (%p409) target = $region12
    $region11: #{transformer_fwd.7} parent=5 // pred_region
      %s413 = ssub.s32 %s22, 1
      // Predicated region
      $region13: #{transformer_fwd.7} parent=11 // pred_check
        %p414 = pneg %p121
      $region14: #{transformer_fwd.7} parent=11 // pred_check_branch
        %416 = sbr.rel (%p414) target = $region16
      $region15: #{transformer_fwd.7} parent=11 // pred_region
        _
      $region16: #{transformer_fwd.7} parent=11 // pred_fallthru
        _
      // Predicated region
      $region17: #{transformer_fwd.7} parent=11 // pred_check
        %p417 = pneg %p142
      $region18: #{transformer_fwd.7} parent=11 // pred_check_branch
        %419 = sbr.rel (%p417) target = $region20
      $region19: #{transformer_fwd.7} parent=11 // pred_region
        _
      $region20: #{transformer_fwd.7} parent=11 // pred_fallthru
        _
      // Predicated region
      $region21: #{transformer_fwd.7} parent=11 // pred_check
        %p420 = pneg %p163
      $region22: #{transformer_fwd.7} parent=11 // pred_check_branch
        %422 = sbr.rel (%p420) target = $region24
      $region23: #{transformer_fwd.7} parent=11 // pred_region
        _
      $region24: #{transformer_fwd.7} parent=11 // pred_fallthru
        _
      // Predicated region
      $region25: #{transformer_fwd.7} parent=11 // pred_check
        %p423 = pneg %p184
      $region26: #{transformer_fwd.7} parent=11 // pred_check_branch
        %425 = sbr.rel (%p423) target = $region28
      $region27: #{transformer_fwd.7} parent=11 // pred_region
        _
      $region28: #{transformer_fwd.7} parent=11 // pred_fallthru
        _
      // Predicated region
      $region29: #{transformer_fwd.7} parent=11 // pred_check
        %p426 = pneg %p205
      $region30: #{transformer_fwd.7} parent=11 // pred_check_branch
        %428 = sbr.rel (%p426) target = $region32
      $region31: #{transformer_fwd.7} parent=11 // pred_region
        _
      $region32: #{transformer_fwd.7} parent=11 // pred_fallthru
        _
      // Predicated region
      $region33: #{transformer_fwd.7} parent=11 // pred_check
        %p429 = pneg %p226
      $region34: #{transformer_fwd.7} parent=11 // pred_check_branch
        %431 = sbr.rel (%p429) target = $region36
      $region35: #{transformer_fwd.7} parent=11 // pred_region
        _
      $region36: #{transformer_fwd.7} parent=11 // pred_fallthru
        _
      // Predicated region
      $region37: #{transformer_fwd.7} parent=11 // pred_check
        %p432 = pneg %p247
      $region38: #{transformer_fwd.7} parent=11 // pred_check_branch
        %434 = sbr.rel (%p432) target = $region40
      $region39: #{transformer_fwd.7} parent=11 // pred_region
        _
      $region40: #{transformer_fwd.7} parent=11 // pred_fallthru
        _
      // Predicated region
      $region41: #{transformer_fwd.7} parent=11 // pred_check
        %p435 = pneg %p268
      $region42: #{transformer_fwd.7} parent=11 // pred_check_branch
        %437 = sbr.rel (%p435) target = $region44
      $region43: #{transformer_fwd.7} parent=11 // pred_region
        _
      $region44: #{transformer_fwd.7} parent=11 // pred_fallthru
        _
      // Predicated region
      $region45: #{transformer_fwd.7} parent=11 // pred_check
        %p438 = pneg %p289
      $region46: #{transformer_fwd.7} parent=11 // pred_check_branch
        %440 = sbr.rel (%p438) target = $region48
      $region47: #{transformer_fwd.7} parent=11 // pred_region
        _
      $region48: #{transformer_fwd.7} parent=11 // pred_fallthru
        _
      // Predicated region
      $region49: #{transformer_fwd.7} parent=11 // pred_check
        %p441 = pneg %p310
      $region50: #{transformer_fwd.7} parent=11 // pred_check_branch
        %443 = sbr.rel (%p441) target = $region52
      $region51: #{transformer_fwd.7} parent=11 // pred_region
        _
      $region52: #{transformer_fwd.7} parent=11 // pred_fallthru
        _
      // Predicated region
      $region53: #{transformer_fwd.7} parent=11 // pred_check
        %p444 = pneg %p331
      $region54: #{transformer_fwd.7} parent=11 // pred_check_branch
        %446 = sbr.rel (%p444) target = $region56
      $region55: #{transformer_fwd.7} parent=11 // pred_region
        _
      $region56: #{transformer_fwd.7} parent=11 // pred_fallthru
        _
      // Predicated region
      $region57: #{transformer_fwd.7} parent=11 // pred_check
        %p447 = pneg %p352
      $region58: #{transformer_fwd.7} parent=11 // pred_check_branch
        %449 = sbr.rel (%p447) target = $region60
      $region59: #{transformer_fwd.7} parent=11 // pred_region
        _
      $region60: #{transformer_fwd.7} parent=11 // pred_fallthru
        _
      // Predicated region
      $region61: #{transformer_fwd.7} parent=11 // pred_check
        %p450 = pneg %p373
      $region62: #{transformer_fwd.7} parent=11 // pred_check_branch
        %452 = sbr.rel (%p450) target = $region64
      $region63: #{transformer_fwd.7} parent=11 // pred_region
        _
      $region64: #{transformer_fwd.7} parent=11 // pred_fallthru
        _
    $region12: #{transformer_fwd.7} parent=5 // pred_fallthru
      _
    %p453 = scmp.lt.s32.totalorder %s22, 2
    // Predicated region
    $region65: #{transformer_fwd.7} parent=5 // pred_check
      %p454 = pneg %p453
    $region66: #{transformer_fwd.7} parent=5 // pred_check_branch
      %456 = sbr.rel (%p454) target = $region68
    $region67: #{transformer_fwd.7} parent=5 // pred_region
      // Predicated region
      $region69: #{transformer_fwd.7} parent=67 // pred_check
        %p457 = pneg %p42
      $region70: #{transformer_fwd.7} parent=67 // pred_check_branch
        %459 = sbr.rel (%p457) target = $region72
      $region71: #{transformer_fwd.7} parent=67 // pred_region
        %p460 = scmp.lt.s32.totalorder %s22, 1
        %s461 = scalar_select %p460, %s22, 1
        %s462 = scalar_lea.vmem %s0, %s461
      $region72: #{transformer_fwd.7} parent=67 // pred_fallthru
        _
      // Predicated region
      $region73: #{transformer_fwd.7} parent=67 // pred_check
        %p463 = pneg %p68
      $region74: #{transformer_fwd.7} parent=67 // pred_check_branch
        %465 = sbr.rel (%p463) target = $region76
      $region75: #{transformer_fwd.7} parent=67 // pred_region
        %p466 = scmp.lt.s32.totalorder %s22, 1
        %s467 = scalar_select %p466, %s22, 1
        %s468 = smul.addr %s467, 8
        %s469 = scalar_lea.vmem %s1, %s468
      $region76: #{transformer_fwd.7} parent=67 // pred_fallthru
        _
      // Predicated region
      $region77: #{transformer_fwd.7} parent=67 // pred_check
        %p470 = pneg %p94
      $region78: #{transformer_fwd.7} parent=67 // pred_check_branch
        %472 = sbr.rel (%p470) target = $region80
      $region79: #{transformer_fwd.7} parent=67 // pred_region
        %p473 = scmp.lt.s32.totalorder %s22, 1
        %s474 = scalar_select %p473, %s22, 1
        %s475 = smul.addr %s474, 8
        %s476 = scalar_lea.vmem %s2, %s475
      $region80: #{transformer_fwd.7} parent=67 // pred_fallthru
        _
    $region68: #{transformer_fwd.7} parent=5 // pred_fallthru
      _
    %p477 = scmp.le.s32.totalorder 1, %s22
    %p478 = scmp.lt.s32.totalorder %s22, 3
    %p479 = pnand %p477, %p478
    %p480 = pneg %p479
    // Predicated region
    $region81: #{transformer_fwd.7} parent=5 // pred_check
      _
    $region82: #{transformer_fwd.7} parent=5 // pred_check_branch
      %482 = sbr.rel (%p479) target = $region84
    $region83: #{transformer_fwd.7} parent=5 // pred_region
      %s483 = ssub.s32 %s22, 1
      %p484 = scmp.lt.s32.totalorder %s27, 1
      %s485 = scalar_select %p484, %s27, 1
      %s486 = scalar_lea.vmem %s0, %s485
      %p487 = pneg %p48
      %p488 = pneg %p45
      %p489 = scmp.lt.s32.totalorder %s27, 1
      %s490 = scalar_select %p489, %s27, 1
      %s491 = smul.addr %s490, 8
      %s492 = scalar_lea.vmem %s1, %s491
      %p493 = pneg %p74
      %p494 = pneg %p71
      %p495 = scmp.lt.s32.totalorder %s27, 1
      %s496 = scalar_select %p495, %s27, 1
      %s497 = smul.addr %s496, 8
      %s498 = scalar_lea.vmem %s2, %s497
      %p499 = pneg %p100
      %p500 = pneg %p97
      %p501 = pneg %p121
      %p502 = pneg %p118
      %p503 = pneg %p142
      %p504 = pneg %p139
      %p505 = pneg %p163
      %p506 = pneg %p160
      %p507 = pneg %p184
      %p508 = pneg %p181
      %p509 = pneg %p205
      %p510 = pneg %p202
      %p511 = pneg %p226
      %p512 = pneg %p223
      %p513 = pneg %p247
      %p514 = pneg %p244
      %p515 = pneg %p268
      %p516 = pneg %p265
      %p517 = pneg %p289
      %p518 = pneg %p286
      %p519 = pneg %p310
      %p520 = pneg %p307
      %p521 = pneg %p331
      %p522 = pneg %p328
      %p523 = pneg %p352
      %p524 = pneg %p349
      %p525 = pneg %p373
      %p526 = pneg %p370
      %p527 = pneg %p399
      %p528 = pneg %p396
      %p529 = scmp.lt.s32.totalorder %s27, 1
      %s530 = scalar_select %p529, %s27, 1
      %s531 = smul.addr %s530, 8
      %s532 = scalar_lea.vmem %s16, %s531
      %p533 = scmp.lt.s32.totalorder %s27, 1
      %s534 = scalar_select %p533, %s27, 1
      %s535 = scalar_lea.vmem %s0, %s534
      %p536 = scmp.lt.s32.totalorder %s27, 1
      %s537 = scalar_select %p536, %s27, 1
      %s538 = smul.addr %s537, 8
      %s539 = scalar_lea.vmem %s1, %s538
      %p540 = scmp.lt.s32.totalorder %s27, 1
      %s541 = scalar_select %p540, %s27, 1
      %s542 = smul.addr %s541, 8
      %s543 = scalar_lea.vmem %s2, %s542
      %p544 = scmp.lt.s32.totalorder %s27, 1
      %s545 = scalar_select %p544, %s27, 1
      %s546 = smul.addr %s545, 8
      %s547 = scalar_lea.vmem %s16, %s546
      %v549 = vld [vmem:[%s539] sm:$0xff]
      %v550 = vld [vmem:[%s543] sm:$0xff]
      %v551 = vld [vmem:[%s535] sm:$0x1]
      %vm552 = vcmp.ne.s32.totalorder %v551, 0
      %v553 = vsel %vm552, 1, 0
      %v554 = vperm.slane %v553, 0
      %vm555 = vcmp.eq.s32.totalorder %v554, 1
      %v556 = vld [vmem:[%s3] sm:$0xf]
      %v557 = vld [vmem:[%s3 + $0x4] sm:$0xf]
      %v558 = vld [vmem:[%s3 + $0x8] sm:$0xf]
      %v559 = vld [vmem:[%s3 + $0xc] sm:$0xf]
      %v560 = vld [vmem:[%s4] sm:$0xf]
      %v561 = vld [vmem:[%s4 + $0x4] sm:$0xf]
      %v562 = vld [vmem:[%s4 + $0x8] sm:$0xf]
      %v563 = vld [vmem:[%s4 + $0xc] sm:$0xf]
      %v564 = vld [vmem:[%s5] sm:$0xf]
      %v565 = vld [vmem:[%s5 + $0x4] sm:$0xf]
      %v566 = vld [vmem:[%s5 + $0x8] sm:$0xf]
      %v567 = vld [vmem:[%s5 + $0xc] sm:$0xf]
      %v568 = vld [vmem:[%s6] sm:$0xf]
      %v569 = vld [vmem:[%s6 + $0x4] sm:$0xf]
      %v570 = vld [vmem:[%s6 + $0x8] sm:$0xf]
      %v571 = vld [vmem:[%s6 + $0xc] sm:$0xf]
      %v572 = vld [vmem:[%s7] sm:$0x1]
      %v573 = vpack.c.bf16 %v549, %v549
      %v574 = vpack.c.bf16 %v550, %v550
      %v579 = vunpack.c.l.b16 %v556
      %v580 = vunpack.c.l.b16 %v557
      %v581 = vunpack.c.l.b16 %v558
      %v582 = vunpack.c.l.b16 %v559
      %v583 = vpack.c.b16 %v580, %v579
      %v584 = vpack.c.b16 %v582, %v581
      %vm587 = vcmask 261120
      %v589 = vsel %vm587, %v573, 0
      %591 = vmatpush.bf16.msra.mxu0 0
      %592 = vmatpush.bf16.msra.mxu0 0
      %593 = vmatpush.bf16.msra.mxu0 0
      %594 = vmatpush.bf16.msra.mxu0 0
      %595 = vmatpush.bf16.msra.mxu0 0
      %596 = vmatpush.bf16.msra.mxu0 0
      %597 = vmatpush.bf16.msra.mxu0 %v584
      %598 = vmatpush.bf16.msra.mxu0 %v583
      %599 = vmatmul.bf16.gmra.mxu0 %v589
      %v600 = vpop.f32.mrf.mxu0
      %v601 = vadd.f32 0.0, %v600
      %v602 = vpop.f32.mrf.mxu0
      %603 = vdwg.mxu0
      %v608 = vunpack.c.l.b16 %v560
      %v609 = vunpack.c.l.b16 %v561
      %v610 = vunpack.c.l.b16 %v562
      %v611 = vunpack.c.l.b16 %v563
      %v612 = vpack.c.b16 %v609, %v608
      %v613 = vpack.c.b16 %v611, %v610
      %v617 = vsel %vm587, %v574, 0
      %619 = vmatpush.bf16.msra.mxu0 0
      %620 = vmatpush.bf16.msra.mxu0 0
      %621 = vmatpush.bf16.msra.mxu0 0
      %622 = vmatpush.bf16.msra.mxu0 0
      %623 = vmatpush.bf16.msra.mxu0 0
      %624 = vmatpush.bf16.msra.mxu0 0
      %625 = vmatpush.bf16.msra.mxu0 %v613
      %626 = vmatpush.bf16.msra.mxu0 %v612
      %627 = vmatmul.bf16.gmra.mxu0 %v617
      %v628 = vpop.f32.mrf.mxu0
      %v629 = vadd.f32 0.0, %v628
      %v630 = vpop.f32.mrf.mxu0
      %631 = vdwg.mxu0
      %v636 = vunpack.c.l.b16 %v564
      %v637 = vunpack.c.l.b16 %v565
      %v638 = vunpack.c.l.b16 %v566
      %v639 = vunpack.c.l.b16 %v567
      %v640 = vpack.c.b16 %v637, %v636
      %v641 = vpack.c.b16 %v639, %v638
      %644 = vmatpush.bf16.msra.mxu0 0
      %645 = vmatpush.bf16.msra.mxu0 0
      %646 = vmatpush.bf16.msra.mxu0 0
      %647 = vmatpush.bf16.msra.mxu0 0
      %648 = vmatpush.bf16.msra.mxu0 0
      %649 = vmatpush.bf16.msra.mxu0 0
      %650 = vmatpush.bf16.msra.mxu0 %v641
      %651 = vmatpush.bf16.msra.mxu0 %v640
      %652 = vmatmul.bf16.gmra.mxu0 %v617
      %v653 = vpop.f32.mrf.mxu0
      %v654 = vadd.f32 0.0, %v653
      %v655 = vpop.f32.mrf.mxu0
      %656 = vdwg.mxu0
      %v658 = vperm.slane %v572, 0
      %v660 = vpack.c.bf16 %v601, %v601
      %v661 = vpack.c.bf16 %v629, %v629
      %v662 = vpack.c.bf16 %v654, %v654
      %vm663 = vcmask 64512
      %v665 = vsel %vm663, %v660, 0
      %v668 = vsel %vm663, %v661, 0
      %670 = vmatpush.bf16.xpose.msra.mxu0 0
      %671 = vmatpush.bf16.xpose.msra.mxu0 0
      %672 = vmatpush.bf16.xpose.msra.mxu0 0
      %673 = vmatpush.bf16.xpose.msra.mxu0 0
      %674 = vmatpush.bf16.xpose.msra.mxu0 0
      %675 = vmatpush.bf16.xpose.msra.mxu0 0
      %676 = vmatpush.bf16.xpose.msra.mxu0 0
      %677 = vmatpush.bf16.xpose.msra.mxu0 %v668
      %678 = vmatmul.bf16.gmra.mxu0 %v665
      %v679 = vpop.f32.mrf.mxu0
      %v680 = vadd.f32 0.0, %v679
      %v681 = vpop.f32.mrf.mxu0
      %682 = vdwg.mxu0
      %v683 = vsel %vm555, %v680, -1e+12
      %v684 = vmul.f32 %v683, 0.17677669
      %v685 = vsel %vm663, %v684, -inf
      %686 = vmax.xlane.f32.xlu0 %v685
      %v687 = vpop.xlane.xlu0 %686
      %v688 = vsub.f32 %v684, %v687
      %v689 = vmul.f32 %v688, 1.442695
      %v690 = vpow.pop %v689
      %v691 = vsel %vm663, %v690, 0.0
      %692 = vadd.xlane.f32.xlu0 %v691
      %v693 = vpop.xlane.xlu0 %692
      %v694 = vrcp.pop %v693
      %v695 = vmul.f32 %v693, %v694
      %v696 = vsub.f32 1.0, %v695
      %v697 = vmul.f32 %v694, %v696
      %v698 = vadd.f32 %v694, %v697
      %vm699 = vweird.f32 %v693
      %vm700 = vweird.f32 %v694
      %vm701 = vmor %vm699, %vm700
      %v702 = vsel %vm701, %v694, %v698
      %v703 = vand.u32 2147483647, %v693
      %vm704 = vcmp.eq.f32.partialorder %v703, 8.507059e+37
      %v705 = vand.u32 %v693, 2147483648
      %v706 = vor.u32 1.1754944e-38, %v705
      %v707 = vsel %vm704, %v706, %v702
      %v708 = vmul.f32 %v690, %v707
      %v709 = vpack.c.bf16 %v708, %v708
      %v711 = vsel %vm663, %v709, 0
      %vm713 = vcmask 1043456
      %v715 = vsel %vm713, %v662, 0
      %717 = vmatpush.bf16.msra.mxu0 0
      %718 = vmatpush.bf16.msra.mxu0 0
      %719 = vmatpush.bf16.msra.mxu0 0
      %720 = vmatpush.bf16.msra.mxu0 0
      %721 = vmatpush.bf16.msra.mxu0 0
      %722 = vmatpush.bf16.msra.mxu0 0
      %723 = vmatpush.bf16.msra.mxu0 0
      %724 = vmatpush.bf16.msra.mxu0 %v715
      %725 = vmatmul.bf16.gmra.mxu0 %v711
      %v726 = vpop.f32.mrf.mxu0
      %v727 = vadd.f32 0.0, %v726
      %v728 = vpop.f32.mrf.mxu0
      %729 = vdwg.mxu0
      %v730 = vpack.c.bf16 %v727, %v727
      %v732 = vsel %vm663, %v730, 0
      %v735 = vsel %vm713, %v568, 0
      %737 = vmatpush.bf16.msra.mxu0 0
      %738 = vmatpush.bf16.msra.mxu0 0
      %739 = vmatpush.bf16.msra.mxu0 0
      %740 = vmatpush.bf16.msra.mxu0 0
      %741 = vmatpush.bf16.msra.mxu0 0
      %742 = vmatpush.bf16.msra.mxu0 0
      %743 = vmatpush.bf16.msra.mxu0 0
      %744 = vmatpush.bf16.msra.mxu0 %v735
      %745 = vmatmul.bf16.gmra.mxu0 %v732
      %v746 = vpop.f32.mrf.mxu0
      %v747 = vadd.f32 0.0, %v746
      %v748 = vpop.f32.mrf.mxu0
      %749 = vdwg.mxu0
      %v750 = vadd.f32 %v658, %v747
      %752 = vrot.lane.b32.xlu0 %v660, 120
      %v753 = vpop.permute.xlu0 %752
      %755 = vrot.lane.b32.xlu0 %v661, 120
      %v756 = vpop.permute.xlu0 %755
      %v758 = vsel %vm663, %v753, 0
      %v761 = vsel %vm663, %v756, 0
      %763 = vmatpush.bf16.xpose.msra.mxu0 0
      %764 = vmatpush.bf16.xpose.msra.mxu0 0
      %765 = vmatpush.bf16.xpose.msra.mxu0 0
      %766 = vmatpush.bf16.xpose.msra.mxu0 0
      %767 = vmatpush.bf16.xpose.msra.mxu0 0
      %768 = vmatpush.bf16.xpose.msra.mxu0 0
      %769 = vmatpush.bf16.xpose.msra.mxu0 0
      %770 = vmatpush.bf16.xpose.msra.mxu0 %v761
      %771 = vmatmul.bf16.gmra.mxu0 %v758
      %v772 = vpop.f32.mrf.mxu0
      %v773 = vadd.f32 0.0, %v772
      %v774 = vpop.f32.mrf.mxu0
      %775 = vdwg.mxu0
      %v776 = vsel %vm555, %v773, -1e+12
      %v777 = vmul.f32 %v776, 0.17677669
      %v778 = vsel %vm663, %v777, -inf
      %779 = vmax.xlane.f32.xlu0 %v778
      %v780 = vpop.xlane.xlu0 %779
      %v781 = vsub.f32 %v777, %v780
      %v782 = vmul.f32 %v781, 1.442695
      %v783 = vpow.pop %v782
      %v784 = vsel %vm663, %v783, 0.0
      %785 = vadd.xlane.f32.xlu0 %v784
      %v786 = vpop.xlane.xlu0 %785
      %v787 = vrcp.pop %v786
      %v788 = vmul.f32 %v786, %v787
      %v789 = vsub.f32 1.0, %v788
      %v790 = vmul.f32 %v787, %v789
      %v791 = vadd.f32 %v787, %v790
      %vm792 = vweird.f32 %v786
      %vm793 = vweird.f32 %v787
      %vm794 = vmor %vm792, %vm793
      %v795 = vsel %vm794, %v787, %v791
      %v796 = vand.u32 2147483647, %v786
      %vm797 = vcmp.eq.f32.partialorder %v796, 8.507059e+37
      %v798 = vand.u32 %v786, 2147483648
      %v799 = vor.u32 1.1754944e-38, %v798
      %v800 = vsel %vm797, %v799, %v795
      %v801 = vmul.f32 %v783, %v800
      %v802 = vpack.c.bf16 %v801, %v801
      %804 = vrot.lane.b32.xlu0 %v662, 120
      %v805 = vpop.permute.xlu0 %804
      %v807 = vsel %vm663, %v802, 0
      %v810 = vsel %vm713, %v805, 0
      %812 = vmatpush.bf16.msra.mxu0 0
      %813 = vmatpush.bf16.msra.mxu0 0
      %814 = vmatpush.bf16.msra.mxu0 0
      %815 = vmatpush.bf16.msra.mxu0 0
      %816 = vmatpush.bf16.msra.mxu0 0
      %817 = vmatpush.bf16.msra.mxu0 0
      %818 = vmatpush.bf16.msra.mxu0 0
      %819 = vmatpush.bf16.msra.mxu0 %v810
      %820 = vmatmul.bf16.gmra.mxu0 %v807
      %v821 = vpop.f32.mrf.mxu0
      %v822 = vadd.f32 0.0, %v821
      %v823 = vpop.f32.mrf.mxu0
      %824 = vdwg.mxu0
      %v825 = vpack.c.bf16 %v822, %v822
      %v827 = vsel %vm663, %v825, 0
      %v830 = vsel %vm713, %v569, 0
      %832 = vmatpush.bf16.msra.mxu0 0
      %833 = vmatpush.bf16.msra.mxu0 0
      %834 = vmatpush.bf16.msra.mxu0 0
      %835 = vmatpush.bf16.msra.mxu0 0
      %836 = vmatpush.bf16.msra.mxu0 0
      %837 = vmatpush.bf16.msra.mxu0 0
      %838 = vmatpush.bf16.msra.mxu0 0
      %839 = vmatpush.bf16.msra.mxu0 %v830
      %840 = vmatmul.bf16.gmra.mxu0 %v827
      %v841 = vpop.f32.mrf.mxu0
      %v842 = vadd.f32 0.0, %v841
      %v843 = vpop.f32.mrf.mxu0
      %844 = vdwg.mxu0
      %v845 = vadd.f32 %v750, %v842
      %846 = vrot.lane.b32.xlu0 %v660, 112
      %v847 = vpop.permute.xlu0 %846
      %848 = vrot.lane.b32.xlu0 %v661, 112
      %v849 = vpop.permute.xlu0 %848
      %v851 = vsel %vm663, %v847, 0
      %v854 = vsel %vm663, %v849, 0
      %856 = vmatpush.bf16.xpose.msra.mxu0 0
      %857 = vmatpush.bf16.xpose.msra.mxu0 0
      %858 = vmatpush.bf16.xpose.msra.mxu0 0
      %859 = vmatpush.bf16.xpose.msra.mxu0 0
      %860 = vmatpush.bf16.xpose.msra.mxu0 0
      %861 = vmatpush.bf16.xpose.msra.mxu0 0
      %862 = vmatpush.bf16.xpose.msra.mxu0 0
      %863 = vmatpush.bf16.xpose.msra.mxu0 %v854
      %864 = vmatmul.bf16.gmra.mxu0 %v851
      %v865 = vpop.f32.mrf.mxu0
      %v866 = vadd.f32 0.0, %v865
      %v867 = vpop.f32.mrf.mxu0
      %868 = vdwg.mxu0
      %v869 = vsel %vm555, %v866, -1e+12
      %v870 = vmul.f32 %v869, 0.17677669
      %v871 = vsel %vm663, %v870, -inf
      %872 = vmax.xlane.f32.xlu0 %v871
      %v873 = vpop.xlane.xlu0 %872
      %v874 = vsub.f32 %v870, %v873
      %v875 = vmul.f32 %v874, 1.442695
      %v876 = vpow.pop %v875
      %v877 = vsel %vm663, %v876, 0.0
      %878 = vadd.xlane.f32.xlu0 %v877
      %v879 = vpop.xlane.xlu0 %878
      %v880 = vrcp.pop %v879
      %v881 = vmul.f32 %v879, %v880
      %v882 = vsub.f32 1.0, %v881
      %v883 = vmul.f32 %v880, %v882
      %v884 = vadd.f32 %v880, %v883
      %vm885 = vweird.f32 %v879
      %vm886 = vweird.f32 %v880
      %vm887 = vmor %vm885, %vm886
      %v888 = vsel %vm887, %v880, %v884
      %v889 = vand.u32 2147483647, %v879
      %vm890 = vcmp.eq.f32.partialorder %v889, 8.507059e+37
      %v891 = vand.u32 %v879, 2147483648
      %v892 = vor.u32 1.1754944e-38, %v891
      %v893 = vsel %vm890, %v892, %v888
      %v894 = vmul.f32 %v876, %v893
      %v895 = vpack.c.bf16 %v894, %v894
      %896 = vrot.lane.b32.xlu0 %v662, 112
      %v897 = vpop.permute.xlu0 %896
      %v899 = vsel %vm663, %v895, 0
      %v902 = vsel %vm713, %v897, 0
      %904 = vmatpush.bf16.msra.mxu0 0
      %905 = vmatpush.bf16.msra.mxu0 0
      %906 = vmatpush.bf16.msra.mxu0 0
      %907 = vmatpush.bf16.msra.mxu0 0
      %908 = vmatpush.bf16.msra.mxu0 0
      %909 = vmatpush.bf16.msra.mxu0 0
      %910 = vmatpush.bf16.msra.mxu0 0
      %911 = vmatpush.bf16.msra.mxu0 %v902
      %912 = vmatmul.bf16.gmra.mxu0 %v899
      %v913 = vpop.f32.mrf.mxu0
      %v914 = vadd.f32 0.0, %v913
      %v915 = vpop.f32.mrf.mxu0
      %916 = vdwg.mxu0
      %v917 = vpack.c.bf16 %v914, %v914
      %v919 = vsel %vm663, %v917, 0
      %v922 = vsel %vm713, %v570, 0
      %924 = vmatpush.bf16.msra.mxu0 0
      %925 = vmatpush.bf16.msra.mxu0 0
      %926 = vmatpush.bf16.msra.mxu0 0
      %927 = vmatpush.bf16.msra.mxu0 0
      %928 = vmatpush.bf16.msra.mxu0 0
      %929 = vmatpush.bf16.msra.mxu0 0
      %930 = vmatpush.bf16.msra.mxu0 0
      %931 = vmatpush.bf16.msra.mxu0 %v922
      %932 = vmatmul.bf16.gmra.mxu0 %v919
      %v933 = vpop.f32.mrf.mxu0
      %v934 = vadd.f32 0.0, %v933
      %v935 = vpop.f32.mrf.mxu0
      %936 = vdwg.mxu0
      %v937 = vadd.f32 %v845, %v934
      %938 = vrot.lane.b32.xlu0 %v660, 104
      %v939 = vpop.permute.xlu0 %938
      %940 = vrot.lane.b32.xlu0 %v661, 104
      %v941 = vpop.permute.xlu0 %940
      %v943 = vsel %vm663, %v939, 0
      %v946 = vsel %vm663, %v941, 0
      %948 = vmatpush.bf16.xpose.msra.mxu0 0
      %949 = vmatpush.bf16.xpose.msra.mxu0 0
      %950 = vmatpush.bf16.xpose.msra.mxu0 0
      %951 = vmatpush.bf16.xpose.msra.mxu0 0
      %952 = vmatpush.bf16.xpose.msra.mxu0 0
      %953 = vmatpush.bf16.xpose.msra.mxu0 0
      %954 = vmatpush.bf16.xpose.msra.mxu0 0
      %955 = vmatpush.bf16.xpose.msra.mxu0 %v946
      %956 = vmatmul.bf16.gmra.mxu0 %v943
      %v957 = vpop.f32.mrf.mxu0
      %v958 = vadd.f32 0.0, %v957
      %v959 = vpop.f32.mrf.mxu0
      %960 = vdwg.mxu0
      %v961 = vsel %vm555, %v958, -1e+12
      %v962 = vmul.f32 %v961, 0.17677669
      %v963 = vsel %vm663, %v962, -inf
      %964 = vmax.xlane.f32.xlu0 %v963
      %v965 = vpop.xlane.xlu0 %964
      %v966 = vsub.f32 %v962, %v965
      %v967 = vmul.f32 %v966, 1.442695
      %v968 = vpow.pop %v967
      %v969 = vsel %vm663, %v968, 0.0
      %970 = vadd.xlane.f32.xlu0 %v969
      %v971 = vpop.xlane.xlu0 %970
      %v972 = vrcp.pop %v971
      %v973 = vmul.f32 %v971, %v972
      %v974 = vsub.f32 1.0, %v973
      %v975 = vmul.f32 %v972, %v974
      %v976 = vadd.f32 %v972, %v975
      %vm977 = vweird.f32 %v971
      %vm978 = vweird.f32 %v972
      %vm979 = vmor %vm977, %vm978
      %v980 = vsel %vm979, %v972, %v976
      %v981 = vand.u32 2147483647, %v971
      %vm982 = vcmp.eq.f32.partialorder %v981, 8.507059e+37
      %v983 = vand.u32 %v971, 2147483648
      %v984 = vor.u32 1.1754944e-38, %v983
      %v985 = vsel %vm982, %v984, %v980
      %v986 = vmul.f32 %v968, %v985
      %v987 = vpack.c.bf16 %v986, %v986
      %988 = vrot.lane.b32.xlu0 %v662, 104
      %v989 = vpop.permute.xlu0 %988
      %v991 = vsel %vm663, %v987, 0
      %v994 = vsel %vm713, %v989, 0
      %996 = vmatpush.bf16.msra.mxu0 0
      %997 = vmatpush.bf16.msra.mxu0 0
      %998 = vmatpush.bf16.msra.mxu0 0
      %999 = vmatpush.bf16.msra.mxu0 0
      %1000 = vmatpush.bf16.msra.mxu0 0
      %1001 = vmatpush.bf16.msra.mxu0 0
      %1002 = vmatpush.bf16.msra.mxu0 0
      %1003 = vmatpush.bf16.msra.mxu0 %v994
      %1004 = vmatmul.bf16.gmra.mxu0 %v991
      %v1005 = vpop.f32.mrf.mxu0
      %v1006 = vadd.f32 0.0, %v1005
      %v1007 = vpop.f32.mrf.mxu0
      %1008 = vdwg.mxu0
      %v1009 = vpack.c.bf16 %v1006, %v1006
      %v1011 = vsel %vm663, %v1009, 0
      %v1014 = vsel %vm713, %v571, 0
      %1016 = vmatpush.bf16.msra.mxu0 0
      %1017 = vmatpush.bf16.msra.mxu0 0
      %1018 = vmatpush.bf16.msra.mxu0 0
      %1019 = vmatpush.bf16.msra.mxu0 0
      %1020 = vmatpush.bf16.msra.mxu0 0
      %1021 = vmatpush.bf16.msra.mxu0 0
      %1022 = vmatpush.bf16.msra.mxu0 0
      %1023 = vmatpush.bf16.msra.mxu0 %v1014
      %1024 = vmatmul.bf16.gmra.mxu0 %v1011
      %v1025 = vpop.f32.mrf.mxu0
      %v1026 = vadd.f32 0.0, %v1025
      %v1027 = vpop.f32.mrf.mxu0
      %1028 = vdwg.mxu0
      %v1029 = vadd.f32 %v937, %v1026
      %v1030 = vadd.f32 %v1029, %v549
      %v1031 = vld [vmem:[%s8] sm:$0x1]
      %v1032 = vld [vmem:[%s9] sm:$0x1]
      %v1033 = vsel %vm587, %v1030, 0.0
      %1034 = vadd.xlane.f32.xlu0 %v1033
      %v1035 = vpop.xlane.xlu0 %1034
      %v1036 = vrcp.pop 32.0
      %v1037 = vmul.f32 32.0, %v1036
      %v1038 = vsub.f32 1.0, %v1037
      %v1039 = vmul.f32 %v1036, %v1038
      %v1040 = vadd.f32 %v1036, %v1039
      %vm1041 = vweird.f32 %v1036
      %v1042 = vsel %vm1041, %v1036, %v1040
      %v1043 = vmul.f32 %v1035, %v1042
      %v1044 = vsub.f32 %v1030, %v1043
      %v1045 = vmul.f32 %v1044, %v1044
      %v1046 = vsel %vm587, %v1045, 0.0
      %1047 = vadd.xlane.f32.xlu0 %v1046
      %v1048 = vpop.xlane.xlu0 %1047
      %v1049 = vmul.f32 %v1048, %v1042
      %v1050 = vadd.f32 %v1049, 1e-05
      %v1051 = vrsqrt.pop %v1050
      %v1052 = vmul.f32 %v1051, %v1050
      %v1053 = vmul.f32 %v1052, %v1051
      %v1054 = vmul.f32 0.5, %v1053
      %v1055 = vsub.f32 1.5, %v1054
      %v1056 = vmul.f32 %v1051, %v1055
      %vm1057 = vweird.f32 %v1050
      %vm1058 = vweird.f32 %v1051
      %vm1059 = vmor %vm1057, %vm1058
      %v1060 = vsel %vm1059, %v1051, %v1056
      %v1061 = vmul.f32 %v1044, %v1060
      %v1063 = vperm.slane %v1031, 0
      %v1065 = vmul.f32 %v1061, %v1063
      %v1067 = vperm.slane %v1032, 0
      %v1069 = vadd.f32 %v1065, %v1067
      %v1070 = vld [vmem:[%s10] sm:$0xf]
      %v1071 = vld [vmem:[%s10 + $0x4] sm:$0xf]
      %v1072 = vld [vmem:[%s10 + $0x8] sm:$0xf]
      %v1073 = vld [vmem:[%s10 + $0xc] sm:$0xf]
      %v1074 = vld [vmem:[%s11] sm:$0x1]
      %v1075 = vld [vmem:[%s12] sm:$0xf]
      %v1076 = vld [vmem:[%s12 + $0x4] sm:$0xf]
      %v1077 = vld [vmem:[%s12 + $0x8] sm:$0xf]
      %v1078 = vld [vmem:[%s12 + $0xc] sm:$0xf]
      %v1079 = vld [vmem:[%s12 + $0x10] sm:$0xf]
      %v1080 = vld [vmem:[%s12 + $0x14] sm:$0xf]
      %v1081 = vld [vmem:[%s12 + $0x18] sm:$0xf]
      %v1082 = vld [vmem:[%s12 + $0x1c] sm:$0xf]
      %v1083 = vld [vmem:[%s12 + $0x20] sm:$0xf]
      %v1084 = vld [vmem:[%s12 + $0x24] sm:$0xf]
      %v1085 = vld [vmem:[%s12 + $0x28] sm:$0xf]
      %v1086 = vld [vmem:[%s12 + $0x2c] sm:$0xf]
      %v1087 = vld [vmem:[%s12 + $0x30] sm:$0xf]
      %v1088 = vld [vmem:[%s12 + $0x34] sm:$0xf]
      %v1089 = vld [vmem:[%s12 + $0x38] sm:$0xf]
      %v1090 = vld [vmem:[%s12 + $0x3c] sm:$0xf]
      %v1091 = vld [vmem:[%s13] sm:$0x1]
      %v1092 = vpack.c.bf16 %v1069, %v1069
      %v1094 = vperm.slane %v1074, 0
      %v1100 = vunpack.c.l.b16 %v1070
      %v1101 = vunpack.c.l.b16 %v1071
      %v1102 = vunpack.c.l.b16 %v1072
      %v1103 = vunpack.c.l.b16 %v1073
      %v1104 = vpack.c.b16 %v1101, %v1100
      %v1105 = vpack.c.b16 %v1103, %v1102
      %v1109 = vsel %vm587, %v1092, 0
      %1111 = vmatpush.bf16.msra.mxu0 0
      %1112 = vmatpush.bf16.msra.mxu0 0
      %1113 = vmatpush.bf16.msra.mxu0 0
      %1114 = vmatpush.bf16.msra.mxu0 0
      %1115 = vmatpush.bf16.msra.mxu0 0
      %1116 = vmatpush.bf16.msra.mxu0 0
      %1117 = vmatpush.bf16.msra.mxu0 %v1105
      %1118 = vmatpush.bf16.msra.mxu0 %v1104
      %1119 = vmatmul.bf16.gmra.mxu0 %v1109
      %v1120 = vpop.f32.mrf.mxu0
      %v1121 = vadd.f32 %v1094, %v1120
      %v1122 = vpop.f32.mrf.mxu0
      %1123 = vdwg.mxu0
      %v1124 = vmax.f32 %v1121, 0.0
      %v1125 = vpack.c.bf16 %v1124, %v1124
      %v1127 = vperm.slane %v1091, 0
      %v1145 = vunpack.c.l.b16 %v1075
      %v1146 = vunpack.c.l.b16 %v1076
      %v1147 = vunpack.c.l.b16 %v1077
      %v1148 = vunpack.c.l.b16 %v1078
      %v1149 = vunpack.c.l.b16 %v1079
      %v1150 = vunpack.c.l.b16 %v1080
      %v1151 = vunpack.c.l.b16 %v1081
      %v1152 = vunpack.c.l.b16 %v1082
      %v1153 = vunpack.c.l.b16 %v1083
      %v1154 = vunpack.c.l.b16 %v1084
      %v1155 = vunpack.c.l.b16 %v1085
      %v1156 = vunpack.c.l.b16 %v1086
      %v1157 = vunpack.c.l.b16 %v1087
      %v1158 = vunpack.c.l.b16 %v1088
      %v1159 = vunpack.c.l.b16 %v1089
      %v1160 = vunpack.c.l.b16 %v1090
      %v1161 = vpack.c.b16 %v1146, %v1145
      %v1162 = vpack.c.b16 %v1148, %v1147
      %v1163 = vpack.c.b16 %v1150, %v1149
      %v1164 = vpack.c.b16 %v1152, %v1151
      %v1165 = vpack.c.b16 %v1154, %v1153
      %v1166 = vpack.c.b16 %v1156, %v1155
      %v1167 = vpack.c.b16 %v1158, %v1157
      %v1168 = vpack.c.b16 %v1160, %v1159
      %1177 = vmatpush.bf16.msra.mxu0 %v1168
      %1178 = vmatpush.bf16.msra.mxu0 %v1167
      %1179 = vmatpush.bf16.msra.mxu0 %v1166
      %1180 = vmatpush.bf16.msra.mxu0 %v1165
      %1181 = vmatpush.bf16.msra.mxu0 %v1164
      %1182 = vmatpush.bf16.msra.mxu0 %v1163
      %1183 = vmatpush.bf16.msra.mxu0 %v1162
      %1184 = vmatpush.bf16.msra.mxu0 %v1161
      %1185 = vmatmul.bf16.gmra.mxu0 %v1125
      %v1186 = vpop.f32.mrf.mxu0
      %v1187 = vadd.f32 %v1127, %v1186
      %v1188 = vpop.f32.mrf.mxu0
      %1189 = vdwg.mxu0
      %v1190 = vadd.f32 %v1187, %v1069
      %v1191 = vld [vmem:[%s14] sm:$0x1]
      %v1192 = vld [vmem:[%s15] sm:$0x1]
      %v1193 = vsel %vm587, %v1190, 0.0
      %1194 = vadd.xlane.f32.xlu0 %v1193
      %v1195 = vpop.xlane.xlu0 %1194
      %v1196 = vmul.f32 %v1195, %v1042
      %v1197 = vsub.f32 %v1190, %v1196
      %v1198 = vmul.f32 %v1197, %v1197
      %v1199 = vsel %vm587, %v1198, 0.0
      %1200 = vadd.xlane.f32.xlu0 %v1199
      %v1201 = vpop.xlane.xlu0 %1200
      %v1202 = vmul.f32 %v1201, %v1042
      %v1203 = vadd.f32 %v1202, 1e-05
      %v1204 = vrsqrt.pop %v1203
      %v1205 = vmul.f32 %v1204, %v1203
      %v1206 = vmul.f32 %v1205, %v1204
      %v1207 = vmul.f32 0.5, %v1206
      %v1208 = vsub.f32 1.5, %v1207
      %v1209 = vmul.f32 %v1204, %v1208
      %vm1210 = vweird.f32 %v1203
      %vm1211 = vweird.f32 %v1204
      %vm1212 = vmor %vm1210, %vm1211
      %v1213 = vsel %vm1212, %v1204, %v1209
      %v1214 = vmul.f32 %v1197, %v1213
      %v1216 = vperm.slane %v1191, 0
      %v1218 = vmul.f32 %v1214, %v1216
      %v1220 = vperm.slane %v1192, 0
      %v1222 = vadd.f32 %v1218, %v1220
      %1223 = vst.msk [vmem:[%s547] sm:$0xff] %vm587, %v1222
      %p1224 = scmp.lt.s32.totalorder %s27, 1
      %s1225 = scalar_select %p1224, %s27, 1
      %s1226 = smul.addr %s1225, 8
      %s1227 = scalar_lea.vmem %s16, %s1226
      // Predicated region
      $region85: #{transformer_fwd.7} parent=83 // pred_check
        %p1228 = pneg %p396
      $region86: #{transformer_fwd.7} parent=83 // pred_check_branch
        %1230 = sbr.rel (%p1228) target = $region88
      $region87: #{transformer_fwd.7} parent=83 // pred_region
        _
      $region88: #{transformer_fwd.7} parent=83 // pred_fallthru
        _
    $region84: #{transformer_fwd.7} parent=5 // pred_fallthru
      _
    %p1231 = scmp.le.s32.totalorder 2, %s22
    // Predicated region
    $region89: #{transformer_fwd.7} parent=5 // pred_check
      %p1232 = pneg %p1231
    $region90: #{transformer_fwd.7} parent=5 // pred_check_branch
      %1234 = sbr.rel (%p1232) target = $region92
    $region91: #{transformer_fwd.7} parent=5 // pred_region
      %s1235 = ssub.s32 %s22, 2
      // Predicated region
      $region93: #{transformer_fwd.7} parent=91 // pred_check
        %p1236 = pneg %p402
      $region94: #{transformer_fwd.7} parent=91 // pred_check_branch
        %1238 = sbr.rel (%p1236) target = $region96
      $region95: #{transformer_fwd.7} parent=91 // pred_region
        %p1239 = scmp.lt.s32.totalorder %s28, 1
        %s1240 = scalar_select %p1239, %s28, 1
        %s1241 = smul.addr %s1240, 8
        %s1242 = scalar_lea.vmem %s16, %s1241
      $region96: #{transformer_fwd.7} parent=91 // pred_fallthru
        _
    $region92: #{transformer_fwd.7} parent=5 // pred_fallthru
      _
  $region6: #{transformer_fwd.7} parent=0 // loop_footer
    %s26 = sadd.s32 1, %s22
  $region7: #{transformer_fwd.7} parent=0 // loop_footer_branch
    %21 = sbr.rel target = $region3
  $region8: #{transformer_fwd.7} parent=0 // loop_exit
    _

</llo_original>
